<compile_context>
chip_gen: v6e
topology: v6e:2x2x1
jax: 0.10.0
libtpu: 0.0.40
codegen_flags: <defaults>
</compile_context>

<pallas_src>
import functools

import jax
import jax.numpy as jnp
from jax import lax
from jax.experimental import pallas as pl
from jax.experimental.pallas import tpu as pltpu

# ----------------------------- genotype (DARTS_V2, normal cell) --------------
GENOTYPE_NORMAL = [
    ('sep_conv_3x3', 0), ('sep_conv_3x3', 1),
    ('sep_conv_3x3', 0), ('sep_conv_3x3', 1),
    ('sep_conv_3x3', 1), ('skip_connect', 0),
    ('skip_connect', 0), ('dil_conv_3x3', 2),
]
NORMAL_CONCAT = [2, 3, 4, 5]


# ----------------------------- helpers ---------------------------------------
def bn_fold(gamma, beta, mean, var, eps=1e-5):
    """Fold eval-mode BatchNorm into a per-channel scale/shift."""
    scale = gamma / jnp.sqrt(var + eps)
    shift = beta - mean * scale
    return scale, shift


# ----------------------------- parameter packing -----------------------------
def pack_params(params, W):
    """Fold every op of the cell into lane-dense bf16 matrices + f32 shifts."""
    C = params['pre0']['w'].shape[1]
    WC = W * C

    def prep_mat(w, bn):
        # ReLUConvBN 1x1: y[h, w*C+co] = relu(x)[h, w*Cin+c] @ kron(I_W, w*scale)
        scale, shift = bn
        wf = w * scale[None, :]                                   # (Cin, C)
        m = jnp.kron(jnp.eye(W, dtype=jnp.float32), wf)           # (W*Cin, WC)
        b = jnp.tile(shift, (W,)).reshape(1, WC)
        return m, b

    def stage_mat(dw, pw, bn, d):
        # ReLU -> dw3x3(dil=d) -> pw1x1 -> BN folded per ky tap, then the three
        # tap matrices are stacked along K so ONE matmul does the whole stage:
        #   out[h] = concat_ky(x_relu[h + (ky-1)*d]) @ concat_ky(M_ky) + shift
        #   M_ky   = sum_kx kron(S_kx, dw[ky,kx,:,None] * pw * scale)
        # (S_kx is the WxW shift matrix for the kx*d pixel shift; w-boundary
        #  zero padding falls out of the missing matrix entries.)
        scale, shift = bn
        pwf = pw * scale[None, :]                                  # (C, C)
        mats = []
        for ky in range(3):
            m = jnp.zeros((WC, WC), jnp.float32)
            for kx in range(3):
                dx = kx - 1
                s_w = jnp.eye(W, W, k=-dx * d, dtype=jnp.float32)  # (W, W)
                m = m + jnp.kron(s_w, dw[ky, kx][:, None] * pwf)
            mats.append(m)
        b = jnp.tile(shift, (W,)).reshape(1, WC)
        return jnp.concatenate(mats, axis=0), b                    # (3*WC, WC)

    w0, b0 = prep_mat(params['pre0']['w'], params['pre0']['bn'])
    w1, b1 = prep_mat(params['pre1']['w'], params['pre1']['bn'])

    stage_ms, stage_bs, ops_cfg = [], [], []
    for (name, src), p in zip(GENOTYPE_NORMAL, params['ops']):
        if name == 'sep_conv_3x3':
            k = len(stage_ms)
            m_a, b_a = stage_mat(p['dw1'], p['pw1'], p['bn1'], 1)
            m_b, b_b = stage_mat(p['dw2'], p['pw2'], p['bn2'], 1)
            stage_ms += [m_a, m_b]
            stage_bs += [b_a, b_b]
            ops_cfg.append(('sep', src, (k, k + 1), 1))
        elif name == 'dil_conv_3x3':
            k = len(stage_ms)
            m_a, b_a = stage_mat(p['dw'], p['pw'], p['bn'], 2)
            stage_ms += [m_a]
            stage_bs += [b_a]
            ops_cfg.append(('dil', src, (k,), 2))
        elif name == 'skip_connect':
            ops_cfg.append(('skip', src, (), 0))
        else:
            raise ValueError(name)

    m_all = jnp.stack(stage_ms).astype(jnp.bfloat16)               # (S, 3*WC, WC)
    b_all = jnp.stack(stage_bs)                                    # (S, 1, WC)
    return (w0.astype(jnp.bfloat16), b0, w1.astype(jnp.bfloat16), b1,
            m_all, b_all, tuple(ops_cfg))


# ----------------------------- the fused cell kernel -------------------------
def _cell_kernel(s0_ref, s1_ref, w0_ref, b0_ref, w1_ref, b1_ref,
                 m_ref, b_ref, o_ref, st_ref, *, ops_cfg, concat_idx, h_img):
    _, Mb, WC = st_ref.shape
    H = h_img
    # Row index within each image of the folded (Nb*H) M axis; used to stop the
    # 3x3 vertical halo from bleeding across batch-element boundaries.
    row = lax.broadcasted_iota(jnp.int32, (Mb, WC), 0) % H

    def shift_rows(a, s):
        # cyclic shift toward higher row indices: result[m] = a[m - s]
        s = s % Mb
        return jnp.concatenate([a[Mb - s:, :], a[:Mb - s, :]], axis=0)

    def prep(x_ref, w_ref, bias_ref):
        # ReLU -> 1x1 conv -> BN(scale folded); bf16 MXU operands, f32 acc.
        x = jnp.maximum(x_ref[...], 0.0).astype(jnp.bfloat16)     # (Mb, W*Cin)
        y = jnp.dot(x, w_ref[...], preferred_element_type=jnp.float32)
        return y + bias_ref[...]                                   # (Mb, WC) f32

    def stage(x, si, d):
        # ReLU -> dw3x3(dil=d) -> pw1x1 -> BN as ONE (Mb,3WC)@(3WC,WC) matmul.
        xr = jnp.maximum(x, 0.0)
        # ky taps: tap0[m] = xr[m-d], tap2[m] = xr[m+d]; rows that would cross
        # an image boundary are zeroed (== the conv's zero padding).
        tap0 = jnp.where(row >= d, shift_rows(xr, d), 0.0)
        tap2 = jnp.where(row < H - d, shift_rows(xr, -d), 0.0)
        lhs = jnp.concatenate([tap0, xr, tap2], axis=-1).astype(jnp.bfloat16)
        y = jnp.dot(lhs, m_ref[si], preferred_element_type=jnp.float32)
        return y + b_ref[si]

    st_ref[0] = prep(s0_ref, w0_ref, b0_ref)
    st_ref[1] = prep(s1_ref, w1_ref, b1_ref)

    for i in range(len(ops_cfg) // 2):
        hs = []
        for j in (2 * i, 2 * i + 1):
            kind, src, sids, d = ops_cfg[j]
            x = st_ref[src]
            if kind == 'skip':
                h = x
            elif kind == 'sep':
                h = stage(stage(x, sids[0], d), sids[1], d)
            else:                                                  # 'dil'
                h = stage(x, sids[0], d)
            hs.append(h)
        st_ref[2 + i] = hs[0] + hs[1]          # node combine fused in-kernel

    # channel concat emitted as one lane-dense (Mb, n_cat*WC) store.
    o_ref[...] = jnp.concatenate([st_ref[si] for si in concat_idx], axis=-1)


# ----------------------------- Cell forward ----------------------------------
def cell_forward(params, s0_nchw, s1_nchw, drop_prob=0.0):
    # eval mode: drop_prob / F.dropout is a no-op (see TODO at top of file).
    del drop_prob
    N, Cpp, H, W = s0_nchw.shape
    _, Cp, _, _ = s1_nchw.shape
    C = params['pre0']['w'].shape[1]
    WC = W * C
    n_cat = len(NORMAL_CONCAT)
    n_states = 2 + len(GENOTYPE_NORMAL) // 2

    # NCHW -> NHWC -> lane-dense (N*H, W*C) slabs; batch folded into matmul M.
    s0 = jnp.transpose(s0_nchw, (0, 2, 3, 1)).astype(jnp.float32).reshape(N * H, W * Cpp)
    s1 = jnp.transpose(s1_nchw, (0, 2, 3, 1)).astype(jnp.float32).reshape(N * H, W * Cp)

    w0, b0, w1, b1, m_all, b_all, ops_cfg = pack_params(params, W)
    n_stage = m_all.shape[0]

    # Fold as many images per grid step as needed to reach M ~= 128 MXU rows;
    # if that would collapse the grid to a single step, split once more when the
    # batch allows it (v7x has 2 TensorCores; parallel grid axes shard across them).
    nb_target = max(1, 128 // H)
    Nb = next(c for c in range(min(N, nb_target), 0, -1) if N % c == 0)
    if N // Nb == 1 and Nb % 2 == 0 and (Nb // 2) * H >= 64:
        Nb //= 2
    Mb = Nb * H

    kernel = functools.partial(_cell_kernel, ops_cfg=ops_cfg,
                               concat_idx=tuple(NORMAL_CONCAT), h_img=H)

    flops = 2 * N * H * WC * (W * Cpp + W * Cp + 3 * WC * n_stage)
    bytes_accessed = (int(s0.size) * 4 + int(s1.size) * 4 +
                      int(w0.size) * 2 + int(w1.size) * 2 + int(m_all.size) * 2 +
                      (int(b0.size) + int(b1.size) + int(b_all.size)) * 4 +
                      N * H * n_cat * WC * 4)

    out = pl.pallas_call(
        kernel,
        out_shape=jax.ShapeDtypeStruct((N * H, n_cat * WC), jnp.float32),
        grid=(N // Nb,),
        in_specs=[
            pl.BlockSpec((Mb, W * Cpp), lambda n: (n, 0)),
            pl.BlockSpec((Mb, W * Cp), lambda n: (n, 0)),
            pl.BlockSpec((W * Cpp, WC), lambda n: (0, 0)),
            pl.BlockSpec((1, WC), lambda n: (0, 0)),
            pl.BlockSpec((W * Cp, WC), lambda n: (0, 0)),
            pl.BlockSpec((1, WC), lambda n: (0, 0)),
            pl.BlockSpec((n_stage, 3 * WC, WC), lambda n: (0, 0, 0)),
            pl.BlockSpec((n_stage, 1, WC), lambda n: (0, 0, 0)),
        ],
        out_specs=pl.BlockSpec((Mb, n_cat * WC), lambda n: (n, 0)),
        scratch_shapes=[pltpu.VMEM((n_states, Mb, WC), jnp.float32)],
        compiler_params=pltpu.CompilerParams(
            dimension_semantics=("parallel",)),
        cost_estimate=pl.CostEstimate(flops=int(flops), transcendentals=0,
                                      bytes_accessed=int(bytes_accessed)),
    )(s0, s1, w0, b0, w1, b1, m_all, b_all)

    # (N*H, 4*W*C) -> (N, 4*C, H, W)  == torch.cat(states[concat], dim=1)
    out = out.reshape(N, H, n_cat, W, C).transpose(0, 2, 4, 1, 3)
    return out.reshape(N, n_cat * C, H, W)


# ----------------------------- parameter init --------------------------------
def init_params(key, C_prev_prev, C_prev, C):
    keys = iter(jax.random.split(key, 128))

    def w(shape, scale=0.1):
        return jax.random.normal(next(keys), shape, jnp.float32) * scale

    def bn(c):
        gamma = 1.0 + w((c,))
        beta = w((c,))
        mean = w((c,))
        var = 1.0 + jnp.abs(w((c,)))
        return bn_fold(gamma, beta, mean, var)

    params = {
        'pre0': {'w': w((C_prev_prev, C)), 'bn': bn(C)},   # ReLUConvBN 1x1
        'pre1': {'w': w((C_prev, C)), 'bn': bn(C)},        # ReLUConvBN 1x1
        'ops': [],
    }
    for name, _ in GENOTYPE_NORMAL:
        if name == 'sep_conv_3x3':
            params['ops'].append({
                'dw1': w((3, 3, C)), 'pw1': w((C, C)), 'bn1': bn(C),
                'dw2': w((3, 3, C)), 'pw2': w((C, C)), 'bn2': bn(C),
            })
        elif name == 'dil_conv_3x3':
            params['ops'].append({
                'dw': w((3, 3, C)), 'pw': w((C, C)), 'bn': bn(C),
            })
        elif name == 'skip_connect':
            params['ops'].append({})
        else:
            raise ValueError(name)
    return params


# ----------------------------- pure-JAX reference (f32) ----------------------
def _ref_relu_conv_bn(x, w, scale, shift):
    y = jnp.einsum('nhwc,cd->nhwd', jnp.maximum(x, 0.0), w)
    return y * scale + shift


def _ref_stage(x, dw, pw, scale, shift, d):
    N, H, W, C = x.shape
    xr = jnp.maximum(x, 0.0)
    xp = jnp.pad(xr, ((0, 0), (d, d), (d, d), (0, 0)))
    acc = jnp.zeros_like(xr)
    for ky in range(3):
        for kx in range(3):
            acc = acc + xp[:, ky * d:ky * d + H, kx * d:kx * d + W, :] * dw[ky, kx]
    y = jnp.einsum('nhwc,cd->nhwd', acc, pw)
    return y * scale + shift


def cell_forward_ref(params, s0_nchw, s1_nchw):
    s0 = jnp.transpose(s0_nchw, (0, 2, 3, 1)).astype(jnp.float32)
    s1 = jnp.transpose(s1_nchw, (0, 2, 3, 1)).astype(jnp.float32)
    s0 = _ref_relu_conv_bn(s0, params['pre0']['w'], *params['pre0']['bn'])
    s1 = _ref_relu_conv_bn(s1, params['pre1']['w'], *params['pre1']['bn'])
    states = [s0, s1]
    for i in range(len(GENOTYPE_NORMAL) // 2):
        hs = []
        for j in (2 * i, 2 * i + 1):
            name, idx = GENOTYPE_NORMAL[j]
            p = params['ops'][j]
            x = states[idx]
            if name == 'skip_connect':
                h = x
            elif name == 'sep_conv_3x3':
                h = _ref_stage(x, p['dw1'], p['pw1'], *p['bn1'], 1)
                h = _ref_stage(h, p['dw2'], p['pw2'], *p['bn2'], 1)
            else:
                h = _ref_stage(x, p['dw'], p['pw'], *p['bn'], 2)
            hs.append(h)
        states.append(hs[0] + hs[1])
    out = jnp.concatenate([states[i] for i in NORMAL_CONCAT], axis=-1)
    return jnp.transpose(out, (0, 3, 1, 2))


# ----------------------------- main -------------------------------------------
if __name__ == "__main__":
    key = jax.random.PRNGKey(0)
    kp, k0, k1 = jax.random.split(key, 3)

    N, C_prev_prev, C_prev, C, H, W = 2, 8, 8, 8, 16, 16
    params = init_params(kp, C_prev_prev, C_prev, C)
    s0 = jax.random.normal(k0, (N, C_prev_prev, H, W), jnp.float32)
    s1 = jax.random.normal(k1, (N, C_prev, H, W), jnp.float32)

    out = jax.jit(cell_forward)(params, s0, s1, 0.0)
    jax.block_until_ready(out)
    assert out.shape == (N, C * len(NORMAL_CONCAT), H, W), out.shape

    # checks vs. the f32 reference (kernel uses bf16 MXU operands):
    # max-error check plus a mean-error check so localized boundary bugs
    # (batch-fold masks / W-edge shift columns) cannot hide under the max scale.
    ref = cell_forward_ref(params, s0, s1)
    abs_err = jnp.abs(out - ref)
    max_err = float(jnp.max(abs_err))
    mean_err = float(jnp.mean(abs_err))
    ref_scale = float(jnp.max(jnp.abs(ref)))
    ref_mean = float(jnp.mean(jnp.abs(ref)))
    assert max_err <= 5e-2 * max(ref_scale, 1.0), (max_err, ref_scale)
    assert mean_err <= 5e-2 * max(ref_mean, 1e-3), (mean_err, ref_mean)

    print("KERNEL_OK")
</pallas_src>

<mosaic_0001>
module attributes {stable_mosaic.version = 11 : i64} {
  func.func @_cell_kernel(%arg0: i32, %arg1: memref<32x128xf32, #tpu.memory_space<vmem>>, %arg2: memref<32x128xf32, #tpu.memory_space<vmem>>, %arg3: memref<128x128xbf16, #tpu.memory_space<vmem>>, %arg4: memref<1x128xf32, #tpu.memory_space<vmem>>, %arg5: memref<128x128xbf16, #tpu.memory_space<vmem>>, %arg6: memref<1x128xf32, #tpu.memory_space<vmem>>, %arg7: memref<11x384x128xbf16, #tpu.memory_space<vmem>>, %arg8: memref<11x1x128xf32, #tpu.memory_space<vmem>>, %arg9: memref<32x512xf32, #tpu.memory_space<vmem>>, %arg10: memref<6x32x128xf32, #tpu.memory_space<vmem>>) attributes {dimension_semantics = [#tpu.dimension_semantics<parallel>], iteration_bounds = array<i64: 1>, scalar_prefetch = 0 : i64, scratch_operands = 1 : i64, tpu.core_type = #tpu.core_type<tc>, window_params = [{transform_indices = @transform_0, window_bounds = array<i64: 32, 128>}, {transform_indices = @transform_1, window_bounds = array<i64: 32, 128>}, {pipeline_mode = #tpu.pipeline_mode<synchronous>, transform_indices = @transform_2, window_bounds = array<i64: 128, 128>}, {pipeline_mode = #tpu.pipeline_mode<synchronous>, transform_indices = @transform_3, window_bounds = array<i64: 1, 128>}, {pipeline_mode = #tpu.pipeline_mode<synchronous>, transform_indices = @transform_4, window_bounds = array<i64: 128, 128>}, {pipeline_mode = #tpu.pipeline_mode<synchronous>, transform_indices = @transform_5, window_bounds = array<i64: 1, 128>}, {pipeline_mode = #tpu.pipeline_mode<synchronous>, transform_indices = @transform_6, window_bounds = array<i64: 11, 384, 128>}, {pipeline_mode = #tpu.pipeline_mode<synchronous>, transform_indices = @transform_7, window_bounds = array<i64: 11, 1, 128>}, {transform_indices = @transform_8, window_bounds = array<i64: 32, 512>}]} {
    %0 = tpu.iota {dimensions = array<i32: 0>} : vector<32x128xi32>
    %c16_i32 = arith.constant 16 : i32
    %c0_i32 = arith.constant 0 : i32
    %1 = arith.cmpi eq, %c16_i32, %c0_i32 : i32
    %c1_i32 = arith.constant 1 : i32
    %2 = arith.select %1, %c1_i32, %c16_i32 : i32
    %3 = vector.broadcast %2 : i32 to vector<32x128xi32>
    %4 = arith.remsi %0, %3 : vector<32x128xi32>
    %c0_i32_0 = arith.constant 0 : i32
    %5 = vector.broadcast %c0_i32_0 : i32 to vector<32x128xi32>
    %6 = arith.cmpi ne, %4, %5 : vector<32x128xi32>
    %c0_i32_1 = arith.constant 0 : i32
    %7 = vector.broadcast %c0_i32_1 : i32 to vector<32x128xi32>
    %8 = arith.cmpi slt, %4, %7 : vector<32x128xi32>
    %c0_i32_2 = arith.constant 0 : i32
    %9 = arith.cmpi slt, %2, %c0_i32_2 : i32
    %10 = vector.broadcast %9 : i1 to vector<32x128xi1>
    %11 = vector.broadcast %10 : vector<32x128xi1> to vector<32x128xi1>
    %12 = arith.xori %8, %11 : vector<32x128xi1>
    %13 = arith.andi %12, %6 : vector<32x128xi1>
    %14 = vector.broadcast %2 : i32 to vector<32x128xi32>
    %15 = arith.addi %4, %14 : vector<32x128xi32>
    %16 = arith.select %13, %15, %4 : vector<32x128xi1>, vector<32x128xi32>
    %c0 = arith.constant 0 : index
    %c0_3 = arith.constant 0 : index
    %17 = vector.load %arg1[%c0, %c0_3] : memref<32x128xf32, #tpu.memory_space<vmem>>, vector<32x128xf32>
    %cst = arith.constant 0.000000e+00 : f32
    %18 = vector.broadcast %cst : f32 to vector<32x128xf32>
    %19 = arith.maximumf %17, %18 : vector<32x128xf32>
    %20 = arith.truncf %19 : vector<32x128xf32> to vector<32x128xbf16>
    %c0_4 = arith.constant 0 : index
    %c0_5 = arith.constant 0 : index
    %21 = vector.load %arg3[%c0_4, %c0_5] : memref<128x128xbf16, #tpu.memory_space<vmem>>, vector<128x128xbf16>
    %cst_6 = arith.constant dense<0.000000e+00> : vector<32x128xf32>
    %22 = tpu.matmul %20, %21, %cst_6 {dimension_numbers = #tpu.dot_dimension_numbers<[1], [0], [0], [1], [0, 0, 1, 1], [], []>} : vector<32x128xbf16>, vector<128x128xbf16>, vector<32x128xf32> -> vector<32x128xf32>
    %c0_7 = arith.constant 0 : index
    %c0_8 = arith.constant 0 : index
    %23 = vector.load %arg4[%c0_7, %c0_8] : memref<1x128xf32, #tpu.memory_space<vmem>>, vector<1x128xf32>
    %24 = vector.broadcast %23 : vector<1x128xf32> to vector<32x128xf32>
    %25 = arith.addf %22, %24 : vector<32x128xf32>
    %c0_9 = arith.constant 0 : index
    %c0_10 = arith.constant 0 : index
    %c0_11 = arith.constant 0 : index
    %26 = vector.load %arg10[%c0_9, %c0_10, %c0_11] : memref<6x32x128xf32, #tpu.memory_space<vmem>>, vector<1x32x128xf32>
    %27 = vector.shape_cast %26 : vector<1x32x128xf32> to vector<32x128xf32>
    %28 = vector.shape_cast %25 : vector<32x128xf32> to vector<1x32x128xf32>
    tpu.vector_store %arg10[%c0_9, %c0_10, %c0_11], %28 {strides = array<i32>} : memref<6x32x128xf32, #tpu.memory_space<vmem>>, vector<1x32x128xf32>,
    %c0_12 = arith.constant 0 : index
    %c0_13 = arith.constant 0 : index
    %29 = vector.load %arg2[%c0_12, %c0_13] : memref<32x128xf32, #tpu.memory_space<vmem>>, vector<32x128xf32>
    %cst_14 = arith.constant 0.000000e+00 : f32
    %30 = vector.broadcast %cst_14 : f32 to vector<32x128xf32>
    %31 = arith.maximumf %29, %30 : vector<32x128xf32>
    %32 = arith.truncf %31 : vector<32x128xf32> to vector<32x128xbf16>
    %c0_15 = arith.constant 0 : index
    %c0_16 = arith.constant 0 : index
    %33 = vector.load %arg5[%c0_15, %c0_16] : memref<128x128xbf16, #tpu.memory_space<vmem>>, vector<128x128xbf16>
    %cst_17 = arith.constant dense<0.000000e+00> : vector<32x128xf32>
    %34 = tpu.matmul %32, %33, %cst_17 {dimension_numbers = #tpu.dot_dimension_numbers<[1], [0], [0], [1], [0, 0, 1, 1], [], []>} : vector<32x128xbf16>, vector<128x128xbf16>, vector<32x128xf32> -> vector<32x128xf32>
    %c0_18 = arith.constant 0 : index
    %c0_19 = arith.constant 0 : index
    %35 = vector.load %arg6[%c0_18, %c0_19] : memref<1x128xf32, #tpu.memory_space<vmem>>, vector<1x128xf32>
    %36 = vector.broadcast %35 : vector<1x128xf32> to vector<32x128xf32>
    %37 = arith.addf %34, %36 : vector<32x128xf32>
    %c1 = arith.constant 1 : index
    %c0_20 = arith.constant 0 : index
    %c0_21 = arith.constant 0 : index
    %38 = vector.load %arg10[%c1, %c0_20, %c0_21] : memref<6x32x128xf32, #tpu.memory_space<vmem>>, vector<1x32x128xf32>
    %39 = vector.shape_cast %38 : vector<1x32x128xf32> to vector<32x128xf32>
    %40 = vector.shape_cast %37 : vector<32x128xf32> to vector<1x32x128xf32>
    tpu.vector_store %arg10[%c1, %c0_20, %c0_21], %40 {strides = array<i32>} : memref<6x32x128xf32, #tpu.memory_space<vmem>>, vector<1x32x128xf32>,
    %c0_22 = arith.constant 0 : index
    %c0_23 = arith.constant 0 : index
    %c0_24 = arith.constant 0 : index
    %41 = vector.load %arg10[%c0_22, %c0_23, %c0_24] : memref<6x32x128xf32, #tpu.memory_space<vmem>>, vector<1x32x128xf32>
    %42 = vector.shape_cast %41 : vector<1x32x128xf32> to vector<32x128xf32>
    %cst_25 = arith.constant 0.000000e+00 : f32
    %43 = vector.broadcast %cst_25 : f32 to vector<32x128xf32>
    %44 = arith.maximumf %42, %43 : vector<32x128xf32>
    %c1_i32_26 = arith.constant 1 : i32
    %45 = vector.broadcast %c1_i32_26 : i32 to vector<32x128xi32>
    %46 = arith.cmpi sge, %16, %45 : vector<32x128xi32>
    %47 = vector.extract_strided_slice %44 {offsets = [31, 0], sizes = [1, 128], strides = [1, 1]} : vector<32x128xf32> to vector<1x128xf32>
    %48 = vector.extract_strided_slice %44 {offsets = [0, 0], sizes = [31, 128], strides = [1, 1]} : vector<32x128xf32> to vector<31x128xf32>
    %49 = tpu.concatenate %47, %48 in 0 : vector<1x128xf32>, vector<31x128xf32> -> vector<32x128xf32>
    %cst_27 = arith.constant 0.000000e+00 : f32
    %50 = vector.broadcast %cst_27 : f32 to vector<32x128xf32>
    %51 = arith.select %46, %49, %50 : vector<32x128xi1>, vector<32x128xf32>
    %c15_i32 = arith.constant 15 : i32
    %52 = vector.broadcast %c15_i32 : i32 to vector<32x128xi32>
    %53 = arith.cmpi slt, %16, %52 : vector<32x128xi32>
    %54 = vector.extract_strided_slice %44 {offsets = [1, 0], sizes = [31, 128], strides = [1, 1]} : vector<32x128xf32> to vector<31x128xf32>
    %55 = vector.extract_strided_slice %44 {offsets = [0, 0], sizes = [1, 128], strides = [1, 1]} : vector<32x128xf32> to vector<1x128xf32>
    %56 = tpu.concatenate %54, %55 in 0 : vector<31x128xf32>, vector<1x128xf32> -> vector<32x128xf32>
    %cst_28 = arith.constant 0.000000e+00 : f32
    %57 = vector.broadcast %cst_28 : f32 to vector<32x128xf32>
    %58 = arith.select %53, %56, %57 : vector<32x128xi1>, vector<32x128xf32>
    %59 = tpu.concatenate %51, %44, %58 in 1 : vector<32x128xf32>, vector<32x128xf32>, vector<32x128xf32> -> vector<32x384xf32>
    %60 = arith.truncf %59 : vector<32x384xf32> to vector<32x384xbf16>
    %c0_29 = arith.constant 0 : index
    %c0_30 = arith.constant 0 : index
    %c0_31 = arith.constant 0 : index
    %61 = vector.load %arg7[%c0_29, %c0_30, %c0_31] : memref<11x384x128xbf16, #tpu.memory_space<vmem>>, vector<1x384x128xbf16>
    %62 = vector.shape_cast %61 : vector<1x384x128xbf16> to vector<384x128xbf16>
    %cst_32 = arith.constant dense<0.000000e+00> : vector<32x128xf32>
    %63 = tpu.matmul %60, %62, %cst_32 {dimension_numbers = #tpu.dot_dimension_numbers<[1], [0], [0], [1], [0, 0, 1, 1], [], []>} : vector<32x384xbf16>, vector<384x128xbf16>, vector<32x128xf32> -> vector<32x128xf32>
    %c0_33 = arith.constant 0 : index
    %c0_34 = arith.constant 0 : index
    %c0_35 = arith.constant 0 : index
    %64 = vector.load %arg8[%c0_33, %c0_34, %c0_35] : memref<11x1x128xf32, #tpu.memory_space<vmem>>, vector<1x1x128xf32>
    %65 = vector.shape_cast %64 : vector<1x1x128xf32> to vector<1x128xf32>
    %66 = vector.broadcast %65 : vector<1x128xf32> to vector<32x128xf32>
    %67 = arith.addf %63, %66 : vector<32x128xf32>
    %cst_36 = arith.constant 0.000000e+00 : f32
    %68 = vector.broadcast %cst_36 : f32 to vector<32x128xf32>
    %69 = arith.maximumf %67, %68 : vector<32x128xf32>
    %c1_i32_37 = arith.constant 1 : i32
    %70 = vector.broadcast %c1_i32_37 : i32 to vector<32x128xi32>
    %71 = arith.cmpi sge, %16, %70 : vector<32x128xi32>
    %72 = vector.extract_strided_slice %69 {offsets = [31, 0], sizes = [1, 128], strides = [1, 1]} : vector<32x128xf32> to vector<1x128xf32>
    %73 = vector.extract_strided_slice %69 {offsets = [0, 0], sizes = [31, 128], strides = [1, 1]} : vector<32x128xf32> to vector<31x128xf32>
    %74 = tpu.concatenate %72, %73 in 0 : vector<1x128xf32>, vector<31x128xf32> -> vector<32x128xf32>
    %cst_38 = arith.constant 0.000000e+00 : f32
    %75 = vector.broadcast %cst_38 : f32 to vector<32x128xf32>
    %76 = arith.select %71, %74, %75 : vector<32x128xi1>, vector<32x128xf32>
    %c15_i32_39 = arith.constant 15 : i32
    %77 = vector.broadcast %c15_i32_39 : i32 to vector<32x128xi32>
    %78 = arith.cmpi slt, %16, %77 : vector<32x128xi32>
    %79 = vector.extract_strided_slice %69 {offsets = [1, 0], sizes = [31, 128], strides = [1, 1]} : vector<32x128xf32> to vector<31x128xf32>
    %80 = vector.extract_strided_slice %69 {offsets = [0, 0], sizes = [1, 128], strides = [1, 1]} : vector<32x128xf32> to vector<1x128xf32>
    %81 = tpu.concatenate %79, %80 in 0 : vector<31x128xf32>, vector<1x128xf32> -> vector<32x128xf32>
    %cst_40 = arith.constant 0.000000e+00 : f32
    %82 = vector.broadcast %cst_40 : f32 to vector<32x128xf32>
    %83 = arith.select %78, %81, %82 : vector<32x128xi1>, vector<32x128xf32>
    %84 = tpu.concatenate %76, %69, %83 in 1 : vector<32x128xf32>, vector<32x128xf32>, vector<32x128xf32> -> vector<32x384xf32>
    %85 = arith.truncf %84 : vector<32x384xf32> to vector<32x384xbf16>
    %c1_41 = arith.constant 1 : index
    %c0_42 = arith.constant 0 : index
    %c0_43 = arith.constant 0 : index
    %86 = vector.load %arg7[%c1_41, %c0_42, %c0_43] : memref<11x384x128xbf16, #tpu.memory_space<vmem>>, vector<1x384x128xbf16>
    %87 = vector.shape_cast %86 : vector<1x384x128xbf16> to vector<384x128xbf16>
    %cst_44 = arith.constant dense<0.000000e+00> : vector<32x128xf32>
    %88 = tpu.matmul %85, %87, %cst_44 {dimension_numbers = #tpu.dot_dimension_numbers<[1], [0], [0], [1], [0, 0, 1, 1], [], []>} : vector<32x384xbf16>, vector<384x128xbf16>, vector<32x128xf32> -> vector<32x128xf32>
    %c1_45 = arith.constant 1 : index
    %c0_46 = arith.constant 0 : index
    %c0_47 = arith.constant 0 : index
    %89 = vector.load %arg8[%c1_45, %c0_46, %c0_47] : memref<11x1x128xf32, #tpu.memory_space<vmem>>, vector<1x1x128xf32>
    %90 = vector.shape_cast %89 : vector<1x1x128xf32> to vector<1x128xf32>
    %91 = vector.broadcast %90 : vector<1x128xf32> to vector<32x128xf32>
    %92 = arith.addf %88, %91 : vector<32x128xf32>
    %c1_48 = arith.constant 1 : index
    %c0_49 = arith.constant 0 : index
    %c0_50 = arith.constant 0 : index
    %93 = vector.load %arg10[%c1_48, %c0_49, %c0_50] : memref<6x32x128xf32, #tpu.memory_space<vmem>>, vector<1x32x128xf32>
    %94 = vector.shape_cast %93 : vector<1x32x128xf32> to vector<32x128xf32>
    %cst_51 = arith.constant 0.000000e+00 : f32
    %95 = vector.broadcast %cst_51 : f32 to vector<32x128xf32>
    %96 = arith.maximumf %94, %95 : vector<32x128xf32>
    %c1_i32_52 = arith.constant 1 : i32
    %97 = vector.broadcast %c1_i32_52 : i32 to vector<32x128xi32>
    %98 = arith.cmpi sge, %16, %97 : vector<32x128xi32>
    %99 = vector.extract_strided_slice %96 {offsets = [31, 0], sizes = [1, 128], strides = [1, 1]} : vector<32x128xf32> to vector<1x128xf32>
    %100 = vector.extract_strided_slice %96 {offsets = [0, 0], sizes = [31, 128], strides = [1, 1]} : vector<32x128xf32> to vector<31x128xf32>
    %101 = tpu.concatenate %99, %100 in 0 : vector<1x128xf32>, vector<31x128xf32> -> vector<32x128xf32>
    %cst_53 = arith.constant 0.000000e+00 : f32
    %102 = vector.broadcast %cst_53 : f32 to vector<32x128xf32>
    %103 = arith.select %98, %101, %102 : vector<32x128xi1>, vector<32x128xf32>
    %c15_i32_54 = arith.constant 15 : i32
    %104 = vector.broadcast %c15_i32_54 : i32 to vector<32x128xi32>
    %105 = arith.cmpi slt, %16, %104 : vector<32x128xi32>
    %106 = vector.extract_strided_slice %96 {offsets = [1, 0], sizes = [31, 128], strides = [1, 1]} : vector<32x128xf32> to vector<31x128xf32>
    %107 = vector.extract_strided_slice %96 {offsets = [0, 0], sizes = [1, 128], strides = [1, 1]} : vector<32x128xf32> to vector<1x128xf32>
    %108 = tpu.concatenate %106, %107 in 0 : vector<31x128xf32>, vector<1x128xf32> -> vector<32x128xf32>
    %cst_55 = arith.constant 0.000000e+00 : f32
    %109 = vector.broadcast %cst_55 : f32 to vector<32x128xf32>
    %110 = arith.select %105, %108, %109 : vector<32x128xi1>, vector<32x128xf32>
    %111 = tpu.concatenate %103, %96, %110 in 1 : vector<32x128xf32>, vector<32x128xf32>, vector<32x128xf32> -> vector<32x384xf32>
    %112 = arith.truncf %111 : vector<32x384xf32> to vector<32x384xbf16>
    %c2 = arith.constant 2 : index
    %c0_56 = arith.constant 0 : index
    %c0_57 = arith.constant 0 : index
    %113 = vector.load %arg7[%c2, %c0_56, %c0_57] : memref<11x384x128xbf16, #tpu.memory_space<vmem>>, vector<1x384x128xbf16>
    %114 = vector.shape_cast %113 : vector<1x384x128xbf16> to vector<384x128xbf16>
    %cst_58 = arith.constant dense<0.000000e+00> : vector<32x128xf32>
    %115 = tpu.matmul %112, %114, %cst_58 {dimension_numbers = #tpu.dot_dimension_numbers<[1], [0], [0], [1], [0, 0, 1, 1], [], []>} : vector<32x384xbf16>, vector<384x128xbf16>, vector<32x128xf32> -> vector<32x128xf32>
    %c2_59 = arith.constant 2 : index
    %c0_60 = arith.constant 0 : index
    %c0_61 = arith.constant 0 : index
    %116 = vector.load %arg8[%c2_59, %c0_60, %c0_61] : memref<11x1x128xf32, #tpu.memory_space<vmem>>, vector<1x1x128xf32>
    %117 = vector.shape_cast %116 : vector<1x1x128xf32> to vector<1x128xf32>
    %118 = vector.broadcast %117 : vector<1x128xf32> to vector<32x128xf32>
    %119 = arith.addf %115, %118 : vector<32x128xf32>
    %cst_62 = arith.constant 0.000000e+00 : f32
    %120 = vector.broadcast %cst_62 : f32 to vector<32x128xf32>
    %121 = arith.maximumf %119, %120 : vector<32x128xf32>
    %c1_i32_63 = arith.constant 1 : i32
    %122 = vector.broadcast %c1_i32_63 : i32 to vector<32x128xi32>
    %123 = arith.cmpi sge, %16, %122 : vector<32x128xi32>
    %124 = vector.extract_strided_slice %121 {offsets = [31, 0], sizes = [1, 128], strides = [1, 1]} : vector<32x128xf32> to vector<1x128xf32>
    %125 = vector.extract_strided_slice %121 {offsets = [0, 0], sizes = [31, 128], strides = [1, 1]} : vector<32x128xf32> to vector<31x128xf32>
    %126 = tpu.concatenate %124, %125 in 0 : vector<1x128xf32>, vector<31x128xf32> -> vector<32x128xf32>
    %cst_64 = arith.constant 0.000000e+00 : f32
    %127 = vector.broadcast %cst_64 : f32 to vector<32x128xf32>
    %128 = arith.select %123, %126, %127 : vector<32x128xi1>, vector<32x128xf32>
    %c15_i32_65 = arith.constant 15 : i32
    %129 = vector.broadcast %c15_i32_65 : i32 to vector<32x128xi32>
    %130 = arith.cmpi slt, %16, %129 : vector<32x128xi32>
    %131 = vector.extract_strided_slice %121 {offsets = [1, 0], sizes = [31, 128], strides = [1, 1]} : vector<32x128xf32> to vector<31x128xf32>
    %132 = vector.extract_strided_slice %121 {offsets = [0, 0], sizes = [1, 128], strides = [1, 1]} : vector<32x128xf32> to vector<1x128xf32>
    %133 = tpu.concatenate %131, %132 in 0 : vector<31x128xf32>, vector<1x128xf32> -> vector<32x128xf32>
    %cst_66 = arith.constant 0.000000e+00 : f32
    %134 = vector.broadcast %cst_66 : f32 to vector<32x128xf32>
    %135 = arith.select %130, %133, %134 : vector<32x128xi1>, vector<32x128xf32>
    %136 = tpu.concatenate %128, %121, %135 in 1 : vector<32x128xf32>, vector<32x128xf32>, vector<32x128xf32> -> vector<32x384xf32>
    %137 = arith.truncf %136 : vector<32x384xf32> to vector<32x384xbf16>
    %c3 = arith.constant 3 : index
    %c0_67 = arith.constant 0 : index
    %c0_68 = arith.constant 0 : index
    %138 = vector.load %arg7[%c3, %c0_67, %c0_68] : memref<11x384x128xbf16, #tpu.memory_space<vmem>>, vector<1x384x128xbf16>
    %139 = vector.shape_cast %138 : vector<1x384x128xbf16> to vector<384x128xbf16>
    %cst_69 = arith.constant dense<0.000000e+00> : vector<32x128xf32>
    %140 = tpu.matmul %137, %139, %cst_69 {dimension_numbers = #tpu.dot_dimension_numbers<[1], [0], [0], [1], [0, 0, 1, 1], [], []>} : vector<32x384xbf16>, vector<384x128xbf16>, vector<32x128xf32> -> vector<32x128xf32>
    %c3_70 = arith.constant 3 : index
    %c0_71 = arith.constant 0 : index
    %c0_72 = arith.constant 0 : index
    %141 = vector.load %arg8[%c3_70, %c0_71, %c0_72] : memref<11x1x128xf32, #tpu.memory_space<vmem>>, vector<1x1x128xf32>
    %142 = vector.shape_cast %141 : vector<1x1x128xf32> to vector<1x128xf32>
    %143 = vector.broadcast %142 : vector<1x128xf32> to vector<32x128xf32>
    %144 = arith.addf %140, %143 : vector<32x128xf32>
    %145 = arith.addf %92, %144 : vector<32x128xf32>
    %c2_73 = arith.constant 2 : index
    %c0_74 = arith.constant 0 : index
    %c0_75 = arith.constant 0 : index
    %146 = vector.load %arg10[%c2_73, %c0_74, %c0_75] : memref<6x32x128xf32, #tpu.memory_space<vmem>>, vector<1x32x128xf32>
    %147 = vector.shape_cast %146 : vector<1x32x128xf32> to vector<32x128xf32>
    %148 = vector.shape_cast %145 : vector<32x128xf32> to vector<1x32x128xf32>
    tpu.vector_store %arg10[%c2_73, %c0_74, %c0_75], %148 {strides = array<i32>} : memref<6x32x128xf32, #tpu.memory_space<vmem>>, vector<1x32x128xf32>,
    %c0_76 = arith.constant 0 : index
    %c0_77 = arith.constant 0 : index
    %c0_78 = arith.constant 0 : index
    %149 = vector.load %arg10[%c0_76, %c0_77, %c0_78] : memref<6x32x128xf32, #tpu.memory_space<vmem>>, vector<1x32x128xf32>
    %150 = vector.shape_cast %149 : vector<1x32x128xf32> to vector<32x128xf32>
    %cst_79 = arith.constant 0.000000e+00 : f32
    %151 = vector.broadcast %cst_79 : f32 to vector<32x128xf32>
    %152 = arith.maximumf %150, %151 : vector<32x128xf32>
    %c1_i32_80 = arith.constant 1 : i32
    %153 = vector.broadcast %c1_i32_80 : i32 to vector<32x128xi32>
    %154 = arith.cmpi sge, %16, %153 : vector<32x128xi32>
    %155 = vector.extract_strided_slice %152 {offsets = [31, 0], sizes = [1, 128], strides = [1, 1]} : vector<32x128xf32> to vector<1x128xf32>
    %156 = vector.extract_strided_slice %152 {offsets = [0, 0], sizes = [31, 128], strides = [1, 1]} : vector<32x128xf32> to vector<31x128xf32>
    %157 = tpu.concatenate %155, %156 in 0 : vector<1x128xf32>, vector<31x128xf32> -> vector<32x128xf32>
    %cst_81 = arith.constant 0.000000e+00 : f32
    %158 = vector.broadcast %cst_81 : f32 to vector<32x128xf32>
    %159 = arith.select %154, %157, %158 : vector<32x128xi1>, vector<32x128xf32>
    %c15_i32_82 = arith.constant 15 : i32
    %160 = vector.broadcast %c15_i32_82 : i32 to vector<32x128xi32>
    %161 = arith.cmpi slt, %16, %160 : vector<32x128xi32>
    %162 = vector.extract_strided_slice %152 {offsets = [1, 0], sizes = [31, 128], strides = [1, 1]} : vector<32x128xf32> to vector<31x128xf32>
    %163 = vector.extract_strided_slice %152 {offsets = [0, 0], sizes = [1, 128], strides = [1, 1]} : vector<32x128xf32> to vector<1x128xf32>
    %164 = tpu.concatenate %162, %163 in 0 : vector<31x128xf32>, vector<1x128xf32> -> vector<32x128xf32>
    %cst_83 = arith.constant 0.000000e+00 : f32
    %165 = vector.broadcast %cst_83 : f32 to vector<32x128xf32>
    %166 = arith.select %161, %164, %165 : vector<32x128xi1>, vector<32x128xf32>
    %167 = tpu.concatenate %159, %152, %166 in 1 : vector<32x128xf32>, vector<32x128xf32>, vector<32x128xf32> -> vector<32x384xf32>
    %168 = arith.truncf %167 : vector<32x384xf32> to vector<32x384xbf16>
    %c4 = arith.constant 4 : index
    %c0_84 = arith.constant 0 : index
    %c0_85 = arith.constant 0 : index
    %169 = vector.load %arg7[%c4, %c0_84, %c0_85] : memref<11x384x128xbf16, #tpu.memory_space<vmem>>, vector<1x384x128xbf16>
    %170 = vector.shape_cast %169 : vector<1x384x128xbf16> to vector<384x128xbf16>
    %cst_86 = arith.constant dense<0.000000e+00> : vector<32x128xf32>
    %171 = tpu.matmul %168, %170, %cst_86 {dimension_numbers = #tpu.dot_dimension_numbers<[1], [0], [0], [1], [0, 0, 1, 1], [], []>} : vector<32x384xbf16>, vector<384x128xbf16>, vector<32x128xf32> -> vector<32x128xf32>
    %c4_87 = arith.constant 4 : index
    %c0_88 = arith.constant 0 : index
    %c0_89 = arith.constant 0 : index
    %172 = vector.load %arg8[%c4_87, %c0_88, %c0_89] : memref<11x1x128xf32, #tpu.memory_space<vmem>>, vector<1x1x128xf32>
    %173 = vector.shape_cast %172 : vector<1x1x128xf32> to vector<1x128xf32>
    %174 = vector.broadcast %173 : vector<1x128xf32> to vector<32x128xf32>
    %175 = arith.addf %171, %174 : vector<32x128xf32>
    %cst_90 = arith.constant 0.000000e+00 : f32
    %176 = vector.broadcast %cst_90 : f32 to vector<32x128xf32>
    %177 = arith.maximumf %175, %176 : vector<32x128xf32>
    %c1_i32_91 = arith.constant 1 : i32
    %178 = vector.broadcast %c1_i32_91 : i32 to vector<32x128xi32>
    %179 = arith.cmpi sge, %16, %178 : vector<32x128xi32>
    %180 = vector.extract_strided_slice %177 {offsets = [31, 0], sizes = [1, 128], strides = [1, 1]} : vector<32x128xf32> to vector<1x128xf32>
    %181 = vector.extract_strided_slice %177 {offsets = [0, 0], sizes = [31, 128], strides = [1, 1]} : vector<32x128xf32> to vector<31x128xf32>
    %182 = tpu.concatenate %180, %181 in 0 : vector<1x128xf32>, vector<31x128xf32> -> vector<32x128xf32>
    %cst_92 = arith.constant 0.000000e+00 : f32
    %183 = vector.broadcast %cst_92 : f32 to vector<32x128xf32>
    %184 = arith.select %179, %182, %183 : vector<32x128xi1>, vector<32x128xf32>
    %c15_i32_93 = arith.constant 15 : i32
    %185 = vector.broadcast %c15_i32_93 : i32 to vector<32x128xi32>
    %186 = arith.cmpi slt, %16, %185 : vector<32x128xi32>
    %187 = vector.extract_strided_slice %177 {offsets = [1, 0], sizes = [31, 128], strides = [1, 1]} : vector<32x128xf32> to vector<31x128xf32>
    %188 = vector.extract_strided_slice %177 {offsets = [0, 0], sizes = [1, 128], strides = [1, 1]} : vector<32x128xf32> to vector<1x128xf32>
    %189 = tpu.concatenate %187, %188 in 0 : vector<31x128xf32>, vector<1x128xf32> -> vector<32x128xf32>
    %cst_94 = arith.constant 0.000000e+00 : f32
    %190 = vector.broadcast %cst_94 : f32 to vector<32x128xf32>
    %191 = arith.select %186, %189, %190 : vector<32x128xi1>, vector<32x128xf32>
    %192 = tpu.concatenate %184, %177, %191 in 1 : vector<32x128xf32>, vector<32x128xf32>, vector<32x128xf32> -> vector<32x384xf32>
    %193 = arith.truncf %192 : vector<32x384xf32> to vector<32x384xbf16>
    %c5 = arith.constant 5 : index
    %c0_95 = arith.constant 0 : index
    %c0_96 = arith.constant 0 : index
    %194 = vector.load %arg7[%c5, %c0_95, %c0_96] : memref<11x384x128xbf16, #tpu.memory_space<vmem>>, vector<1x384x128xbf16>
    %195 = vector.shape_cast %194 : vector<1x384x128xbf16> to vector<384x128xbf16>
    %cst_97 = arith.constant dense<0.000000e+00> : vector<32x128xf32>
    %196 = tpu.matmul %193, %195, %cst_97 {dimension_numbers = #tpu.dot_dimension_numbers<[1], [0], [0], [1], [0, 0, 1, 1], [], []>} : vector<32x384xbf16>, vector<384x128xbf16>, vector<32x128xf32> -> vector<32x128xf32>
    %c5_98 = arith.constant 5 : index
    %c0_99 = arith.constant 0 : index
    %c0_100 = arith.constant 0 : index
    %197 = vector.load %arg8[%c5_98, %c0_99, %c0_100] : memref<11x1x128xf32, #tpu.memory_space<vmem>>, vector<1x1x128xf32>
    %198 = vector.shape_cast %197 : vector<1x1x128xf32> to vector<1x128xf32>
    %199 = vector.broadcast %198 : vector<1x128xf32> to vector<32x128xf32>
    %200 = arith.addf %196, %199 : vector<32x128xf32>
    %c1_101 = arith.constant 1 : index
    %c0_102 = arith.constant 0 : index
    %c0_103 = arith.constant 0 : index
    %201 = vector.load %arg10[%c1_101, %c0_102, %c0_103] : memref<6x32x128xf32, #tpu.memory_space<vmem>>, vector<1x32x128xf32>
    %202 = vector.shape_cast %201 : vector<1x32x128xf32> to vector<32x128xf32>
    %cst_104 = arith.constant 0.000000e+00 : f32
    %203 = vector.broadcast %cst_104 : f32 to vector<32x128xf32>
    %204 = arith.maximumf %202, %203 : vector<32x128xf32>
    %c1_i32_105 = arith.constant 1 : i32
    %205 = vector.broadcast %c1_i32_105 : i32 to vector<32x128xi32>
    %206 = arith.cmpi sge, %16, %205 : vector<32x128xi32>
    %207 = vector.extract_strided_slice %204 {offsets = [31, 0], sizes = [1, 128], strides = [1, 1]} : vector<32x128xf32> to vector<1x128xf32>
    %208 = vector.extract_strided_slice %204 {offsets = [0, 0], sizes = [31, 128], strides = [1, 1]} : vector<32x128xf32> to vector<31x128xf32>
    %209 = tpu.concatenate %207, %208 in 0 : vector<1x128xf32>, vector<31x128xf32> -> vector<32x128xf32>
    %cst_106 = arith.constant 0.000000e+00 : f32
    %210 = vector.broadcast %cst_106 : f32 to vector<32x128xf32>
    %211 = arith.select %206, %209, %210 : vector<32x128xi1>, vector<32x128xf32>
    %c15_i32_107 = arith.constant 15 : i32
    %212 = vector.broadcast %c15_i32_107 : i32 to vector<32x128xi32>
    %213 = arith.cmpi slt, %16, %212 : vector<32x128xi32>
    %214 = vector.extract_strided_slice %204 {offsets = [1, 0], sizes = [31, 128], strides = [1, 1]} : vector<32x128xf32> to vector<31x128xf32>
    %215 = vector.extract_strided_slice %204 {offsets = [0, 0], sizes = [1, 128], strides = [1, 1]} : vector<32x128xf32> to vector<1x128xf32>
    %216 = tpu.concatenate %214, %215 in 0 : vector<31x128xf32>, vector<1x128xf32> -> vector<32x128xf32>
    %cst_108 = arith.constant 0.000000e+00 : f32
    %217 = vector.broadcast %cst_108 : f32 to vector<32x128xf32>
    %218 = arith.select %213, %216, %217 : vector<32x128xi1>, vector<32x128xf32>
    %219 = tpu.concatenate %211, %204, %218 in 1 : vector<32x128xf32>, vector<32x128xf32>, vector<32x128xf32> -> vector<32x384xf32>
    %220 = arith.truncf %219 : vector<32x384xf32> to vector<32x384xbf16>
    %c6 = arith.constant 6 : index
    %c0_109 = arith.constant 0 : index
    %c0_110 = arith.constant 0 : index
    %221 = vector.load %arg7[%c6, %c0_109, %c0_110] : memref<11x384x128xbf16, #tpu.memory_space<vmem>>, vector<1x384x128xbf16>
    %222 = vector.shape_cast %221 : vector<1x384x128xbf16> to vector<384x128xbf16>
    %cst_111 = arith.constant dense<0.000000e+00> : vector<32x128xf32>
    %223 = tpu.matmul %220, %222, %cst_111 {dimension_numbers = #tpu.dot_dimension_numbers<[1], [0], [0], [1], [0, 0, 1, 1], [], []>} : vector<32x384xbf16>, vector<384x128xbf16>, vector<32x128xf32> -> vector<32x128xf32>
    %c6_112 = arith.constant 6 : index
    %c0_113 = arith.constant 0 : index
    %c0_114 = arith.constant 0 : index
    %224 = vector.load %arg8[%c6_112, %c0_113, %c0_114] : memref<11x1x128xf32, #tpu.memory_space<vmem>>, vector<1x1x128xf32>
    %225 = vector.shape_cast %224 : vector<1x1x128xf32> to vector<1x128xf32>
    %226 = vector.broadcast %225 : vector<1x128xf32> to vector<32x128xf32>
    %227 = arith.addf %223, %226 : vector<32x128xf32>
    %cst_115 = arith.constant 0.000000e+00 : f32
    %228 = vector.broadcast %cst_115 : f32 to vector<32x128xf32>
    %229 = arith.maximumf %227, %228 : vector<32x128xf32>
    %c1_i32_116 = arith.constant 1 : i32
    %230 = vector.broadcast %c1_i32_116 : i32 to vector<32x128xi32>
    %231 = arith.cmpi sge, %16, %230 : vector<32x128xi32>
    %232 = vector.extract_strided_slice %229 {offsets = [31, 0], sizes = [1, 128], strides = [1, 1]} : vector<32x128xf32> to vector<1x128xf32>
    %233 = vector.extract_strided_slice %229 {offsets = [0, 0], sizes = [31, 128], strides = [1, 1]} : vector<32x128xf32> to vector<31x128xf32>
    %234 = tpu.concatenate %232, %233 in 0 : vector<1x128xf32>, vector<31x128xf32> -> vector<32x128xf32>
    %cst_117 = arith.constant 0.000000e+00 : f32
    %235 = vector.broadcast %cst_117 : f32 to vector<32x128xf32>
    %236 = arith.select %231, %234, %235 : vector<32x128xi1>, vector<32x128xf32>
    %c15_i32_118 = arith.constant 15 : i32
    %237 = vector.broadcast %c15_i32_118 : i32 to vector<32x128xi32>
    %238 = arith.cmpi slt, %16, %237 : vector<32x128xi32>
    %239 = vector.extract_strided_slice %229 {offsets = [1, 0], sizes = [31, 128], strides = [1, 1]} : vector<32x128xf32> to vector<31x128xf32>
    %240 = vector.extract_strided_slice %229 {offsets = [0, 0], sizes = [1, 128], strides = [1, 1]} : vector<32x128xf32> to vector<1x128xf32>
    %241 = tpu.concatenate %239, %240 in 0 : vector<31x128xf32>, vector<1x128xf32> -> vector<32x128xf32>
    %cst_119 = arith.constant 0.000000e+00 : f32
    %242 = vector.broadcast %cst_119 : f32 to vector<32x128xf32>
    %243 = arith.select %238, %241, %242 : vector<32x128xi1>, vector<32x128xf32>
    %244 = tpu.concatenate %236, %229, %243 in 1 : vector<32x128xf32>, vector<32x128xf32>, vector<32x128xf32> -> vector<32x384xf32>
    %245 = arith.truncf %244 : vector<32x384xf32> to vector<32x384xbf16>
    %c7 = arith.constant 7 : index
    %c0_120 = arith.constant 0 : index
    %c0_121 = arith.constant 0 : index
    %246 = vector.load %arg7[%c7, %c0_120, %c0_121] : memref<11x384x128xbf16, #tpu.memory_space<vmem>>, vector<1x384x128xbf16>
    %247 = vector.shape_cast %246 : vector<1x384x128xbf16> to vector<384x128xbf16>
    %cst_122 = arith.constant dense<0.000000e+00> : vector<32x128xf32>
    %248 = tpu.matmul %245, %247, %cst_122 {dimension_numbers = #tpu.dot_dimension_numbers<[1], [0], [0], [1], [0, 0, 1, 1], [], []>} : vector<32x384xbf16>, vector<384x128xbf16>, vector<32x128xf32> -> vector<32x128xf32>
    %c7_123 = arith.constant 7 : index
    %c0_124 = arith.constant 0 : index
    %c0_125 = arith.constant 0 : index
    %249 = vector.load %arg8[%c7_123, %c0_124, %c0_125] : memref<11x1x128xf32, #tpu.memory_space<vmem>>, vector<1x1x128xf32>
    %250 = vector.shape_cast %249 : vector<1x1x128xf32> to vector<1x128xf32>
    %251 = vector.broadcast %250 : vector<1x128xf32> to vector<32x128xf32>
    %252 = arith.addf %248, %251 : vector<32x128xf32>
    %253 = arith.addf %200, %252 : vector<32x128xf32>
    %c3_126 = arith.constant 3 : index
    %c0_127 = arith.constant 0 : index
    %c0_128 = arith.constant 0 : index
    %254 = vector.load %arg10[%c3_126, %c0_127, %c0_128] : memref<6x32x128xf32, #tpu.memory_space<vmem>>, vector<1x32x128xf32>
    %255 = vector.shape_cast %254 : vector<1x32x128xf32> to vector<32x128xf32>
    %256 = vector.shape_cast %253 : vector<32x128xf32> to vector<1x32x128xf32>
    tpu.vector_store %arg10[%c3_126, %c0_127, %c0_128], %256 {strides = array<i32>} : memref<6x32x128xf32, #tpu.memory_space<vmem>>, vector<1x32x128xf32>,
    %c1_129 = arith.constant 1 : index
    %c0_130 = arith.constant 0 : index
    %c0_131 = arith.constant 0 : index
    %257 = vector.load %arg10[%c1_129, %c0_130, %c0_131] : memref<6x32x128xf32, #tpu.memory_space<vmem>>, vector<1x32x128xf32>
    %258 = vector.shape_cast %257 : vector<1x32x128xf32> to vector<32x128xf32>
    %cst_132 = arith.constant 0.000000e+00 : f32
    %259 = vector.broadcast %cst_132 : f32 to vector<32x128xf32>
    %260 = arith.maximumf %258, %259 : vector<32x128xf32>
    %c1_i32_133 = arith.constant 1 : i32
    %261 = vector.broadcast %c1_i32_133 : i32 to vector<32x128xi32>
    %262 = arith.cmpi sge, %16, %261 : vector<32x128xi32>
    %263 = vector.extract_strided_slice %260 {offsets = [31, 0], sizes = [1, 128], strides = [1, 1]} : vector<32x128xf32> to vector<1x128xf32>
    %264 = vector.extract_strided_slice %260 {offsets = [0, 0], sizes = [31, 128], strides = [1, 1]} : vector<32x128xf32> to vector<31x128xf32>
    %265 = tpu.concatenate %263, %264 in 0 : vector<1x128xf32>, vector<31x128xf32> -> vector<32x128xf32>
    %cst_134 = arith.constant 0.000000e+00 : f32
    %266 = vector.broadcast %cst_134 : f32 to vector<32x128xf32>
    %267 = arith.select %262, %265, %266 : vector<32x128xi1>, vector<32x128xf32>
    %c15_i32_135 = arith.constant 15 : i32
    %268 = vector.broadcast %c15_i32_135 : i32 to vector<32x128xi32>
    %269 = arith.cmpi slt, %16, %268 : vector<32x128xi32>
    %270 = vector.extract_strided_slice %260 {offsets = [1, 0], sizes = [31, 128], strides = [1, 1]} : vector<32x128xf32> to vector<31x128xf32>
    %271 = vector.extract_strided_slice %260 {offsets = [0, 0], sizes = [1, 128], strides = [1, 1]} : vector<32x128xf32> to vector<1x128xf32>
    %272 = tpu.concatenate %270, %271 in 0 : vector<31x128xf32>, vector<1x128xf32> -> vector<32x128xf32>
    %cst_136 = arith.constant 0.000000e+00 : f32
    %273 = vector.broadcast %cst_136 : f32 to vector<32x128xf32>
    %274 = arith.select %269, %272, %273 : vector<32x128xi1>, vector<32x128xf32>
    %275 = tpu.concatenate %267, %260, %274 in 1 : vector<32x128xf32>, vector<32x128xf32>, vector<32x128xf32> -> vector<32x384xf32>
    %276 = arith.truncf %275 : vector<32x384xf32> to vector<32x384xbf16>
    %c8 = arith.constant 8 : index
    %c0_137 = arith.constant 0 : index
    %c0_138 = arith.constant 0 : index
    %277 = vector.load %arg7[%c8, %c0_137, %c0_138] : memref<11x384x128xbf16, #tpu.memory_space<vmem>>, vector<1x384x128xbf16>
    %278 = vector.shape_cast %277 : vector<1x384x128xbf16> to vector<384x128xbf16>
    %cst_139 = arith.constant dense<0.000000e+00> : vector<32x128xf32>
    %279 = tpu.matmul %276, %278, %cst_139 {dimension_numbers = #tpu.dot_dimension_numbers<[1], [0], [0], [1], [0, 0, 1, 1], [], []>} : vector<32x384xbf16>, vector<384x128xbf16>, vector<32x128xf32> -> vector<32x128xf32>
    %c8_140 = arith.constant 8 : index
    %c0_141 = arith.constant 0 : index
    %c0_142 = arith.constant 0 : index
    %280 = vector.load %arg8[%c8_140, %c0_141, %c0_142] : memref<11x1x128xf32, #tpu.memory_space<vmem>>, vector<1x1x128xf32>
    %281 = vector.shape_cast %280 : vector<1x1x128xf32> to vector<1x128xf32>
    %282 = vector.broadcast %281 : vector<1x128xf32> to vector<32x128xf32>
    %283 = arith.addf %279, %282 : vector<32x128xf32>
    %cst_143 = arith.constant 0.000000e+00 : f32
    %284 = vector.broadcast %cst_143 : f32 to vector<32x128xf32>
    %285 = arith.maximumf %283, %284 : vector<32x128xf32>
    %c1_i32_144 = arith.constant 1 : i32
    %286 = vector.broadcast %c1_i32_144 : i32 to vector<32x128xi32>
    %287 = arith.cmpi sge, %16, %286 : vector<32x128xi32>
    %288 = vector.extract_strided_slice %285 {offsets = [31, 0], sizes = [1, 128], strides = [1, 1]} : vector<32x128xf32> to vector<1x128xf32>
    %289 = vector.extract_strided_slice %285 {offsets = [0, 0], sizes = [31, 128], strides = [1, 1]} : vector<32x128xf32> to vector<31x128xf32>
    %290 = tpu.concatenate %288, %289 in 0 : vector<1x128xf32>, vector<31x128xf32> -> vector<32x128xf32>
    %cst_145 = arith.constant 0.000000e+00 : f32
    %291 = vector.broadcast %cst_145 : f32 to vector<32x128xf32>
    %292 = arith.select %287, %290, %291 : vector<32x128xi1>, vector<32x128xf32>
    %c15_i32_146 = arith.constant 15 : i32
    %293 = vector.broadcast %c15_i32_146 : i32 to vector<32x128xi32>
    %294 = arith.cmpi slt, %16, %293 : vector<32x128xi32>
    %295 = vector.extract_strided_slice %285 {offsets = [1, 0], sizes = [31, 128], strides = [1, 1]} : vector<32x128xf32> to vector<31x128xf32>
    %296 = vector.extract_strided_slice %285 {offsets = [0, 0], sizes = [1, 128], strides = [1, 1]} : vector<32x128xf32> to vector<1x128xf32>
    %297 = tpu.concatenate %295, %296 in 0 : vector<31x128xf32>, vector<1x128xf32> -> vector<32x128xf32>
    %cst_147 = arith.constant 0.000000e+00 : f32
    %298 = vector.broadcast %cst_147 : f32 to vector<32x128xf32>
    %299 = arith.select %294, %297, %298 : vector<32x128xi1>, vector<32x128xf32>
    %300 = tpu.concatenate %292, %285, %299 in 1 : vector<32x128xf32>, vector<32x128xf32>, vector<32x128xf32> -> vector<32x384xf32>
    %301 = arith.truncf %300 : vector<32x384xf32> to vector<32x384xbf16>
    %c9 = arith.constant 9 : index
    %c0_148 = arith.constant 0 : index
    %c0_149 = arith.constant 0 : index
    %302 = vector.load %arg7[%c9, %c0_148, %c0_149] : memref<11x384x128xbf16, #tpu.memory_space<vmem>>, vector<1x384x128xbf16>
    %303 = vector.shape_cast %302 : vector<1x384x128xbf16> to vector<384x128xbf16>
    %cst_150 = arith.constant dense<0.000000e+00> : vector<32x128xf32>
    %304 = tpu.matmul %301, %303, %cst_150 {dimension_numbers = #tpu.dot_dimension_numbers<[1], [0], [0], [1], [0, 0, 1, 1], [], []>} : vector<32x384xbf16>, vector<384x128xbf16>, vector<32x128xf32> -> vector<32x128xf32>
    %c9_151 = arith.constant 9 : index
    %c0_152 = arith.constant 0 : index
    %c0_153 = arith.constant 0 : index
    %305 = vector.load %arg8[%c9_151, %c0_152, %c0_153] : memref<11x1x128xf32, #tpu.memory_space<vmem>>, vector<1x1x128xf32>
    %306 = vector.shape_cast %305 : vector<1x1x128xf32> to vector<1x128xf32>
    %307 = vector.broadcast %306 : vector<1x128xf32> to vector<32x128xf32>
    %308 = arith.addf %304, %307 : vector<32x128xf32>
    %c0_154 = arith.constant 0 : index
    %c0_155 = arith.constant 0 : index
    %c0_156 = arith.constant 0 : index
    %309 = vector.load %arg10[%c0_154, %c0_155, %c0_156] : memref<6x32x128xf32, #tpu.memory_space<vmem>>, vector<1x32x128xf32>
    %310 = vector.shape_cast %309 : vector<1x32x128xf32> to vector<32x128xf32>
    %311 = arith.addf %308, %310 : vector<32x128xf32>
    %c4_157 = arith.constant 4 : index
    %c0_158 = arith.constant 0 : index
    %c0_159 = arith.constant 0 : index
    %312 = vector.load %arg10[%c4_157, %c0_158, %c0_159] : memref<6x32x128xf32, #tpu.memory_space<vmem>>, vector<1x32x128xf32>
    %313 = vector.shape_cast %312 : vector<1x32x128xf32> to vector<32x128xf32>
    %314 = vector.shape_cast %311 : vector<32x128xf32> to vector<1x32x128xf32>
    tpu.vector_store %arg10[%c4_157, %c0_158, %c0_159], %314 {strides = array<i32>} : memref<6x32x128xf32, #tpu.memory_space<vmem>>, vector<1x32x128xf32>,
    %c0_160 = arith.constant 0 : index
    %c0_161 = arith.constant 0 : index
    %c0_162 = arith.constant 0 : index
    %315 = vector.load %arg10[%c0_160, %c0_161, %c0_162] : memref<6x32x128xf32, #tpu.memory_space<vmem>>, vector<1x32x128xf32>
    %316 = vector.shape_cast %315 : vector<1x32x128xf32> to vector<32x128xf32>
    %c2_163 = arith.constant 2 : index
    %c0_164 = arith.constant 0 : index
    %c0_165 = arith.constant 0 : index
    %317 = vector.load %arg10[%c2_163, %c0_164, %c0_165] : memref<6x32x128xf32, #tpu.memory_space<vmem>>, vector<1x32x128xf32>
    %318 = vector.shape_cast %317 : vector<1x32x128xf32> to vector<32x128xf32>
    %cst_166 = arith.constant 0.000000e+00 : f32
    %319 = vector.broadcast %cst_166 : f32 to vector<32x128xf32>
    %320 = arith.maximumf %318, %319 : vector<32x128xf32>
    %c2_i32 = arith.constant 2 : i32
    %321 = vector.broadcast %c2_i32 : i32 to vector<32x128xi32>
    %322 = arith.cmpi sge, %16, %321 : vector<32x128xi32>
    %323 = vector.extract_strided_slice %320 {offsets = [30, 0], sizes = [2, 128], strides = [1, 1]} : vector<32x128xf32> to vector<2x128xf32>
    %324 = vector.extract_strided_slice %320 {offsets = [0, 0], sizes = [30, 128], strides = [1, 1]} : vector<32x128xf32> to vector<30x128xf32>
    %325 = tpu.concatenate %323, %324 in 0 : vector<2x128xf32>, vector<30x128xf32> -> vector<32x128xf32>
    %cst_167 = arith.constant 0.000000e+00 : f32
    %326 = vector.broadcast %cst_167 : f32 to vector<32x128xf32>
    %327 = arith.select %322, %325, %326 : vector<32x128xi1>, vector<32x128xf32>
    %c14_i32 = arith.constant 14 : i32
    %328 = vector.broadcast %c14_i32 : i32 to vector<32x128xi32>
    %329 = arith.cmpi slt, %16, %328 : vector<32x128xi32>
    %330 = vector.extract_strided_slice %320 {offsets = [2, 0], sizes = [30, 128], strides = [1, 1]} : vector<32x128xf32> to vector<30x128xf32>
    %331 = vector.extract_strided_slice %320 {offsets = [0, 0], sizes = [2, 128], strides = [1, 1]} : vector<32x128xf32> to vector<2x128xf32>
    %332 = tpu.concatenate %330, %331 in 0 : vector<30x128xf32>, vector<2x128xf32> -> vector<32x128xf32>
    %cst_168 = arith.constant 0.000000e+00 : f32
    %333 = vector.broadcast %cst_168 : f32 to vector<32x128xf32>
    %334 = arith.select %329, %332, %333 : vector<32x128xi1>, vector<32x128xf32>
    %335 = tpu.concatenate %327, %320, %334 in 1 : vector<32x128xf32>, vector<32x128xf32>, vector<32x128xf32> -> vector<32x384xf32>
    %336 = arith.truncf %335 : vector<32x384xf32> to vector<32x384xbf16>
    %c10 = arith.constant 10 : index
    %c0_169 = arith.constant 0 : index
    %c0_170 = arith.constant 0 : index
    %337 = vector.load %arg7[%c10, %c0_169, %c0_170] : memref<11x384x128xbf16, #tpu.memory_space<vmem>>, vector<1x384x128xbf16>
    %338 = vector.shape_cast %337 : vector<1x384x128xbf16> to vector<384x128xbf16>
    %cst_171 = arith.constant dense<0.000000e+00> : vector<32x128xf32>
    %339 = tpu.matmul %336, %338, %cst_171 {dimension_numbers = #tpu.dot_dimension_numbers<[1], [0], [0], [1], [0, 0, 1, 1], [], []>} : vector<32x384xbf16>, vector<384x128xbf16>, vector<32x128xf32> -> vector<32x128xf32>
    %c10_172 = arith.constant 10 : index
    %c0_173 = arith.constant 0 : index
    %c0_174 = arith.constant 0 : index
    %340 = vector.load %arg8[%c10_172, %c0_173, %c0_174] : memref<11x1x128xf32, #tpu.memory_space<vmem>>, vector<1x1x128xf32>
    %341 = vector.shape_cast %340 : vector<1x1x128xf32> to vector<1x128xf32>
    %342 = vector.broadcast %341 : vector<1x128xf32> to vector<32x128xf32>
    %343 = arith.addf %339, %342 : vector<32x128xf32>
    %344 = arith.addf %316, %343 : vector<32x128xf32>
    %c5_175 = arith.constant 5 : index
    %c0_176 = arith.constant 0 : index
    %c0_177 = arith.constant 0 : index
    %345 = vector.load %arg10[%c5_175, %c0_176, %c0_177] : memref<6x32x128xf32, #tpu.memory_space<vmem>>, vector<1x32x128xf32>
    %346 = vector.shape_cast %345 : vector<1x32x128xf32> to vector<32x128xf32>
    %347 = vector.shape_cast %344 : vector<32x128xf32> to vector<1x32x128xf32>
    tpu.vector_store %arg10[%c5_175, %c0_176, %c0_177], %347 {strides = array<i32>} : memref<6x32x128xf32, #tpu.memory_space<vmem>>, vector<1x32x128xf32>,
    %c2_178 = arith.constant 2 : index
    %c0_179 = arith.constant 0 : index
    %c0_180 = arith.constant 0 : index
    %348 = vector.load %arg10[%c2_178, %c0_179, %c0_180] : memref<6x32x128xf32, #tpu.memory_space<vmem>>, vector<1x32x128xf32>
    %349 = vector.shape_cast %348 : vector<1x32x128xf32> to vector<32x128xf32>
    %c3_181 = arith.constant 3 : index
    %c0_182 = arith.constant 0 : index
    %c0_183 = arith.constant 0 : index
    %350 = vector.load %arg10[%c3_181, %c0_182, %c0_183] : memref<6x32x128xf32, #tpu.memory_space<vmem>>, vector<1x32x128xf32>
    %351 = vector.shape_cast %350 : vector<1x32x128xf32> to vector<32x128xf32>
    %c4_184 = arith.constant 4 : index
    %c0_185 = arith.constant 0 : index
    %c0_186 = arith.constant 0 : index
    %352 = vector.load %arg10[%c4_184, %c0_185, %c0_186] : memref<6x32x128xf32, #tpu.memory_space<vmem>>, vector<1x32x128xf32>
    %353 = vector.shape_cast %352 : vector<1x32x128xf32> to vector<32x128xf32>
    %c5_187 = arith.constant 5 : index
    %c0_188 = arith.constant 0 : index
    %c0_189 = arith.constant 0 : index
    %354 = vector.load %arg10[%c5_187, %c0_188, %c0_189] : memref<6x32x128xf32, #tpu.memory_space<vmem>>, vector<1x32x128xf32>
    %355 = vector.shape_cast %354 : vector<1x32x128xf32> to vector<32x128xf32>
    %356 = tpu.concatenate %349, %351, %353, %355 in 1 : vector<32x128xf32>, vector<32x128xf32>, vector<32x128xf32>, vector<32x128xf32> -> vector<32x512xf32>
    %c0_190 = arith.constant 0 : index
    %c0_191 = arith.constant 0 : index
    %357 = vector.load %arg9[%c0_190, %c0_191] : memref<32x512xf32, #tpu.memory_space<vmem>>, vector<32x512xf32>
    tpu.vector_store %arg9[%c0_190, %c0_191], %356 {strides = array<i32>} : memref<32x512xf32, #tpu.memory_space<vmem>>, vector<32x512xf32>,
    return
  }
  func.func @transform_0(%arg0: i32) -> (i32, i32) {
    %c0_i32 = arith.constant 0 : i32
    %c0_i32_0 = arith.constant 0 : i32
    return %arg0, %c0_i32 : i32, i32
  }
  func.func @transform_1(%arg0: i32) -> (i32, i32) {
    %c0_i32 = arith.constant 0 : i32
    %c0_i32_0 = arith.constant 0 : i32
    return %arg0, %c0_i32 : i32, i32
  }
  func.func @transform_2(%arg0: i32) -> (i32, i32) {
    %c0_i32 = arith.constant 0 : i32
    %c0_i32_0 = arith.constant 0 : i32
    %c0_i32_1 = arith.constant 0 : i32
    return %c0_i32, %c0_i32_0 : i32, i32
  }
  func.func @transform_3(%arg0: i32) -> (i32, i32) {
    %c0_i32 = arith.constant 0 : i32
    %c0_i32_0 = arith.constant 0 : i32
    %c0_i32_1 = arith.constant 0 : i32
    return %c0_i32, %c0_i32_0 : i32, i32
  }
  func.func @transform_4(%arg0: i32) -> (i32, i32) {
    %c0_i32 = arith.constant 0 : i32
    %c0_i32_0 = arith.constant 0 : i32
    %c0_i32_1 = arith.constant 0 : i32
    return %c0_i32, %c0_i32_0 : i32, i32
  }
  func.func @transform_5(%arg0: i32) -> (i32, i32) {
    %c0_i32 = arith.constant 0 : i32
    %c0_i32_0 = arith.constant 0 : i32
    %c0_i32_1 = arith.constant 0 : i32
    return %c0_i32, %c0_i32_0 : i32, i32
  }
  func.func @transform_6(%arg0: i32) -> (i32, i32, i32) {
    %c0_i32 = arith.constant 0 : i32
    %c0_i32_0 = arith.constant 0 : i32
    %c0_i32_1 = arith.constant 0 : i32
    %c0_i32_2 = arith.constant 0 : i32
    return %c0_i32, %c0_i32_0, %c0_i32_1 : i32, i32, i32
  }
  func.func @transform_7(%arg0: i32) -> (i32, i32, i32) {
    %c0_i32 = arith.constant 0 : i32
    %c0_i32_0 = arith.constant 0 : i32
    %c0_i32_1 = arith.constant 0 : i32
    %c0_i32_2 = arith.constant 0 : i32
    return %c0_i32, %c0_i32_0, %c0_i32_1 : i32, i32, i32
  }
  func.func @transform_8(%arg0: i32) -> (i32, i32) {
    %c0_i32 = arith.constant 0 : i32
    %c0_i32_0 = arith.constant 0 : i32
    return %arg0, %c0_i32 : i32, i32
  }
}

</mosaic_0001>

<llo_original>
// kernel: tile.78
$region0: #{tile.78}
  #allocation2 [shape = 's32[1]{0}', space=sflag, size = 0x4, scoped, tag = 'scoped memory for tile.78']
  %s0 = inlined_call_operand.hbm [shape: f32[8], index: 0, kind: input, shape index: {}]
  %s1 = inlined_call_operand.vmem [shape: f32[16,8], index: 1, kind: output, shape index: {}]
  $region1: #{tile.78} parent=0
    #allocation0 [shape = 'u8[512]{0}', space=vmem, size = 0x400, scoped, tag = 'operand span for operand 0']
    #allocation1 [shape = 's32[1]{0}', space=sflag, size = 0x4, scoped, tag = 'scoped memory for tile.78']
    %2 = vsyncpa [#allocation1], 0
    // Predicated region
    $region2: #{tile.78} parent=1 // pred_check
      _
    $region3: #{tile.78} parent=1 // pred_check_branch
      %4 = sbr.rel (0) target = $region5
    $region4: #{tile.78} parent=1 // pred_region
      %s6 = ssub.s32 16, 16
      %7 = vsyncadd [#allocation1], %s6
      %s9 = sshll.u32 [#allocation0], 4
      %s10 = int_to_ptr.vmem [resolvable:$true] %s9
      %12 = dma.hbm_to_vmem [thread:$0]  %s0, 16, %s10, [#allocation1]
    $region5: #{tile.78} parent=1 // pred_fallthru
      _
    // Predicated region
    $region6: #{tile.78} parent=1 // pred_check
      _
    $region7: #{tile.78} parent=1 // pred_check_branch
      %14 = sbr.rel (0) target = $region9
    $region8: #{tile.78} parent=1 // pred_region
      %15 = dma.done [#allocation1], 16
    $region9: #{tile.78} parent=1 // pred_fallthru
      _
    %v16 = vld [vmem:[#allocation0] ss:$0 sm:$0xff]
    %17 = vst [vmem:[%s1] sm:$0xff] %v16
    %s18 = scalar_lea.vmem %s1, 8
    %19 = vst [vmem:[%s18] sm:$0xff] %v16
    %20 = vsyncpa [#allocation1], 1

// kernel: tile.119
$region0: #{tile.119}
  %s0 = inlined_call_operand.vmem [shape: f32[16,8], index: 0, kind: input, shape index: {}]
  %s1 = inlined_call_operand.vmem [shape: f32[1,1,128], index: 1, kind: output, shape index: {}]
  $region1: #{tile.119} parent=0
    #allocation0 [shape = 'u8[4096]{0}', space=vmem, size = 0x1000, scoped, tag = 'scoped mem for output reshape']
    %v2 = vld [vmem:[%s0] sm:$0x1]
    %vm3 = vcmask 64512
    %4 = vst.msk [vmem:[#allocation0] sm:$0x1] %vm3, %v2
    %s5 = scalar_lea.vmem %s0, 15
    %v6 = vld [vmem:[%s5] sm:$0x1]
    %7 = vrot.lane.b32.xlu0 %v6, 120
    %v8 = vpop.permute.xlu0 %7
    %vm9 = vcmask 1048512
    %10 = vst.msk [vmem:[#allocation0] sm:$0x1] %vm9, %v8
    %s11 = scalar_lea.vmem %s0, 14
    %v12 = vld [vmem:[%s11] sm:$0x1]
    %13 = vrot.lane.b32.xlu0 %v12, 112
    %v14 = vpop.permute.xlu0 %13
    %vm15 = vcmask 982912
    %16 = vst.msk [vmem:[#allocation0] sm:$0x1] %vm15, %v14
    %s17 = scalar_lea.vmem %s0, 13
    %v18 = vld [vmem:[%s17] sm:$0x1]
    %19 = vrot.lane.b32.xlu0 %v18, 104
    %v20 = vpop.permute.xlu0 %19
    %vm21 = vcmask 917312
    %22 = vst.msk [vmem:[#allocation0] sm:$0x1] %vm21, %v20
    %s23 = scalar_lea.vmem %s0, 12
    %v24 = vld [vmem:[%s23] sm:$0x1]
    %25 = vrot.lane.b32.xlu0 %v24, 96
    %v26 = vpop.permute.xlu0 %25
    %vm27 = vcmask 851712
    %28 = vst.msk [vmem:[#allocation0] sm:$0x1] %vm27, %v26
    %s29 = scalar_lea.vmem %s0, 11
    %v30 = vld [vmem:[%s29] sm:$0x1]
    %31 = vrot.lane.b32.xlu0 %v30, 88
    %v32 = vpop.permute.xlu0 %31
    %vm33 = vcmask 786112
    %34 = vst.msk [vmem:[#allocation0] sm:$0x1] %vm33, %v32
    %s35 = scalar_lea.vmem %s0, 10
    %v36 = vld [vmem:[%s35] sm:$0x1]
    %37 = vrot.lane.b32.xlu0 %v36, 80
    %v38 = vpop.permute.xlu0 %37
    %vm39 = vcmask 720512
    %40 = vst.msk [vmem:[#allocation0] sm:$0x1] %vm39, %v38
    %s41 = scalar_lea.vmem %s0, 9
    %v42 = vld [vmem:[%s41] sm:$0x1]
    %43 = vrot.lane.b32.xlu0 %v42, 72
    %v44 = vpop.permute.xlu0 %43
    %vm45 = vcmask 654912
    %46 = vst.msk [vmem:[#allocation0] sm:$0x1] %vm45, %v44
    %s47 = scalar_lea.vmem %s0, 8
    %v48 = vld [vmem:[%s47] sm:$0x1]
    %49 = vrot.lane.b32.xlu0 %v48, 64
    %v50 = vpop.permute.xlu0 %49
    %vm51 = vcmask 589312
    %52 = vst.msk [vmem:[#allocation0] sm:$0x1] %vm51, %v50
    %s53 = scalar_lea.vmem %s0, 7
    %v54 = vld [vmem:[%s53] sm:$0x1]
    %55 = vrot.lane.b32.xlu0 %v54, 56
    %v56 = vpop.permute.xlu0 %55
    %vm57 = vcmask 523712
    %58 = vst.msk [vmem:[#allocation0] sm:$0x1] %vm57, %v56
    %s59 = scalar_lea.vmem %s0, 6
    %v60 = vld [vmem:[%s59] sm:$0x1]
    %61 = vrot.lane.b32.xlu0 %v60, 48
    %v62 = vpop.permute.xlu0 %61
    %vm63 = vcmask 458112
    %64 = vst.msk [vmem:[#allocation0] sm:$0x1] %vm63, %v62
    %s65 = scalar_lea.vmem %s0, 5
    %v66 = vld [vmem:[%s65] sm:$0x1]
    %67 = vrot.lane.b32.xlu0 %v66, 40
    %v68 = vpop.permute.xlu0 %67
    %vm69 = vcmask 392512
    %70 = vst.msk [vmem:[#allocation0] sm:$0x1] %vm69, %v68
    %s71 = scalar_lea.vmem %s0, 4
    %v72 = vld [vmem:[%s71] sm:$0x1]
    %73 = vrot.lane.b32.xlu0 %v72, 32
    %v74 = vpop.permute.xlu0 %73
    %vm75 = vcmask 326912
    %76 = vst.msk [vmem:[#allocation0] sm:$0x1] %vm75, %v74
    %s77 = scalar_lea.vmem %s0, 3
    %v78 = vld [vmem:[%s77] sm:$0x1]
    %79 = vrot.lane.b32.xlu0 %v78, 24
    %v80 = vpop.permute.xlu0 %79
    %vm81 = vcmask 261312
    %82 = vst.msk [vmem:[#allocation0] sm:$0x1] %vm81, %v80
    %s83 = scalar_lea.vmem %s0, 2
    %v84 = vld [vmem:[%s83] sm:$0x1]
    %85 = vrot.lane.b32.xlu0 %v84, 16
    %v86 = vpop.permute.xlu0 %85
    %vm87 = vcmask 195712
    %88 = vst.msk [vmem:[#allocation0] sm:$0x1] %vm87, %v86
    %s89 = scalar_lea.vmem %s0, 1
    %v90 = vld [vmem:[%s89] sm:$0x1]
    %91 = vrot.lane.b32.xlu0 %v90, 8
    %v92 = vpop.permute.xlu0 %91
    %vm93 = vcmask 130112
    %94 = vst.msk [vmem:[#allocation0] sm:$0x1] %vm93, %v92
    %s96 = sshll.u32 1, 1
    %s97 = ssub.s32 %s96, 1
    %v99 = vld [vmem:[#allocation0] sm:%s97]
    %s100 = sshll.u32 1, 1
    %s101 = ssub.s32 %s100, 1
    %102 = vst [vmem:[%s1] sm:%s101] %v99

// kernel: tile.69
$region0: #{tile.69}
  %s0 = inlined_call_operand.vmem [shape: f32[16,8], index: 0, kind: input, shape index: {}]
  %s1 = inlined_call_operand.vmem [shape: f32[1,128], index: 1, kind: output, shape index: {}]
  $region1: #{tile.69} parent=0
    #allocation0 [shape = 'u8[4096]{0}', space=vmem, size = 0x1000, scoped, tag = 'scoped mem for output reshape']
    %v2 = vld [vmem:[%s0] sm:$0x1]
    %vm3 = vcmask 64512
    %4 = vst.msk [vmem:[#allocation0] sm:$0x1] %vm3, %v2
    %s5 = scalar_lea.vmem %s0, 15
    %v6 = vld [vmem:[%s5] sm:$0x1]
    %7 = vrot.lane.b32.xlu0 %v6, 120
    %v8 = vpop.permute.xlu0 %7
    %vm9 = vcmask 1048512
    %10 = vst.msk [vmem:[#allocation0] sm:$0x1] %vm9, %v8
    %s11 = scalar_lea.vmem %s0, 14
    %v12 = vld [vmem:[%s11] sm:$0x1]
    %13 = vrot.lane.b32.xlu0 %v12, 112
    %v14 = vpop.permute.xlu0 %13
    %vm15 = vcmask 982912
    %16 = vst.msk [vmem:[#allocation0] sm:$0x1] %vm15, %v14
    %s17 = scalar_lea.vmem %s0, 13
    %v18 = vld [vmem:[%s17] sm:$0x1]
    %19 = vrot.lane.b32.xlu0 %v18, 104
    %v20 = vpop.permute.xlu0 %19
    %vm21 = vcmask 917312
    %22 = vst.msk [vmem:[#allocation0] sm:$0x1] %vm21, %v20
    %s23 = scalar_lea.vmem %s0, 12
    %v24 = vld [vmem:[%s23] sm:$0x1]
    %25 = vrot.lane.b32.xlu0 %v24, 96
    %v26 = vpop.permute.xlu0 %25
    %vm27 = vcmask 851712
    %28 = vst.msk [vmem:[#allocation0] sm:$0x1] %vm27, %v26
    %s29 = scalar_lea.vmem %s0, 11
    %v30 = vld [vmem:[%s29] sm:$0x1]
    %31 = vrot.lane.b32.xlu0 %v30, 88
    %v32 = vpop.permute.xlu0 %31
    %vm33 = vcmask 786112
    %34 = vst.msk [vmem:[#allocation0] sm:$0x1] %vm33, %v32
    %s35 = scalar_lea.vmem %s0, 10
    %v36 = vld [vmem:[%s35] sm:$0x1]
    %37 = vrot.lane.b32.xlu0 %v36, 80
    %v38 = vpop.permute.xlu0 %37
    %vm39 = vcmask 720512
    %40 = vst.msk [vmem:[#allocation0] sm:$0x1] %vm39, %v38
    %s41 = scalar_lea.vmem %s0, 9
    %v42 = vld [vmem:[%s41] sm:$0x1]
    %43 = vrot.lane.b32.xlu0 %v42, 72
    %v44 = vpop.permute.xlu0 %43
    %vm45 = vcmask 654912
    %46 = vst.msk [vmem:[#allocation0] sm:$0x1] %vm45, %v44
    %s47 = scalar_lea.vmem %s0, 8
    %v48 = vld [vmem:[%s47] sm:$0x1]
    %49 = vrot.lane.b32.xlu0 %v48, 64
    %v50 = vpop.permute.xlu0 %49
    %vm51 = vcmask 589312
    %52 = vst.msk [vmem:[#allocation0] sm:$0x1] %vm51, %v50
    %s53 = scalar_lea.vmem %s0, 7
    %v54 = vld [vmem:[%s53] sm:$0x1]
    %55 = vrot.lane.b32.xlu0 %v54, 56
    %v56 = vpop.permute.xlu0 %55
    %vm57 = vcmask 523712
    %58 = vst.msk [vmem:[#allocation0] sm:$0x1] %vm57, %v56
    %s59 = scalar_lea.vmem %s0, 6
    %v60 = vld [vmem:[%s59] sm:$0x1]
    %61 = vrot.lane.b32.xlu0 %v60, 48
    %v62 = vpop.permute.xlu0 %61
    %vm63 = vcmask 458112
    %64 = vst.msk [vmem:[#allocation0] sm:$0x1] %vm63, %v62
    %s65 = scalar_lea.vmem %s0, 5
    %v66 = vld [vmem:[%s65] sm:$0x1]
    %67 = vrot.lane.b32.xlu0 %v66, 40
    %v68 = vpop.permute.xlu0 %67
    %vm69 = vcmask 392512
    %70 = vst.msk [vmem:[#allocation0] sm:$0x1] %vm69, %v68
    %s71 = scalar_lea.vmem %s0, 4
    %v72 = vld [vmem:[%s71] sm:$0x1]
    %73 = vrot.lane.b32.xlu0 %v72, 32
    %v74 = vpop.permute.xlu0 %73
    %vm75 = vcmask 326912
    %76 = vst.msk [vmem:[#allocation0] sm:$0x1] %vm75, %v74
    %s77 = scalar_lea.vmem %s0, 3
    %v78 = vld [vmem:[%s77] sm:$0x1]
    %79 = vrot.lane.b32.xlu0 %v78, 24
    %v80 = vpop.permute.xlu0 %79
    %vm81 = vcmask 261312
    %82 = vst.msk [vmem:[#allocation0] sm:$0x1] %vm81, %v80
    %s83 = scalar_lea.vmem %s0, 2
    %v84 = vld [vmem:[%s83] sm:$0x1]
    %85 = vrot.lane.b32.xlu0 %v84, 16
    %v86 = vpop.permute.xlu0 %85
    %vm87 = vcmask 195712
    %88 = vst.msk [vmem:[#allocation0] sm:$0x1] %vm87, %v86
    %s89 = scalar_lea.vmem %s0, 1
    %v90 = vld [vmem:[%s89] sm:$0x1]
    %91 = vrot.lane.b32.xlu0 %v90, 8
    %v92 = vpop.permute.xlu0 %91
    %vm93 = vcmask 130112
    %94 = vst.msk [vmem:[#allocation0] sm:$0x1] %vm93, %v92
    %s96 = sshll.u32 1, 1
    %s97 = ssub.s32 %s96, 1
    %v99 = vld [vmem:[#allocation0] sm:%s97]
    %s100 = sshll.u32 1, 1
    %s101 = ssub.s32 %s100, 1
    %102 = vst [vmem:[%s1] sm:%s101] %v99

// kernel: cell_forward.1
$region0: #{cell_forward.1}
  #allocation0 [shape = 'u32[]', space=smem, size = 0x4, offset = 0x4, fixed_abs, tag = 'smem constant byte address 0x4 - core index']
  #allocation1 [shape = 'u32[144,128]{1,0:T(1,128)}', space=vmem, size = 0x12000, scoped, tag = 'internal scratch']
  #allocation2 [shape = 'f32[6,32,128]{2,1,0:T(8,128)}', space=vmem, size = 0x18000, scoped, tag = 'scratch operand']
  %s0 = inlined_call_operand.vmem [shape: f32[32,128], index: 0, kind: input, shape index: {}]
  %s1 = inlined_call_operand.vmem [shape: f32[32,128], index: 1, kind: input, shape index: {}]
  %s2 = inlined_call_operand.vmem [shape: bf16[128,128], index: 2, kind: input, shape index: {}]
  %s3 = inlined_call_operand.vmem [shape: f32[1,128], index: 3, kind: input, shape index: {}]
  %s4 = inlined_call_operand.vmem [shape: bf16[128,128], index: 4, kind: input, shape index: {}]
  %s5 = inlined_call_operand.vmem [shape: f32[1,128], index: 5, kind: input, shape index: {}]
  %s6 = inlined_call_operand.vmem [shape: bf16[11,384,128], index: 6, kind: input, shape index: {}]
  %s7 = inlined_call_operand.vmem [shape: f32[11,1,128], index: 7, kind: input, shape index: {}]
  %s8 = inlined_call_operand.vmem [shape: f32[32,512], index: 8, kind: output, shape index: {}]
  %s9 = sld [smem:[#allocation0]]
  $region42: #{cell_forward.1} parent=0
    _
  %s11 = ssub.s32 1, %s9
  %s12 = scalar_select 0, %s11, %s9
  // Predicated region
  $region2: #{cell_forward.1} parent=0 // pred_check
    _
  $region3: #{cell_forward.1} parent=0 // pred_check_branch
    %14 = sbr.rel (0) target = $region5
  $region4: #{cell_forward.1} parent=0 // pred_region
    _
  $region5: #{cell_forward.1} parent=0 // pred_fallthru
    _
  // Predicated region
  $region6: #{cell_forward.1} parent=0 // pred_check
    _
  $region7: #{cell_forward.1} parent=0 // pred_check_branch
    %16 = sbr.rel (0) target = $region9
  $region8: #{cell_forward.1} parent=0 // pred_region
    _
  $region9: #{cell_forward.1} parent=0 // pred_fallthru
    _
  // Predicated region
  $region10: #{cell_forward.1} parent=0 // pred_check
    _
  $region11: #{cell_forward.1} parent=0 // pred_check_branch
    %18 = sbr.rel (0) target = $region13
  $region12: #{cell_forward.1} parent=0 // pred_region
    _
  $region13: #{cell_forward.1} parent=0 // pred_fallthru
    _
  // Predicated region
  $region14: #{cell_forward.1} parent=0 // pred_check
    _
  $region15: #{cell_forward.1} parent=0 // pred_check_branch
    %20 = sbr.rel (0) target = $region17
  $region16: #{cell_forward.1} parent=0 // pred_region
    _
  $region17: #{cell_forward.1} parent=0 // pred_fallthru
    _
  // Predicated region
  $region18: #{cell_forward.1} parent=0 // pred_check
    _
  $region19: #{cell_forward.1} parent=0 // pred_check_branch
    %22 = sbr.rel (0) target = $region21
  $region20: #{cell_forward.1} parent=0 // pred_region
    _
  $region21: #{cell_forward.1} parent=0 // pred_fallthru
    _
  // Predicated region
  $region22: #{cell_forward.1} parent=0 // pred_check
    _
  $region23: #{cell_forward.1} parent=0 // pred_check_branch
    %24 = sbr.rel (0) target = $region25
  $region24: #{cell_forward.1} parent=0 // pred_region
    _
  $region25: #{cell_forward.1} parent=0 // pred_fallthru
    _
  // Predicated region
  $region26: #{cell_forward.1} parent=0 // pred_check
    _
  $region27: #{cell_forward.1} parent=0 // pred_check_branch
    %26 = sbr.rel (0) target = $region29
  $region28: #{cell_forward.1} parent=0 // pred_region
    _
  $region29: #{cell_forward.1} parent=0 // pred_fallthru
    _
  // Predicated region
  $region30: #{cell_forward.1} parent=0 // pred_check
    _
  $region31: #{cell_forward.1} parent=0 // pred_check_branch
    %28 = sbr.rel (0) target = $region33
  $region32: #{cell_forward.1} parent=0 // pred_region
    _
  $region33: #{cell_forward.1} parent=0 // pred_fallthru
    _
  %v30 = vlaneseq
  %v31 = vshrl.u32 %v30, 7
  %v32 = vadd.s32 %v31, 8
  %v33 = vadd.s32 %v31, 16
  %v34 = vadd.s32 %v31, 24
  %vm35 = vcmp.lt.s32.totalorder %v31, 0
  %v36 = vsub.s32 0, %v31
  %v37 = vsel %vm35, %v36, %v31
  %v38 = vshrl.u32 %v37, 4
  %v39 = vand.u32 %v37, 15
  %v40 = vsub.s32 0, %v39
  %v41 = vsel %vm35, %v40, %v39
  %vm42 = vcmp.lt.s32.totalorder %v32, 0
  %v43 = vsub.s32 0, %v32
  %v44 = vsel %vm42, %v43, %v32
  %v45 = vshrl.u32 %v44, 4
  %v46 = vand.u32 %v44, 15
  %v47 = vsub.s32 0, %v46
  %v48 = vsel %vm42, %v47, %v46
  %vm49 = vcmp.lt.s32.totalorder %v33, 0
  %v50 = vsub.s32 0, %v33
  %v51 = vsel %vm49, %v50, %v33
  %v52 = vshrl.u32 %v51, 4
  %v53 = vand.u32 %v51, 15
  %v54 = vsub.s32 0, %v53
  %v55 = vsel %vm49, %v54, %v53
  %vm56 = vcmp.lt.s32.totalorder %v34, 0
  %v57 = vsub.s32 0, %v34
  %v58 = vsel %vm56, %v57, %v34
  %v59 = vshrl.u32 %v58, 4
  %v60 = vand.u32 %v58, 15
  %v61 = vsub.s32 0, %v60
  %v62 = vsel %vm56, %v61, %v60
  %vm63 = vcmp.ne.s32.totalorder %v41, 0
  %vm64 = vcmp.ne.s32.totalorder %v48, 0
  %vm65 = vcmp.ne.s32.totalorder %v55, 0
  %vm66 = vcmp.ne.s32.totalorder %v62, 0
  %vm67 = vcmp.lt.s32.totalorder %v41, 0
  %vm68 = vcmp.lt.s32.totalorder %v48, 0
  %vm69 = vcmp.lt.s32.totalorder %v55, 0
  %vm70 = vcmp.lt.s32.totalorder %v62, 0
  %vm71 = vmand %vm67, %vm63
  %vm72 = vmand %vm68, %vm64
  %vm73 = vmand %vm69, %vm65
  %vm74 = vmand %vm70, %vm66
  %v75 = vadd.s32 %v41, 16
  %v76 = vadd.s32 %v48, 16
  %v77 = vadd.s32 %v55, 16
  %v78 = vadd.s32 %v62, 16
  %v79 = vsel %vm71, %v75, %v41
  %v80 = vsel %vm72, %v76, %v48
  %v81 = vsel %vm73, %v77, %v55
  %v82 = vsel %vm74, %v78, %v62
  %v83 = vld [vmem:[%s0] sm:$0xff]
  %v84 = vld [vmem:[%s0 + $0x8] sm:$0xff]
  %v85 = vld [vmem:[%s0 + $0x10] sm:$0xff]
  %v86 = vld [vmem:[%s0 + $0x18] sm:$0xff]
  %v87 = vmax.f32 %v83, 0.0
  %v88 = vmax.f32 %v84, 0.0
  %v89 = vmax.f32 %v85, 0.0
  %v90 = vmax.f32 %v86, 0.0
  %v91 = vpack.c.bf16 %v88, %v87
  %v92 = vpack.c.bf16 %v90, %v89
  %v93 = vld [vmem:[%s2] sm:$0xf]
  %v94 = vld [vmem:[%s2 + $0x4] sm:$0xf]
  %v95 = vld [vmem:[%s2 + $0x8] sm:$0xf]
  %v96 = vld [vmem:[%s2 + $0xc] sm:$0xf]
  %v97 = vld [vmem:[%s2 + $0x10] sm:$0xf]
  %v98 = vld [vmem:[%s2 + $0x14] sm:$0xf]
  %v99 = vld [vmem:[%s2 + $0x18] sm:$0xf]
  %v100 = vld [vmem:[%s2 + $0x1c] sm:$0xf]
  %v101 = vld [vmem:[%s2 + $0x20] sm:$0xf]
  %v102 = vld [vmem:[%s2 + $0x24] sm:$0xf]
  %v103 = vld [vmem:[%s2 + $0x28] sm:$0xf]
  %v104 = vld [vmem:[%s2 + $0x2c] sm:$0xf]
  %v105 = vld [vmem:[%s2 + $0x30] sm:$0xf]
  %v106 = vld [vmem:[%s2 + $0x34] sm:$0xf]
  %v107 = vld [vmem:[%s2 + $0x38] sm:$0xf]
  %v108 = vld [vmem:[%s2 + $0x3c] sm:$0xf]
  %v109 = vld [vmem:[%s3] sm:$0x1]
  %v111 = vlaneseq
  %v112 = vshrl.u32 %v111, 7
  %v113 = vsub.s32 0, %v112
  %v114 = vrot.slane %v109, %v113
  %v132 = vunpack.c.l.b16 %v93
  %v133 = vunpack.c.l.b16 %v94
  %v134 = vunpack.c.l.b16 %v95
  %v135 = vunpack.c.l.b16 %v96
  %v136 = vunpack.c.l.b16 %v97
  %v137 = vunpack.c.l.b16 %v98
  %v138 = vunpack.c.l.b16 %v99
  %v139 = vunpack.c.l.b16 %v100
  %v140 = vunpack.c.l.b16 %v101
  %v141 = vunpack.c.l.b16 %v102
  %v142 = vunpack.c.l.b16 %v103
  %v143 = vunpack.c.l.b16 %v104
  %v144 = vunpack.c.l.b16 %v105
  %v145 = vunpack.c.l.b16 %v106
  %v146 = vunpack.c.l.b16 %v107
  %v147 = vunpack.c.l.b16 %v108
  %v148 = vpack.c.b16 %v133, %v132
  %v149 = vpack.c.b16 %v135, %v134
  %v150 = vpack.c.b16 %v137, %v136
  %v151 = vpack.c.b16 %v139, %v138
  %v152 = vpack.c.b16 %v141, %v140
  %v153 = vpack.c.b16 %v143, %v142
  %v154 = vpack.c.b16 %v145, %v144
  %v155 = vpack.c.b16 %v147, %v146
  %164 = vmatprep.subr.bf16.mxu0 0
  %165 = vmatpush1.bf16.msra.mxu0 %v155
  %166 = vmatprep.subr.bf16.mxu0 0
  %167 = vmatpush1.bf16.msra.mxu0 %v154
  %168 = vmatprep.subr.bf16.mxu0 0
  %169 = vmatpush1.bf16.msra.mxu0 %v153
  %170 = vmatprep.subr.bf16.mxu0 0
  %171 = vmatpush1.bf16.msra.mxu0 %v152
  %172 = vmatprep.subr.bf16.mxu0 0
  %173 = vmatpush1.bf16.msra.mxu0 %v151
  %174 = vmatprep.subr.bf16.mxu0 0
  %175 = vmatpush1.bf16.msra.mxu0 %v150
  %176 = vmatprep.subr.bf16.mxu0 0
  %177 = vmatpush1.bf16.msra.mxu0 %v149
  %178 = vmatprep.subr.bf16.mxu0 0
  %179 = vmatpush1.bf16.msra.mxu0 %v148
  %180 = vmatprep.subr.bf16.mxu0 0
  %181 = vmatpush2.bf16.msra.mxu0 0
  %182 = vmatprep.subr.bf16.mxu0 0
  %183 = vmatpush2.bf16.msra.mxu0 0
  %184 = vmatprep.subr.bf16.mxu0 0
  %185 = vmatpush2.bf16.msra.mxu0 0
  %186 = vmatprep.subr.bf16.mxu0 0
  %187 = vmatpush2.bf16.msra.mxu0 0
  %188 = vmatprep.subr.bf16.mxu0 0
  %189 = vmatpush2.bf16.msra.mxu0 0
  %190 = vmatprep.subr.bf16.mxu0 0
  %191 = vmatpush2.bf16.msra.mxu0 0
  %192 = vmatprep.subr.bf16.mxu0 0
  %193 = vmatpush2.bf16.msra.mxu0 0
  %194 = vmatprep.subr.bf16.mxu0 0
  %195 = vmatpush2.bf16.msra.mxu0 0
  %196 = vmatprep.mubr.bf16.mxu0 0
  %197 = vmatmul.mubr.bf16.gmra.mxu0 %v91
  %v198 = vpop.f32.mrf.mxu0
  %v199 = vadd.f32 %v114, %v198
  %v200 = vpop.f32.mrf.mxu0
  %v201 = vpop.f32.mrf.mxu0
  %v202 = vadd.f32 %v114, %v201
  %v203 = vpop.f32.mrf.mxu0
  %204 = vmatprep.mubr.bf16.mxu0 0
  %205 = vmatmul.mubr.bf16.gmra.mxu0 %v92
  %v206 = vpop.f32.mrf.mxu0
  %v207 = vadd.f32 %v114, %v206
  %v208 = vpop.f32.mrf.mxu0
  %v209 = vpop.f32.mrf.mxu0
  %v210 = vadd.f32 %v114, %v209
  %v211 = vpop.f32.mrf.mxu0
  %212 = vdwg.mxu0
  %213 = vst [vmem:[#allocation2] sm:$0xff] %v199
  %214 = vst [vmem:[#allocation2 + $0x8] sm:$0xff] %v202
  %215 = vst [vmem:[#allocation2 + $0x10] sm:$0xff] %v207
  %216 = vst [vmem:[#allocation2 + $0x18] sm:$0xff] %v210
  %v217 = vld [vmem:[%s1] sm:$0xff]
  %v218 = vld [vmem:[%s1 + $0x8] sm:$0xff]
  %v219 = vld [vmem:[%s1 + $0x10] sm:$0xff]
  %v220 = vld [vmem:[%s1 + $0x18] sm:$0xff]
  %v221 = vmax.f32 %v217, 0.0
  %v222 = vmax.f32 %v218, 0.0
  %v223 = vmax.f32 %v219, 0.0
  %v224 = vmax.f32 %v220, 0.0
  %v225 = vpack.c.bf16 %v222, %v221
  %v226 = vpack.c.bf16 %v224, %v223
  %v227 = vld [vmem:[%s4] sm:$0xf]
  %v228 = vld [vmem:[%s4 + $0x4] sm:$0xf]
  %v229 = vld [vmem:[%s4 + $0x8] sm:$0xf]
  %v230 = vld [vmem:[%s4 + $0xc] sm:$0xf]
  %v231 = vld [vmem:[%s4 + $0x10] sm:$0xf]
  %v232 = vld [vmem:[%s4 + $0x14] sm:$0xf]
  %v233 = vld [vmem:[%s4 + $0x18] sm:$0xf]
  %v234 = vld [vmem:[%s4 + $0x1c] sm:$0xf]
  %v235 = vld [vmem:[%s4 + $0x20] sm:$0xf]
  %v236 = vld [vmem:[%s4 + $0x24] sm:$0xf]
  %v237 = vld [vmem:[%s4 + $0x28] sm:$0xf]
  %v238 = vld [vmem:[%s4 + $0x2c] sm:$0xf]
  %v239 = vld [vmem:[%s4 + $0x30] sm:$0xf]
  %v240 = vld [vmem:[%s4 + $0x34] sm:$0xf]
  %v241 = vld [vmem:[%s4 + $0x38] sm:$0xf]
  %v242 = vld [vmem:[%s4 + $0x3c] sm:$0xf]
  %v243 = vld [vmem:[%s5] sm:$0x1]
  %v245 = vlaneseq
  %v246 = vshrl.u32 %v245, 7
  %v247 = vsub.s32 0, %v246
  %v248 = vrot.slane %v243, %v247
  %v266 = vunpack.c.l.b16 %v227
  %v267 = vunpack.c.l.b16 %v228
  %v268 = vunpack.c.l.b16 %v229
  %v269 = vunpack.c.l.b16 %v230
  %v270 = vunpack.c.l.b16 %v231
  %v271 = vunpack.c.l.b16 %v232
  %v272 = vunpack.c.l.b16 %v233
  %v273 = vunpack.c.l.b16 %v234
  %v274 = vunpack.c.l.b16 %v235
  %v275 = vunpack.c.l.b16 %v236
  %v276 = vunpack.c.l.b16 %v237
  %v277 = vunpack.c.l.b16 %v238
  %v278 = vunpack.c.l.b16 %v239
  %v279 = vunpack.c.l.b16 %v240
  %v280 = vunpack.c.l.b16 %v241
  %v281 = vunpack.c.l.b16 %v242
  %v282 = vpack.c.b16 %v267, %v266
  %v283 = vpack.c.b16 %v269, %v268
  %v284 = vpack.c.b16 %v271, %v270
  %v285 = vpack.c.b16 %v273, %v272
  %v286 = vpack.c.b16 %v275, %v274
  %v287 = vpack.c.b16 %v277, %v276
  %v288 = vpack.c.b16 %v279, %v278
  %v289 = vpack.c.b16 %v281, %v280
  %298 = vmatprep.subr.bf16.mxu0 0
  %299 = vmatpush1.bf16.msra.mxu0 %v289
  %300 = vmatprep.subr.bf16.mxu0 0
  %301 = vmatpush1.bf16.msra.mxu0 %v288
  %302 = vmatprep.subr.bf16.mxu0 0
  %303 = vmatpush1.bf16.msra.mxu0 %v287
  %304 = vmatprep.subr.bf16.mxu0 0
  %305 = vmatpush1.bf16.msra.mxu0 %v286
  %306 = vmatprep.subr.bf16.mxu0 0
  %307 = vmatpush1.bf16.msra.mxu0 %v285
  %308 = vmatprep.subr.bf16.mxu0 0
  %309 = vmatpush1.bf16.msra.mxu0 %v284
  %310 = vmatprep.subr.bf16.mxu0 0
  %311 = vmatpush1.bf16.msra.mxu0 %v283
  %312 = vmatprep.subr.bf16.mxu0 0
  %313 = vmatpush1.bf16.msra.mxu0 %v282
  %314 = vmatprep.subr.bf16.mxu0 0
  %315 = vmatpush2.bf16.msra.mxu0 0
  %316 = vmatprep.subr.bf16.mxu0 0
  %317 = vmatpush2.bf16.msra.mxu0 0
  %318 = vmatprep.subr.bf16.mxu0 0
  %319 = vmatpush2.bf16.msra.mxu0 0
  %320 = vmatprep.subr.bf16.mxu0 0
  %321 = vmatpush2.bf16.msra.mxu0 0
  %322 = vmatprep.subr.bf16.mxu0 0
  %323 = vmatpush2.bf16.msra.mxu0 0
  %324 = vmatprep.subr.bf16.mxu0 0
  %325 = vmatpush2.bf16.msra.mxu0 0
  %326 = vmatprep.subr.bf16.mxu0 0
  %327 = vmatpush2.bf16.msra.mxu0 0
  %328 = vmatprep.subr.bf16.mxu0 0
  %329 = vmatpush2.bf16.msra.mxu0 0
  %330 = vmatprep.mubr.bf16.mxu0 0
  %331 = vmatmul.mubr.bf16.gmra.mxu0 %v225
  %v332 = vpop.f32.mrf.mxu0
  %v333 = vadd.f32 %v248, %v332
  %v334 = vpop.f32.mrf.mxu0
  %v335 = vpop.f32.mrf.mxu0
  %v336 = vadd.f32 %v248, %v335
  %v337 = vpop.f32.mrf.mxu0
  %338 = vmatprep.mubr.bf16.mxu0 0
  %339 = vmatmul.mubr.bf16.gmra.mxu0 %v226
  %v340 = vpop.f32.mrf.mxu0
  %v341 = vadd.f32 %v248, %v340
  %v342 = vpop.f32.mrf.mxu0
  %v343 = vpop.f32.mrf.mxu0
  %v344 = vadd.f32 %v248, %v343
  %v345 = vpop.f32.mrf.mxu0
  %346 = vdwg.mxu0
  %s347 = scalar_lea.vmem [#allocation2], 32
  %348 = vst [vmem:[%s347] sm:$0xff] %v333
  %349 = vst [vmem:[%s347 + $0x8] sm:$0xff] %v336
  %350 = vst [vmem:[%s347 + $0x10] sm:$0xff] %v341
  %351 = vst [vmem:[%s347 + $0x18] sm:$0xff] %v344
  %v352 = vld [vmem:[#allocation2] sm:$0xff]
  %v353 = vld [vmem:[#allocation2 + $0x8] sm:$0xff]
  %v354 = vld [vmem:[#allocation2 + $0x10] sm:$0xff]
  %v355 = vld [vmem:[#allocation2 + $0x18] sm:$0xff]
  %v356 = vmax.f32 %v352, 0.0
  %v357 = vmax.f32 %v353, 0.0
  %v358 = vmax.f32 %v354, 0.0
  %v359 = vmax.f32 %v355, 0.0
  %vm360 = vcmp.ge.s32.totalorder %v79, 1
  %vm361 = vcmp.ge.s32.totalorder %v80, 1
  %vm362 = vcmp.ge.s32.totalorder %v81, 1
  %vm363 = vcmp.ge.s32.totalorder %v82, 1
  %v365 = vrot.slane %v359, 7
  %vm370 = vcmask 1040384
  %v371 = vrot.slane %v356, 7
  %v372 = vrot.slane %v357, 7
  %v373 = vsel %vm370, %v371, %v372
  %v374 = vrot.slane %v358, 7
  %v375 = vsel %vm370, %v372, %v374
  %v376 = vsel %vm370, %v374, %v365
  %v381 = vsel %vm370, %v365, %v371
  %v382 = vsel %vm360, %v381, 0.0
  %v383 = vsel %vm361, %v373, 0.0
  %v384 = vsel %vm362, %v375, 0.0
  %v385 = vsel %vm363, %v376, 0.0
  %vm386 = vcmp.lt.s32.totalorder %v79, 15
  %vm387 = vcmp.lt.s32.totalorder %v80, 15
  %vm388 = vcmp.lt.s32.totalorder %v81, 15
  %vm389 = vcmp.lt.s32.totalorder %v82, 15
  %vm390 = vcmask 1046528
  %v391 = vrot.slane %v356, 1
  %v392 = vrot.slane %v357, 1
  %v393 = vsel %vm390, %v391, %v392
  %v394 = vrot.slane %v358, 1
  %v395 = vsel %vm390, %v392, %v394
  %v396 = vrot.slane %v359, 1
  %v397 = vsel %vm390, %v394, %v396
  %v403 = vsel %vm390, %v396, %v391
  %v404 = vsel %vm386, %v393, 0.0
  %v405 = vsel %vm387, %v395, 0.0
  %v406 = vsel %vm388, %v397, 0.0
  %v407 = vsel %vm389, %v403, 0.0
  %v408 = vpack.c.bf16 %v383, %v382
  %v409 = vpack.c.bf16 %v357, %v356
  %v410 = vpack.c.bf16 %v405, %v404
  %v411 = vpack.c.bf16 %v385, %v384
  %v412 = vpack.c.bf16 %v359, %v358
  %v413 = vpack.c.bf16 %v407, %v406
  %v414 = vld [vmem:[%s6] sm:$0xf]
  %v415 = vld [vmem:[%s6 + $0x4] sm:$0xf]
  %v416 = vld [vmem:[%s6 + $0x8] sm:$0xf]
  %v417 = vld [vmem:[%s6 + $0xc] sm:$0xf]
  %v418 = vld [vmem:[%s6 + $0x10] sm:$0xf]
  %v419 = vld [vmem:[%s6 + $0x14] sm:$0xf]
  %v420 = vld [vmem:[%s6 + $0x18] sm:$0xf]
  %v421 = vld [vmem:[%s6 + $0x1c] sm:$0xf]
  %v422 = vld [vmem:[%s6 + $0x20] sm:$0xf]
  %v423 = vld [vmem:[%s6 + $0x24] sm:$0xf]
  %v424 = vld [vmem:[%s6 + $0x28] sm:$0xf]
  %v425 = vld [vmem:[%s6 + $0x2c] sm:$0xf]
  %v426 = vld [vmem:[%s6 + $0x30] sm:$0xf]
  %v427 = vld [vmem:[%s6 + $0x34] sm:$0xf]
  %v428 = vld [vmem:[%s6 + $0x38] sm:$0xf]
  %v429 = vld [vmem:[%s6 + $0x3c] sm:$0xf]
  %v430 = vld [vmem:[%s6 + $0x40] sm:$0xf]
  %v431 = vld [vmem:[%s6 + $0x44] sm:$0xf]
  %v432 = vld [vmem:[%s6 + $0x48] sm:$0xf]
  %v433 = vld [vmem:[%s6 + $0x4c] sm:$0xf]
  %v434 = vld [vmem:[%s6 + $0x50] sm:$0xf]
  %v435 = vld [vmem:[%s6 + $0x54] sm:$0xf]
  %v436 = vld [vmem:[%s6 + $0x58] sm:$0xf]
  %v437 = vld [vmem:[%s6 + $0x5c] sm:$0xf]
  %v438 = vld [vmem:[%s6 + $0x60] sm:$0xf]
  %v439 = vld [vmem:[%s6 + $0x64] sm:$0xf]
  %v440 = vld [vmem:[%s6 + $0x68] sm:$0xf]
  %v441 = vld [vmem:[%s6 + $0x6c] sm:$0xf]
  %v442 = vld [vmem:[%s6 + $0x70] sm:$0xf]
  %v443 = vld [vmem:[%s6 + $0x74] sm:$0xf]
  %v444 = vld [vmem:[%s6 + $0x78] sm:$0xf]
  %v445 = vld [vmem:[%s6 + $0x7c] sm:$0xf]
  %v446 = vld [vmem:[%s6 + $0x80] sm:$0xf]
  %v447 = vld [vmem:[%s6 + $0x84] sm:$0xf]
  %v448 = vld [vmem:[%s6 + $0x88] sm:$0xf]
  %v449 = vld [vmem:[%s6 + $0x8c] sm:$0xf]
  %v450 = vld [vmem:[%s6 + $0x90] sm:$0xf]
  %v451 = vld [vmem:[%s6 + $0x94] sm:$0xf]
  %v452 = vld [vmem:[%s6 + $0x98] sm:$0xf]
  %v453 = vld [vmem:[%s6 + $0x9c] sm:$0xf]
  %v454 = vld [vmem:[%s6 + $0xa0] sm:$0xf]
  %v455 = vld [vmem:[%s6 + $0xa4] sm:$0xf]
  %v456 = vld [vmem:[%s6 + $0xa8] sm:$0xf]
  %v457 = vld [vmem:[%s6 + $0xac] sm:$0xf]
  %v458 = vld [vmem:[%s6 + $0xb0] sm:$0xf]
  %v459 = vld [vmem:[%s6 + $0xb4] sm:$0xf]
  %v460 = vld [vmem:[%s6 + $0xb8] sm:$0xf]
  %v461 = vld [vmem:[%s6 + $0xbc] sm:$0xf]
  %v462 = vld [vmem:[%s7] sm:$0x1]
  %v464 = vlaneseq
  %v465 = vshrl.u32 %v464, 7
  %v466 = vsub.s32 0, %v465
  %v467 = vrot.slane %v462, %v466
  %v517 = vunpack.c.l.b16 %v414
  %v518 = vunpack.c.l.b16 %v415
  %v519 = vunpack.c.l.b16 %v416
  %v520 = vunpack.c.l.b16 %v417
  %v521 = vunpack.c.l.b16 %v418
  %v522 = vunpack.c.l.b16 %v419
  %v523 = vunpack.c.l.b16 %v420
  %v524 = vunpack.c.l.b16 %v421
  %v525 = vunpack.c.l.b16 %v422
  %v526 = vunpack.c.l.b16 %v423
  %v527 = vunpack.c.l.b16 %v424
  %v528 = vunpack.c.l.b16 %v425
  %v529 = vunpack.c.l.b16 %v426
  %v530 = vunpack.c.l.b16 %v427
  %v531 = vunpack.c.l.b16 %v428
  %v532 = vunpack.c.l.b16 %v429
  %v533 = vunpack.c.l.b16 %v430
  %v534 = vunpack.c.l.b16 %v431
  %v535 = vunpack.c.l.b16 %v432
  %v536 = vunpack.c.l.b16 %v433
  %v537 = vunpack.c.l.b16 %v434
  %v538 = vunpack.c.l.b16 %v435
  %v539 = vunpack.c.l.b16 %v436
  %v540 = vunpack.c.l.b16 %v437
  %v541 = vunpack.c.l.b16 %v438
  %v542 = vunpack.c.l.b16 %v439
  %v543 = vunpack.c.l.b16 %v440
  %v544 = vunpack.c.l.b16 %v441
  %v545 = vunpack.c.l.b16 %v442
  %v546 = vunpack.c.l.b16 %v443
  %v547 = vunpack.c.l.b16 %v444
  %v548 = vunpack.c.l.b16 %v445
  %v549 = vunpack.c.l.b16 %v446
  %v550 = vunpack.c.l.b16 %v447
  %v551 = vunpack.c.l.b16 %v448
  %v552 = vunpack.c.l.b16 %v449
  %v553 = vunpack.c.l.b16 %v450
  %v554 = vunpack.c.l.b16 %v451
  %v555 = vunpack.c.l.b16 %v452
  %v556 = vunpack.c.l.b16 %v453
  %v557 = vunpack.c.l.b16 %v454
  %v558 = vunpack.c.l.b16 %v455
  %v559 = vunpack.c.l.b16 %v456
  %v560 = vunpack.c.l.b16 %v457
  %v561 = vunpack.c.l.b16 %v458
  %v562 = vunpack.c.l.b16 %v459
  %v563 = vunpack.c.l.b16 %v460
  %v564 = vunpack.c.l.b16 %v461
  %v565 = vpack.c.b16 %v518, %v517
  %v566 = vpack.c.b16 %v520, %v519
  %v567 = vpack.c.b16 %v522, %v521
  %v568 = vpack.c.b16 %v524, %v523
  %v569 = vpack.c.b16 %v526, %v525
  %v570 = vpack.c.b16 %v528, %v527
  %v571 = vpack.c.b16 %v530, %v529
  %v572 = vpack.c.b16 %v532, %v531
  %v573 = vpack.c.b16 %v534, %v533
  %v574 = vpack.c.b16 %v536, %v535
  %v575 = vpack.c.b16 %v538, %v537
  %v576 = vpack.c.b16 %v540, %v539
  %v577 = vpack.c.b16 %v542, %v541
  %v578 = vpack.c.b16 %v544, %v543
  %v579 = vpack.c.b16 %v546, %v545
  %v580 = vpack.c.b16 %v548, %v547
  %v581 = vpack.c.b16 %v550, %v549
  %v582 = vpack.c.b16 %v552, %v551
  %v583 = vpack.c.b16 %v554, %v553
  %v584 = vpack.c.b16 %v556, %v555
  %v585 = vpack.c.b16 %v558, %v557
  %v586 = vpack.c.b16 %v560, %v559
  %v587 = vpack.c.b16 %v562, %v561
  %v588 = vpack.c.b16 %v564, %v563
  %613 = vmatprep.subr.bf16.mxu0 0
  %614 = vmatpush1.bf16.msra.mxu0 %v572
  %615 = vmatprep.subr.bf16.mxu0 0
  %616 = vmatpush1.bf16.msra.mxu0 %v571
  %617 = vmatprep.subr.bf16.mxu0 0
  %618 = vmatpush1.bf16.msra.mxu0 %v570
  %619 = vmatprep.subr.bf16.mxu0 0
  %620 = vmatpush1.bf16.msra.mxu0 %v569
  %621 = vmatprep.subr.bf16.mxu0 0
  %622 = vmatpush1.bf16.msra.mxu0 %v568
  %623 = vmatprep.subr.bf16.mxu0 0
  %624 = vmatpush1.bf16.msra.mxu0 %v567
  %625 = vmatprep.subr.bf16.mxu0 0
  %626 = vmatpush1.bf16.msra.mxu0 %v566
  %627 = vmatprep.subr.bf16.mxu0 0
  %628 = vmatpush1.bf16.msra.mxu0 %v565
  %629 = vmatprep.subr.bf16.mxu0 0
  %630 = vmatpush2.bf16.msra.mxu0 %v580
  %631 = vmatprep.subr.bf16.mxu0 0
  %632 = vmatpush2.bf16.msra.mxu0 %v579
  %633 = vmatprep.subr.bf16.mxu0 0
  %634 = vmatpush2.bf16.msra.mxu0 %v578
  %635 = vmatprep.subr.bf16.mxu0 0
  %636 = vmatpush2.bf16.msra.mxu0 %v577
  %637 = vmatprep.subr.bf16.mxu0 0
  %638 = vmatpush2.bf16.msra.mxu0 %v576
  %639 = vmatprep.subr.bf16.mxu0 0
  %640 = vmatpush2.bf16.msra.mxu0 %v575
  %641 = vmatprep.subr.bf16.mxu0 0
  %642 = vmatpush2.bf16.msra.mxu0 %v574
  %643 = vmatprep.subr.bf16.mxu0 0
  %644 = vmatpush2.bf16.msra.mxu0 %v573
  %645 = vmatprep.mubr.bf16.mxu0 %v409
  %646 = vmatmul.mubr.bf16.gmra.mxu0 %v408
  %v647 = vpop.f32.mrf.mxu0
  %v648 = vadd.f32 %v467, %v647
  %v649 = vpop.f32.mrf.mxu0
  %v650 = vpop.f32.mrf.mxu0
  %v651 = vadd.f32 %v467, %v650
  %v652 = vpop.f32.mrf.mxu0
  %653 = vmatprep.mubr.bf16.mxu0 %v412
  %654 = vmatmul.mubr.bf16.gmra.mxu0 %v411
  %v655 = vpop.f32.mrf.mxu0
  %v656 = vadd.f32 %v467, %v655
  %v657 = vpop.f32.mrf.mxu0
  %v658 = vpop.f32.mrf.mxu0
  %v659 = vadd.f32 %v467, %v658
  %v660 = vpop.f32.mrf.mxu0
  %661 = vdwg.mxu0
  %662 = vmatprep.subr.bf16.mxu0 0
  %663 = vmatpush1.bf16.msra.mxu0 %v588
  %664 = vmatprep.subr.bf16.mxu0 0
  %665 = vmatpush1.bf16.msra.mxu0 %v587
  %666 = vmatprep.subr.bf16.mxu0 0
  %667 = vmatpush1.bf16.msra.mxu0 %v586
  %668 = vmatprep.subr.bf16.mxu0 0
  %669 = vmatpush1.bf16.msra.mxu0 %v585
  %670 = vmatprep.subr.bf16.mxu0 0
  %671 = vmatpush1.bf16.msra.mxu0 %v584
  %672 = vmatprep.subr.bf16.mxu0 0
  %673 = vmatpush1.bf16.msra.mxu0 %v583
  %674 = vmatprep.subr.bf16.mxu0 0
  %675 = vmatpush1.bf16.msra.mxu0 %v582
  %676 = vmatprep.subr.bf16.mxu0 0
  %677 = vmatpush1.bf16.msra.mxu0 %v581
  %678 = vmatprep.subr.bf16.mxu0 0
  %679 = vmatpush2.bf16.msra.mxu0 0
  %680 = vmatprep.subr.bf16.mxu0 0
  %681 = vmatpush2.bf16.msra.mxu0 0
  %682 = vmatprep.subr.bf16.mxu0 0
  %683 = vmatpush2.bf16.msra.mxu0 0
  %684 = vmatprep.subr.bf16.mxu0 0
  %685 = vmatpush2.bf16.msra.mxu0 0
  %686 = vmatprep.subr.bf16.mxu0 0
  %687 = vmatpush2.bf16.msra.mxu0 0
  %688 = vmatprep.subr.bf16.mxu0 0
  %689 = vmatpush2.bf16.msra.mxu0 0
  %690 = vmatprep.subr.bf16.mxu0 0
  %691 = vmatpush2.bf16.msra.mxu0 0
  %692 = vmatprep.subr.bf16.mxu0 0
  %693 = vmatpush2.bf16.msra.mxu0 0
  %694 = vmatprep.mubr.bf16.mxu0 0
  %695 = vmatmul.mubr.bf16.gmra.mxu0 %v410
  %v696 = vpop.f32.mrf.mxu0
  %v697 = vadd.f32 %v648, %v696
  %v698 = vpop.f32.mrf.mxu0
  %v699 = vpop.f32.mrf.mxu0
  %v700 = vadd.f32 %v651, %v699
  %v701 = vpop.f32.mrf.mxu0
  %702 = vmatprep.mubr.bf16.mxu0 0
  %703 = vmatmul.mubr.bf16.gmra.mxu0 %v413
  %v704 = vpop.f32.mrf.mxu0
  %v705 = vadd.f32 %v656, %v704
  %v706 = vpop.f32.mrf.mxu0
  %v707 = vpop.f32.mrf.mxu0
  %v708 = vadd.f32 %v659, %v707
  %v709 = vpop.f32.mrf.mxu0
  %710 = vdwg.mxu0
  %v711 = vmax.f32 %v697, 0.0
  %v712 = vmax.f32 %v700, 0.0
  %v713 = vmax.f32 %v705, 0.0
  %v714 = vmax.f32 %v708, 0.0
  %v716 = vrot.slane %v714, 7
  %v721 = vrot.slane %v711, 7
  %v722 = vrot.slane %v712, 7
  %v723 = vsel %vm370, %v721, %v722
  %v724 = vrot.slane %v713, 7
  %v725 = vsel %vm370, %v722, %v724
  %v726 = vsel %vm370, %v724, %v716
  %v731 = vsel %vm370, %v716, %v721
  %v732 = vsel %vm360, %v731, 0.0
  %v733 = vsel %vm361, %v723, 0.0
  %v734 = vsel %vm362, %v725, 0.0
  %v735 = vsel %vm363, %v726, 0.0
  %v736 = vrot.slane %v711, 1
  %v737 = vrot.slane %v712, 1
  %v738 = vsel %vm390, %v736, %v737
  %v739 = vrot.slane %v713, 1
  %v740 = vsel %vm390, %v737, %v739
  %v741 = vrot.slane %v714, 1
  %v742 = vsel %vm390, %v739, %v741
  %v748 = vsel %vm390, %v741, %v736
  %v749 = vsel %vm386, %v738, 0.0
  %v750 = vsel %vm387, %v740, 0.0
  %v751 = vsel %vm388, %v742, 0.0
  %v752 = vsel %vm389, %v748, 0.0
  %v753 = vpack.c.bf16 %v733, %v732
  %v754 = vpack.c.bf16 %v712, %v711
  %v755 = vpack.c.bf16 %v750, %v749
  %v756 = vpack.c.bf16 %v735, %v734
  %v757 = vpack.c.bf16 %v714, %v713
  %v758 = vpack.c.bf16 %v752, %v751
  %s759 = scalar_lea.vmem %s6, 192
  %v760 = vld [vmem:[%s759] sm:$0xf]
  %v761 = vld [vmem:[%s759 + $0x4] sm:$0xf]
  %v762 = vld [vmem:[%s759 + $0x8] sm:$0xf]
  %v763 = vld [vmem:[%s759 + $0xc] sm:$0xf]
  %v764 = vld [vmem:[%s759 + $0x10] sm:$0xf]
  %v765 = vld [vmem:[%s759 + $0x14] sm:$0xf]
  %v766 = vld [vmem:[%s759 + $0x18] sm:$0xf]
  %v767 = vld [vmem:[%s759 + $0x1c] sm:$0xf]
  %v768 = vld [vmem:[%s759 + $0x20] sm:$0xf]
  %v769 = vld [vmem:[%s759 + $0x24] sm:$0xf]
  %v770 = vld [vmem:[%s759 + $0x28] sm:$0xf]
  %v771 = vld [vmem:[%s759 + $0x2c] sm:$0xf]
  %v772 = vld [vmem:[%s759 + $0x30] sm:$0xf]
  %v773 = vld [vmem:[%s759 + $0x34] sm:$0xf]
  %v774 = vld [vmem:[%s759 + $0x38] sm:$0xf]
  %v775 = vld [vmem:[%s759 + $0x3c] sm:$0xf]
  %v776 = vld [vmem:[%s759 + $0x40] sm:$0xf]
  %v777 = vld [vmem:[%s759 + $0x44] sm:$0xf]
  %v778 = vld [vmem:[%s759 + $0x48] sm:$0xf]
  %v779 = vld [vmem:[%s759 + $0x4c] sm:$0xf]
  %v780 = vld [vmem:[%s759 + $0x50] sm:$0xf]
  %v781 = vld [vmem:[%s759 + $0x54] sm:$0xf]
  %v782 = vld [vmem:[%s759 + $0x58] sm:$0xf]
  %v783 = vld [vmem:[%s759 + $0x5c] sm:$0xf]
  %v784 = vld [vmem:[%s759 + $0x60] sm:$0xf]
  %v785 = vld [vmem:[%s759 + $0x64] sm:$0xf]
  %v786 = vld [vmem:[%s759 + $0x68] sm:$0xf]
  %v787 = vld [vmem:[%s759 + $0x6c] sm:$0xf]
  %v788 = vld [vmem:[%s759 + $0x70] sm:$0xf]
  %v789 = vld [vmem:[%s759 + $0x74] sm:$0xf]
  %v790 = vld [vmem:[%s759 + $0x78] sm:$0xf]
  %v791 = vld [vmem:[%s759 + $0x7c] sm:$0xf]
  %v792 = vld [vmem:[%s759 + $0x80] sm:$0xf]
  %v793 = vld [vmem:[%s759 + $0x84] sm:$0xf]
  %v794 = vld [vmem:[%s759 + $0x88] sm:$0xf]
  %v795 = vld [vmem:[%s759 + $0x8c] sm:$0xf]
  %v796 = vld [vmem:[%s759 + $0x90] sm:$0xf]
  %v797 = vld [vmem:[%s759 + $0x94] sm:$0xf]
  %v798 = vld [vmem:[%s759 + $0x98] sm:$0xf]
  %v799 = vld [vmem:[%s759 + $0x9c] sm:$0xf]
  %v800 = vld [vmem:[%s759 + $0xa0] sm:$0xf]
  %v801 = vld [vmem:[%s759 + $0xa4] sm:$0xf]
  %v802 = vld [vmem:[%s759 + $0xa8] sm:$0xf]
  %v803 = vld [vmem:[%s759 + $0xac] sm:$0xf]
  %v804 = vld [vmem:[%s759 + $0xb0] sm:$0xf]
  %v805 = vld [vmem:[%s759 + $0xb4] sm:$0xf]
  %v806 = vld [vmem:[%s759 + $0xb8] sm:$0xf]
  %v807 = vld [vmem:[%s759 + $0xbc] sm:$0xf]
  %s808 = scalar_lea.vmem %s7, 1
  %v809 = vld [vmem:[%s808] sm:$0x1]
  %v811 = vlaneseq
  %v812 = vshrl.u32 %v811, 7
  %v813 = vsub.s32 0, %v812
  %v814 = vrot.slane %v809, %v813
  %v864 = vunpack.c.l.b16 %v760
  %v865 = vunpack.c.l.b16 %v761
  %v866 = vunpack.c.l.b16 %v762
  %v867 = vunpack.c.l.b16 %v763
  %v868 = vunpack.c.l.b16 %v764
  %v869 = vunpack.c.l.b16 %v765
  %v870 = vunpack.c.l.b16 %v766
  %v871 = vunpack.c.l.b16 %v767
  %v872 = vunpack.c.l.b16 %v768
  %v873 = vunpack.c.l.b16 %v769
  %v874 = vunpack.c.l.b16 %v770
  %v875 = vunpack.c.l.b16 %v771
  %v876 = vunpack.c.l.b16 %v772
  %v877 = vunpack.c.l.b16 %v773
  %v878 = vunpack.c.l.b16 %v774
  %v879 = vunpack.c.l.b16 %v775
  %v880 = vunpack.c.l.b16 %v776
  %v881 = vunpack.c.l.b16 %v777
  %v882 = vunpack.c.l.b16 %v778
  %v883 = vunpack.c.l.b16 %v779
  %v884 = vunpack.c.l.b16 %v780
  %v885 = vunpack.c.l.b16 %v781
  %v886 = vunpack.c.l.b16 %v782
  %v887 = vunpack.c.l.b16 %v783
  %v888 = vunpack.c.l.b16 %v784
  %v889 = vunpack.c.l.b16 %v785
  %v890 = vunpack.c.l.b16 %v786
  %v891 = vunpack.c.l.b16 %v787
  %v892 = vunpack.c.l.b16 %v788
  %v893 = vunpack.c.l.b16 %v789
  %v894 = vunpack.c.l.b16 %v790
  %v895 = vunpack.c.l.b16 %v791
  %v896 = vunpack.c.l.b16 %v792
  %v897 = vunpack.c.l.b16 %v793
  %v898 = vunpack.c.l.b16 %v794
  %v899 = vunpack.c.l.b16 %v795
  %v900 = vunpack.c.l.b16 %v796
  %v901 = vunpack.c.l.b16 %v797
  %v902 = vunpack.c.l.b16 %v798
  %v903 = vunpack.c.l.b16 %v799
  %v904 = vunpack.c.l.b16 %v800
  %v905 = vunpack.c.l.b16 %v801
  %v906 = vunpack.c.l.b16 %v802
  %v907 = vunpack.c.l.b16 %v803
  %v908 = vunpack.c.l.b16 %v804
  %v909 = vunpack.c.l.b16 %v805
  %v910 = vunpack.c.l.b16 %v806
  %v911 = vunpack.c.l.b16 %v807
  %v912 = vpack.c.b16 %v865, %v864
  %v913 = vpack.c.b16 %v867, %v866
  %v914 = vpack.c.b16 %v869, %v868
  %v915 = vpack.c.b16 %v871, %v870
  %v916 = vpack.c.b16 %v873, %v872
  %v917 = vpack.c.b16 %v875, %v874
  %v918 = vpack.c.b16 %v877, %v876
  %v919 = vpack.c.b16 %v879, %v878
  %v920 = vpack.c.b16 %v881, %v880
  %v921 = vpack.c.b16 %v883, %v882
  %v922 = vpack.c.b16 %v885, %v884
  %v923 = vpack.c.b16 %v887, %v886
  %v924 = vpack.c.b16 %v889, %v888
  %v925 = vpack.c.b16 %v891, %v890
  %v926 = vpack.c.b16 %v893, %v892
  %v927 = vpack.c.b16 %v895, %v894
  %v928 = vpack.c.b16 %v897, %v896
  %v929 = vpack.c.b16 %v899, %v898
  %v930 = vpack.c.b16 %v901, %v900
  %v931 = vpack.c.b16 %v903, %v902
  %v932 = vpack.c.b16 %v905, %v904
  %v933 = vpack.c.b16 %v907, %v906
  %v934 = vpack.c.b16 %v909, %v908
  %v935 = vpack.c.b16 %v911, %v910
  %960 = vmatprep.subr.bf16.mxu0 0
  %961 = vmatpush1.bf16.msra.mxu0 %v919
  %962 = vmatprep.subr.bf16.mxu0 0
  %963 = vmatpush1.bf16.msra.mxu0 %v918
  %964 = vmatprep.subr.bf16.mxu0 0
  %965 = vmatpush1.bf16.msra.mxu0 %v917
  %966 = vmatprep.subr.bf16.mxu0 0
  %967 = vmatpush1.bf16.msra.mxu0 %v916
  %968 = vmatprep.subr.bf16.mxu0 0
  %969 = vmatpush1.bf16.msra.mxu0 %v915
  %970 = vmatprep.subr.bf16.mxu0 0
  %971 = vmatpush1.bf16.msra.mxu0 %v914
  %972 = vmatprep.subr.bf16.mxu0 0
  %973 = vmatpush1.bf16.msra.mxu0 %v913
  %974 = vmatprep.subr.bf16.mxu0 0
  %975 = vmatpush1.bf16.msra.mxu0 %v912
  %976 = vmatprep.subr.bf16.mxu0 0
  %977 = vmatpush2.bf16.msra.mxu0 %v927
  %978 = vmatprep.subr.bf16.mxu0 0
  %979 = vmatpush2.bf16.msra.mxu0 %v926
  %980 = vmatprep.subr.bf16.mxu0 0
  %981 = vmatpush2.bf16.msra.mxu0 %v925
  %982 = vmatprep.subr.bf16.mxu0 0
  %983 = vmatpush2.bf16.msra.mxu0 %v924
  %984 = vmatprep.subr.bf16.mxu0 0
  %985 = vmatpush2.bf16.msra.mxu0 %v923
  %986 = vmatprep.subr.bf16.mxu0 0
  %987 = vmatpush2.bf16.msra.mxu0 %v922
  %988 = vmatprep.subr.bf16.mxu0 0
  %989 = vmatpush2.bf16.msra.mxu0 %v921
  %990 = vmatprep.subr.bf16.mxu0 0
  %991 = vmatpush2.bf16.msra.mxu0 %v920
  %992 = vmatprep.mubr.bf16.mxu0 %v754
  %993 = vmatmul.mubr.bf16.gmra.mxu0 %v753
  %v994 = vpop.f32.mrf.mxu0
  %v995 = vadd.f32 %v814, %v994
  %v996 = vpop.f32.mrf.mxu0
  %v997 = vpop.f32.mrf.mxu0
  %v998 = vadd.f32 %v814, %v997
  %v999 = vpop.f32.mrf.mxu0
  %1000 = vmatprep.mubr.bf16.mxu0 %v757
  %1001 = vmatmul.mubr.bf16.gmra.mxu0 %v756
  %v1002 = vpop.f32.mrf.mxu0
  %v1003 = vadd.f32 %v814, %v1002
  %v1004 = vpop.f32.mrf.mxu0
  %v1005 = vpop.f32.mrf.mxu0
  %v1006 = vadd.f32 %v814, %v1005
  %v1007 = vpop.f32.mrf.mxu0
  %1008 = vdwg.mxu0
  %1009 = vmatprep.subr.bf16.mxu0 0
  %1010 = vmatpush1.bf16.msra.mxu0 %v935
  %1011 = vmatprep.subr.bf16.mxu0 0
  %1012 = vmatpush1.bf16.msra.mxu0 %v934
  %1013 = vmatprep.subr.bf16.mxu0 0
  %1014 = vmatpush1.bf16.msra.mxu0 %v933
  %1015 = vmatprep.subr.bf16.mxu0 0
  %1016 = vmatpush1.bf16.msra.mxu0 %v932
  %1017 = vmatprep.subr.bf16.mxu0 0
  %1018 = vmatpush1.bf16.msra.mxu0 %v931
  %1019 = vmatprep.subr.bf16.mxu0 0
  %1020 = vmatpush1.bf16.msra.mxu0 %v930
  %1021 = vmatprep.subr.bf16.mxu0 0
  %1022 = vmatpush1.bf16.msra.mxu0 %v929
  %1023 = vmatprep.subr.bf16.mxu0 0
  %1024 = vmatpush1.bf16.msra.mxu0 %v928
  %1025 = vmatprep.subr.bf16.mxu0 0
  %1026 = vmatpush2.bf16.msra.mxu0 0
  %1027 = vmatprep.subr.bf16.mxu0 0
  %1028 = vmatpush2.bf16.msra.mxu0 0
  %1029 = vmatprep.subr.bf16.mxu0 0
  %1030 = vmatpush2.bf16.msra.mxu0 0
  %1031 = vmatprep.subr.bf16.mxu0 0
  %1032 = vmatpush2.bf16.msra.mxu0 0
  %1033 = vmatprep.subr.bf16.mxu0 0
  %1034 = vmatpush2.bf16.msra.mxu0 0
  %1035 = vmatprep.subr.bf16.mxu0 0
  %1036 = vmatpush2.bf16.msra.mxu0 0
  %1037 = vmatprep.subr.bf16.mxu0 0
  %1038 = vmatpush2.bf16.msra.mxu0 0
  %1039 = vmatprep.subr.bf16.mxu0 0
  %1040 = vmatpush2.bf16.msra.mxu0 0
  %1041 = vmatprep.mubr.bf16.mxu0 0
  %1042 = vmatmul.mubr.bf16.gmra.mxu0 %v755
  %v1043 = vpop.f32.mrf.mxu0
  %v1044 = vadd.f32 %v995, %v1043
  %v1045 = vpop.f32.mrf.mxu0
  %v1046 = vpop.f32.mrf.mxu0
  %v1047 = vadd.f32 %v998, %v1046
  %v1048 = vpop.f32.mrf.mxu0
  %1049 = vmatprep.mubr.bf16.mxu0 0
  %1050 = vmatmul.mubr.bf16.gmra.mxu0 %v758
  %v1051 = vpop.f32.mrf.mxu0
  %v1052 = vadd.f32 %v1003, %v1051
  %v1053 = vpop.f32.mrf.mxu0
  %v1054 = vpop.f32.mrf.mxu0
  %v1055 = vadd.f32 %v1006, %v1054
  %v1056 = vpop.f32.mrf.mxu0
  %1057 = vdwg.mxu0
  %v1058 = vld [vmem:[%s347] sm:$0xff]
  %v1059 = vld [vmem:[%s347 + $0x8] sm:$0xff]
  %v1060 = vld [vmem:[%s347 + $0x10] sm:$0xff]
  %v1061 = vld [vmem:[%s347 + $0x18] sm:$0xff]
  %v1062 = vmax.f32 %v1058, 0.0
  %v1063 = vmax.f32 %v1059, 0.0
  %v1064 = vmax.f32 %v1060, 0.0
  %v1065 = vmax.f32 %v1061, 0.0
  %v1067 = vrot.slane %v1065, 7
  %v1072 = vrot.slane %v1062, 7
  %v1073 = vrot.slane %v1063, 7
  %v1074 = vsel %vm370, %v1072, %v1073
  %v1075 = vrot.slane %v1064, 7
  %v1076 = vsel %vm370, %v1073, %v1075
  %v1077 = vsel %vm370, %v1075, %v1067
  %v1082 = vsel %vm370, %v1067, %v1072
  %v1083 = vsel %vm360, %v1082, 0.0
  %v1084 = vsel %vm361, %v1074, 0.0
  %v1085 = vsel %vm362, %v1076, 0.0
  %v1086 = vsel %vm363, %v1077, 0.0
  %v1087 = vrot.slane %v1062, 1
  %v1088 = vrot.slane %v1063, 1
  %v1089 = vsel %vm390, %v1087, %v1088
  %v1090 = vrot.slane %v1064, 1
  %v1091 = vsel %vm390, %v1088, %v1090
  %v1092 = vrot.slane %v1065, 1
  %v1093 = vsel %vm390, %v1090, %v1092
  %v1099 = vsel %vm390, %v1092, %v1087
  %v1100 = vsel %vm386, %v1089, 0.0
  %v1101 = vsel %vm387, %v1091, 0.0
  %v1102 = vsel %vm388, %v1093, 0.0
  %v1103 = vsel %vm389, %v1099, 0.0
  %v1104 = vpack.c.bf16 %v1084, %v1083
  %v1105 = vpack.c.bf16 %v1063, %v1062
  %v1106 = vpack.c.bf16 %v1101, %v1100
  %v1107 = vpack.c.bf16 %v1086, %v1085
  %v1108 = vpack.c.bf16 %v1065, %v1064
  %v1109 = vpack.c.bf16 %v1103, %v1102
  %s1110 = scalar_lea.vmem %s6, 384
  %v1111 = vld [vmem:[%s1110] sm:$0xf]
  %v1112 = vld [vmem:[%s1110 + $0x4] sm:$0xf]
  %v1113 = vld [vmem:[%s1110 + $0x8] sm:$0xf]
  %v1114 = vld [vmem:[%s1110 + $0xc] sm:$0xf]
  %v1115 = vld [vmem:[%s1110 + $0x10] sm:$0xf]
  %v1116 = vld [vmem:[%s1110 + $0x14] sm:$0xf]
  %v1117 = vld [vmem:[%s1110 + $0x18] sm:$0xf]
  %v1118 = vld [vmem:[%s1110 + $0x1c] sm:$0xf]
  %v1119 = vld [vmem:[%s1110 + $0x20] sm:$0xf]
  %v1120 = vld [vmem:[%s1110 + $0x24] sm:$0xf]
  %v1121 = vld [vmem:[%s1110 + $0x28] sm:$0xf]
  %v1122 = vld [vmem:[%s1110 + $0x2c] sm:$0xf]
  %v1123 = vld [vmem:[%s1110 + $0x30] sm:$0xf]
  %v1124 = vld [vmem:[%s1110 + $0x34] sm:$0xf]
  %v1125 = vld [vmem:[%s1110 + $0x38] sm:$0xf]
  %v1126 = vld [vmem:[%s1110 + $0x3c] sm:$0xf]
  %v1127 = vld [vmem:[%s1110 + $0x40] sm:$0xf]
  %v1128 = vld [vmem:[%s1110 + $0x44] sm:$0xf]
  %v1129 = vld [vmem:[%s1110 + $0x48] sm:$0xf]
  %v1130 = vld [vmem:[%s1110 + $0x4c] sm:$0xf]
  %v1131 = vld [vmem:[%s1110 + $0x50] sm:$0xf]
  %v1132 = vld [vmem:[%s1110 + $0x54] sm:$0xf]
  %v1133 = vld [vmem:[%s1110 + $0x58] sm:$0xf]
  %v1134 = vld [vmem:[%s1110 + $0x5c] sm:$0xf]
  %v1135 = vld [vmem:[%s1110 + $0x60] sm:$0xf]
  %v1136 = vld [vmem:[%s1110 + $0x64] sm:$0xf]
  %v1137 = vld [vmem:[%s1110 + $0x68] sm:$0xf]
  %v1138 = vld [vmem:[%s1110 + $0x6c] sm:$0xf]
  %v1139 = vld [vmem:[%s1110 + $0x70] sm:$0xf]
  %v1140 = vld [vmem:[%s1110 + $0x74] sm:$0xf]
  %v1141 = vld [vmem:[%s1110 + $0x78] sm:$0xf]
  %v1142 = vld [vmem:[%s1110 + $0x7c] sm:$0xf]
  %v1143 = vld [vmem:[%s1110 + $0x80] sm:$0xf]
  %v1144 = vld [vmem:[%s1110 + $0x84] sm:$0xf]
  %v1145 = vld [vmem:[%s1110 + $0x88] sm:$0xf]
  %v1146 = vld [vmem:[%s1110 + $0x8c] sm:$0xf]
  %v1147 = vld [vmem:[%s1110 + $0x90] sm:$0xf]
  %v1148 = vld [vmem:[%s1110 + $0x94] sm:$0xf]
  %v1149 = vld [vmem:[%s1110 + $0x98] sm:$0xf]
  %v1150 = vld [vmem:[%s1110 + $0x9c] sm:$0xf]
  %v1151 = vld [vmem:[%s1110 + $0xa0] sm:$0xf]
  %v1152 = vld [vmem:[%s1110 + $0xa4] sm:$0xf]
  %v1153 = vld [vmem:[%s1110 + $0xa8] sm:$0xf]
  %v1154 = vld [vmem:[%s1110 + $0xac] sm:$0xf]
  %v1155 = vld [vmem:[%s1110 + $0xb0] sm:$0xf]
  %v1156 = vld [vmem:[%s1110 + $0xb4] sm:$0xf]
  %v1157 = vld [vmem:[%s1110 + $0xb8] sm:$0xf]
  %v1158 = vld [vmem:[%s1110 + $0xbc] sm:$0xf]
  %s1159 = scalar_lea.vmem %s7, 2
  %v1160 = vld [vmem:[%s1159] sm:$0x1]
  %v1162 = vlaneseq
  %v1163 = vshrl.u32 %v1162, 7
  %v1164 = vsub.s32 0, %v1163
  %v1165 = vrot.slane %v1160, %v1164
  %v1215 = vunpack.c.l.b16 %v1111
  %v1216 = vunpack.c.l.b16 %v1112
  %v1217 = vunpack.c.l.b16 %v1113
  %v1218 = vunpack.c.l.b16 %v1114
  %v1219 = vunpack.c.l.b16 %v1115
  %v1220 = vunpack.c.l.b16 %v1116
  %v1221 = vunpack.c.l.b16 %v1117
  %v1222 = vunpack.c.l.b16 %v1118
  %v1223 = vunpack.c.l.b16 %v1119
  %v1224 = vunpack.c.l.b16 %v1120
  %v1225 = vunpack.c.l.b16 %v1121
  %v1226 = vunpack.c.l.b16 %v1122
  %v1227 = vunpack.c.l.b16 %v1123
  %v1228 = vunpack.c.l.b16 %v1124
  %v1229 = vunpack.c.l.b16 %v1125
  %v1230 = vunpack.c.l.b16 %v1126
  %v1231 = vunpack.c.l.b16 %v1127
  %v1232 = vunpack.c.l.b16 %v1128
  %v1233 = vunpack.c.l.b16 %v1129
  %v1234 = vunpack.c.l.b16 %v1130
  %v1235 = vunpack.c.l.b16 %v1131
  %v1236 = vunpack.c.l.b16 %v1132
  %v1237 = vunpack.c.l.b16 %v1133
  %v1238 = vunpack.c.l.b16 %v1134
  %v1239 = vunpack.c.l.b16 %v1135
  %v1240 = vunpack.c.l.b16 %v1136
  %v1241 = vunpack.c.l.b16 %v1137
  %v1242 = vunpack.c.l.b16 %v1138
  %v1243 = vunpack.c.l.b16 %v1139
  %v1244 = vunpack.c.l.b16 %v1140
  %v1245 = vunpack.c.l.b16 %v1141
  %v1246 = vunpack.c.l.b16 %v1142
  %v1247 = vunpack.c.l.b16 %v1143
  %v1248 = vunpack.c.l.b16 %v1144
  %v1249 = vunpack.c.l.b16 %v1145
  %v1250 = vunpack.c.l.b16 %v1146
  %v1251 = vunpack.c.l.b16 %v1147
  %v1252 = vunpack.c.l.b16 %v1148
  %v1253 = vunpack.c.l.b16 %v1149
  %v1254 = vunpack.c.l.b16 %v1150
  %v1255 = vunpack.c.l.b16 %v1151
  %v1256 = vunpack.c.l.b16 %v1152
  %v1257 = vunpack.c.l.b16 %v1153
  %v1258 = vunpack.c.l.b16 %v1154
  %v1259 = vunpack.c.l.b16 %v1155
  %v1260 = vunpack.c.l.b16 %v1156
  %v1261 = vunpack.c.l.b16 %v1157
  %v1262 = vunpack.c.l.b16 %v1158
  %v1263 = vpack.c.b16 %v1216, %v1215
  %v1264 = vpack.c.b16 %v1218, %v1217
  %v1265 = vpack.c.b16 %v1220, %v1219
  %v1266 = vpack.c.b16 %v1222, %v1221
  %v1267 = vpack.c.b16 %v1224, %v1223
  %v1268 = vpack.c.b16 %v1226, %v1225
  %v1269 = vpack.c.b16 %v1228, %v1227
  %v1270 = vpack.c.b16 %v1230, %v1229
  %v1271 = vpack.c.b16 %v1232, %v1231
  %v1272 = vpack.c.b16 %v1234, %v1233
  %v1273 = vpack.c.b16 %v1236, %v1235
  %v1274 = vpack.c.b16 %v1238, %v1237
  %v1275 = vpack.c.b16 %v1240, %v1239
  %v1276 = vpack.c.b16 %v1242, %v1241
  %v1277 = vpack.c.b16 %v1244, %v1243
  %v1278 = vpack.c.b16 %v1246, %v1245
  %v1279 = vpack.c.b16 %v1248, %v1247
  %v1280 = vpack.c.b16 %v1250, %v1249
  %v1281 = vpack.c.b16 %v1252, %v1251
  %v1282 = vpack.c.b16 %v1254, %v1253
  %v1283 = vpack.c.b16 %v1256, %v1255
  %v1284 = vpack.c.b16 %v1258, %v1257
  %v1285 = vpack.c.b16 %v1260, %v1259
  %v1286 = vpack.c.b16 %v1262, %v1261
  %1311 = vmatprep.subr.bf16.mxu0 0
  %1312 = vmatpush1.bf16.msra.mxu0 %v1270
  %1313 = vmatprep.subr.bf16.mxu0 0
  %1314 = vmatpush1.bf16.msra.mxu0 %v1269
  %1315 = vmatprep.subr.bf16.mxu0 0
  %1316 = vmatpush1.bf16.msra.mxu0 %v1268
  %1317 = vmatprep.subr.bf16.mxu0 0
  %1318 = vmatpush1.bf16.msra.mxu0 %v1267
  %1319 = vmatprep.subr.bf16.mxu0 0
  %1320 = vmatpush1.bf16.msra.mxu0 %v1266
  %1321 = vmatprep.subr.bf16.mxu0 0
  %1322 = vmatpush1.bf16.msra.mxu0 %v1265
  %1323 = vmatprep.subr.bf16.mxu0 0
  %1324 = vmatpush1.bf16.msra.mxu0 %v1264
  %1325 = vmatprep.subr.bf16.mxu0 0
  %1326 = vmatpush1.bf16.msra.mxu0 %v1263
  %1327 = vmatprep.subr.bf16.mxu0 0
  %1328 = vmatpush2.bf16.msra.mxu0 %v1278
  %1329 = vmatprep.subr.bf16.mxu0 0
  %1330 = vmatpush2.bf16.msra.mxu0 %v1277
  %1331 = vmatprep.subr.bf16.mxu0 0
  %1332 = vmatpush2.bf16.msra.mxu0 %v1276
  %1333 = vmatprep.subr.bf16.mxu0 0
  %1334 = vmatpush2.bf16.msra.mxu0 %v1275
  %1335 = vmatprep.subr.bf16.mxu0 0
  %1336 = vmatpush2.bf16.msra.mxu0 %v1274
  %1337 = vmatprep.subr.bf16.mxu0 0
  %1338 = vmatpush2.bf16.msra.mxu0 %v1273
  %1339 = vmatprep.subr.bf16.mxu0 0
  %1340 = vmatpush2.bf16.msra.mxu0 %v1272
  %1341 = vmatprep.subr.bf16.mxu0 0
  %1342 = vmatpush2.bf16.msra.mxu0 %v1271
  %1343 = vmatprep.mubr.bf16.mxu0 %v1105
  %1344 = vmatmul.mubr.bf16.gmra.mxu0 %v1104
  %v1345 = vpop.f32.mrf.mxu0
  %v1346 = vadd.f32 %v1165, %v1345
  %v1347 = vpop.f32.mrf.mxu0
  %v1348 = vpop.f32.mrf.mxu0
  %v1349 = vadd.f32 %v1165, %v1348
  %v1350 = vpop.f32.mrf.mxu0
  %1351 = vmatprep.mubr.bf16.mxu0 %v1108
  %1352 = vmatmul.mubr.bf16.gmra.mxu0 %v1107
  %v1353 = vpop.f32.mrf.mxu0
  %v1354 = vadd.f32 %v1165, %v1353
  %v1355 = vpop.f32.mrf.mxu0
  %v1356 = vpop.f32.mrf.mxu0
  %v1357 = vadd.f32 %v1165, %v1356
  %v1358 = vpop.f32.mrf.mxu0
  %1359 = vdwg.mxu0
  %1360 = vmatprep.subr.bf16.mxu0 0
  %1361 = vmatpush1.bf16.msra.mxu0 %v1286
  %1362 = vmatprep.subr.bf16.mxu0 0
  %1363 = vmatpush1.bf16.msra.mxu0 %v1285
  %1364 = vmatprep.subr.bf16.mxu0 0
  %1365 = vmatpush1.bf16.msra.mxu0 %v1284
  %1366 = vmatprep.subr.bf16.mxu0 0
  %1367 = vmatpush1.bf16.msra.mxu0 %v1283
  %1368 = vmatprep.subr.bf16.mxu0 0
  %1369 = vmatpush1.bf16.msra.mxu0 %v1282
  %1370 = vmatprep.subr.bf16.mxu0 0
  %1371 = vmatpush1.bf16.msra.mxu0 %v1281
  %1372 = vmatprep.subr.bf16.mxu0 0
  %1373 = vmatpush1.bf16.msra.mxu0 %v1280
  %1374 = vmatprep.subr.bf16.mxu0 0
  %1375 = vmatpush1.bf16.msra.mxu0 %v1279
  %1376 = vmatprep.subr.bf16.mxu0 0
  %1377 = vmatpush2.bf16.msra.mxu0 0
  %1378 = vmatprep.subr.bf16.mxu0 0
  %1379 = vmatpush2.bf16.msra.mxu0 0
  %1380 = vmatprep.subr.bf16.mxu0 0
  %1381 = vmatpush2.bf16.msra.mxu0 0
  %1382 = vmatprep.subr.bf16.mxu0 0
  %1383 = vmatpush2.bf16.msra.mxu0 0
  %1384 = vmatprep.subr.bf16.mxu0 0
  %1385 = vmatpush2.bf16.msra.mxu0 0
  %1386 = vmatprep.subr.bf16.mxu0 0
  %1387 = vmatpush2.bf16.msra.mxu0 0
  %1388 = vmatprep.subr.bf16.mxu0 0
  %1389 = vmatpush2.bf16.msra.mxu0 0
  %1390 = vmatprep.subr.bf16.mxu0 0
  %1391 = vmatpush2.bf16.msra.mxu0 0
  %1392 = vmatprep.mubr.bf16.mxu0 0
  %1393 = vmatmul.mubr.bf16.gmra.mxu0 %v1106
  %v1394 = vpop.f32.mrf.mxu0
  %v1395 = vadd.f32 %v1346, %v1394
  %v1396 = vpop.f32.mrf.mxu0
  %v1397 = vpop.f32.mrf.mxu0
  %v1398 = vadd.f32 %v1349, %v1397
  %v1399 = vpop.f32.mrf.mxu0
  %1400 = vmatprep.mubr.bf16.mxu0 0
  %1401 = vmatmul.mubr.bf16.gmra.mxu0 %v1109
  %v1402 = vpop.f32.mrf.mxu0
  %v1403 = vadd.f32 %v1354, %v1402
  %v1404 = vpop.f32.mrf.mxu0
  %v1405 = vpop.f32.mrf.mxu0
  %v1406 = vadd.f32 %v1357, %v1405
  %v1407 = vpop.f32.mrf.mxu0
  %1408 = vdwg.mxu0
  %v1409 = vmax.f32 %v1395, 0.0
  %v1410 = vmax.f32 %v1398, 0.0
  %v1411 = vmax.f32 %v1403, 0.0
  %v1412 = vmax.f32 %v1406, 0.0
  %v1414 = vrot.slane %v1412, 7
  %v1419 = vrot.slane %v1409, 7
  %v1420 = vrot.slane %v1410, 7
  %v1421 = vsel %vm370, %v1419, %v1420
  %v1422 = vrot.slane %v1411, 7
  %v1423 = vsel %vm370, %v1420, %v1422
  %v1424 = vsel %vm370, %v1422, %v1414
  %v1429 = vsel %vm370, %v1414, %v1419
  %v1430 = vsel %vm360, %v1429, 0.0
  %v1431 = vsel %vm361, %v1421, 0.0
  %v1432 = vsel %vm362, %v1423, 0.0
  %v1433 = vsel %vm363, %v1424, 0.0
  %v1434 = vrot.slane %v1409, 1
  %v1435 = vrot.slane %v1410, 1
  %v1436 = vsel %vm390, %v1434, %v1435
  %v1437 = vrot.slane %v1411, 1
  %v1438 = vsel %vm390, %v1435, %v1437
  %v1439 = vrot.slane %v1412, 1
  %v1440 = vsel %vm390, %v1437, %v1439
  %v1446 = vsel %vm390, %v1439, %v1434
  %v1447 = vsel %vm386, %v1436, 0.0
  %v1448 = vsel %vm387, %v1438, 0.0
  %v1449 = vsel %vm388, %v1440, 0.0
  %v1450 = vsel %vm389, %v1446, 0.0
  %v1451 = vpack.c.bf16 %v1431, %v1430
  %v1452 = vpack.c.bf16 %v1410, %v1409
  %v1453 = vpack.c.bf16 %v1448, %v1447
  %v1454 = vpack.c.bf16 %v1433, %v1432
  %v1455 = vpack.c.bf16 %v1412, %v1411
  %v1456 = vpack.c.bf16 %v1450, %v1449
  %s1457 = scalar_lea.vmem %s6, 576
  %v1458 = vld [vmem:[%s1457] sm:$0xf]
  %v1459 = vld [vmem:[%s1457 + $0x4] sm:$0xf]
  %v1460 = vld [vmem:[%s1457 + $0x8] sm:$0xf]
  %v1461 = vld [vmem:[%s1457 + $0xc] sm:$0xf]
  %v1462 = vld [vmem:[%s1457 + $0x10] sm:$0xf]
  %v1463 = vld [vmem:[%s1457 + $0x14] sm:$0xf]
  %v1464 = vld [vmem:[%s1457 + $0x18] sm:$0xf]
  %v1465 = vld [vmem:[%s1457 + $0x1c] sm:$0xf]
  %v1466 = vld [vmem:[%s1457 + $0x20] sm:$0xf]
  %v1467 = vld [vmem:[%s1457 + $0x24] sm:$0xf]
  %v1468 = vld [vmem:[%s1457 + $0x28] sm:$0xf]
  %v1469 = vld [vmem:[%s1457 + $0x2c] sm:$0xf]
  %v1470 = vld [vmem:[%s1457 + $0x30] sm:$0xf]
  %v1471 = vld [vmem:[%s1457 + $0x34] sm:$0xf]
  %v1472 = vld [vmem:[%s1457 + $0x38] sm:$0xf]
  %v1473 = vld [vmem:[%s1457 + $0x3c] sm:$0xf]
  %v1474 = vld [vmem:[%s1457 + $0x40] sm:$0xf]
  %v1475 = vld [vmem:[%s1457 + $0x44] sm:$0xf]
  %v1476 = vld [vmem:[%s1457 + $0x48] sm:$0xf]
  %v1477 = vld [vmem:[%s1457 + $0x4c] sm:$0xf]
  %v1478 = vld [vmem:[%s1457 + $0x50] sm:$0xf]
  %v1479 = vld [vmem:[%s1457 + $0x54] sm:$0xf]
  %v1480 = vld [vmem:[%s1457 + $0x58] sm:$0xf]
  %v1481 = vld [vmem:[%s1457 + $0x5c] sm:$0xf]
  %v1482 = vld [vmem:[%s1457 + $0x60] sm:$0xf]
  %v1483 = vld [vmem:[%s1457 + $0x64] sm:$0xf]
  %v1484 = vld [vmem:[%s1457 + $0x68] sm:$0xf]
  %v1485 = vld [vmem:[%s1457 + $0x6c] sm:$0xf]
  %v1486 = vld [vmem:[%s1457 + $0x70] sm:$0xf]
  %v1487 = vld [vmem:[%s1457 + $0x74] sm:$0xf]
  %v1488 = vld [vmem:[%s1457 + $0x78] sm:$0xf]
  %v1489 = vld [vmem:[%s1457 + $0x7c] sm:$0xf]
  %v1490 = vld [vmem:[%s1457 + $0x80] sm:$0xf]
  %v1491 = vld [vmem:[%s1457 + $0x84] sm:$0xf]
  %v1492 = vld [vmem:[%s1457 + $0x88] sm:$0xf]
  %v1493 = vld [vmem:[%s1457 + $0x8c] sm:$0xf]
  %v1494 = vld [vmem:[%s1457 + $0x90] sm:$0xf]
  %v1495 = vld [vmem:[%s1457 + $0x94] sm:$0xf]
  %v1496 = vld [vmem:[%s1457 + $0x98] sm:$0xf]
  %v1497 = vld [vmem:[%s1457 + $0x9c] sm:$0xf]
  %v1498 = vld [vmem:[%s1457 + $0xa0] sm:$0xf]
  %v1499 = vld [vmem:[%s1457 + $0xa4] sm:$0xf]
  %v1500 = vld [vmem:[%s1457 + $0xa8] sm:$0xf]
  %v1501 = vld [vmem:[%s1457 + $0xac] sm:$0xf]
  %v1502 = vld [vmem:[%s1457 + $0xb0] sm:$0xf]
  %v1503 = vld [vmem:[%s1457 + $0xb4] sm:$0xf]
  %v1504 = vld [vmem:[%s1457 + $0xb8] sm:$0xf]
  %v1505 = vld [vmem:[%s1457 + $0xbc] sm:$0xf]
  %s1506 = scalar_lea.vmem %s7, 3
  %v1507 = vld [vmem:[%s1506] sm:$0x1]
  %v1509 = vlaneseq
  %v1510 = vshrl.u32 %v1509, 7
  %v1511 = vsub.s32 0, %v1510
  %v1512 = vrot.slane %v1507, %v1511
  %v1562 = vunpack.c.l.b16 %v1458
  %v1563 = vunpack.c.l.b16 %v1459
  %v1564 = vunpack.c.l.b16 %v1460
  %v1565 = vunpack.c.l.b16 %v1461
  %v1566 = vunpack.c.l.b16 %v1462
  %v1567 = vunpack.c.l.b16 %v1463
  %v1568 = vunpack.c.l.b16 %v1464
  %v1569 = vunpack.c.l.b16 %v1465
  %v1570 = vunpack.c.l.b16 %v1466
  %v1571 = vunpack.c.l.b16 %v1467
  %v1572 = vunpack.c.l.b16 %v1468
  %v1573 = vunpack.c.l.b16 %v1469
  %v1574 = vunpack.c.l.b16 %v1470
  %v1575 = vunpack.c.l.b16 %v1471
  %v1576 = vunpack.c.l.b16 %v1472
  %v1577 = vunpack.c.l.b16 %v1473
  %v1578 = vunpack.c.l.b16 %v1474
  %v1579 = vunpack.c.l.b16 %v1475
  %v1580 = vunpack.c.l.b16 %v1476
  %v1581 = vunpack.c.l.b16 %v1477
  %v1582 = vunpack.c.l.b16 %v1478
  %v1583 = vunpack.c.l.b16 %v1479
  %v1584 = vunpack.c.l.b16 %v1480
  %v1585 = vunpack.c.l.b16 %v1481
  %v1586 = vunpack.c.l.b16 %v1482
  %v1587 = vunpack.c.l.b16 %v1483
  %v1588 = vunpack.c.l.b16 %v1484
  %v1589 = vunpack.c.l.b16 %v1485
  %v1590 = vunpack.c.l.b16 %v1486
  %v1591 = vunpack.c.l.b16 %v1487
  %v1592 = vunpack.c.l.b16 %v1488
  %v1593 = vunpack.c.l.b16 %v1489
  %v1594 = vunpack.c.l.b16 %v1490
  %v1595 = vunpack.c.l.b16 %v1491
  %v1596 = vunpack.c.l.b16 %v1492
  %v1597 = vunpack.c.l.b16 %v1493
  %v1598 = vunpack.c.l.b16 %v1494
  %v1599 = vunpack.c.l.b16 %v1495
  %v1600 = vunpack.c.l.b16 %v1496
  %v1601 = vunpack.c.l.b16 %v1497
  %v1602 = vunpack.c.l.b16 %v1498
  %v1603 = vunpack.c.l.b16 %v1499
  %v1604 = vunpack.c.l.b16 %v1500
  %v1605 = vunpack.c.l.b16 %v1501
  %v1606 = vunpack.c.l.b16 %v1502
  %v1607 = vunpack.c.l.b16 %v1503
  %v1608 = vunpack.c.l.b16 %v1504
  %v1609 = vunpack.c.l.b16 %v1505
  %v1610 = vpack.c.b16 %v1563, %v1562
  %v1611 = vpack.c.b16 %v1565, %v1564
  %v1612 = vpack.c.b16 %v1567, %v1566
  %v1613 = vpack.c.b16 %v1569, %v1568
  %v1614 = vpack.c.b16 %v1571, %v1570
  %v1615 = vpack.c.b16 %v1573, %v1572
  %v1616 = vpack.c.b16 %v1575, %v1574
  %v1617 = vpack.c.b16 %v1577, %v1576
  %v1618 = vpack.c.b16 %v1579, %v1578
  %v1619 = vpack.c.b16 %v1581, %v1580
  %v1620 = vpack.c.b16 %v1583, %v1582
  %v1621 = vpack.c.b16 %v1585, %v1584
  %v1622 = vpack.c.b16 %v1587, %v1586
  %v1623 = vpack.c.b16 %v1589, %v1588
  %v1624 = vpack.c.b16 %v1591, %v1590
  %v1625 = vpack.c.b16 %v1593, %v1592
  %v1626 = vpack.c.b16 %v1595, %v1594
  %v1627 = vpack.c.b16 %v1597, %v1596
  %v1628 = vpack.c.b16 %v1599, %v1598
  %v1629 = vpack.c.b16 %v1601, %v1600
  %v1630 = vpack.c.b16 %v1603, %v1602
  %v1631 = vpack.c.b16 %v1605, %v1604
  %v1632 = vpack.c.b16 %v1607, %v1606
  %v1633 = vpack.c.b16 %v1609, %v1608
  %1658 = vmatprep.subr.bf16.mxu0 0
  %1659 = vmatpush1.bf16.msra.mxu0 %v1617
  %1660 = vmatprep.subr.bf16.mxu0 0
  %1661 = vmatpush1.bf16.msra.mxu0 %v1616
  %1662 = vmatprep.subr.bf16.mxu0 0
  %1663 = vmatpush1.bf16.msra.mxu0 %v1615
  %1664 = vmatprep.subr.bf16.mxu0 0
  %1665 = vmatpush1.bf16.msra.mxu0 %v1614
  %1666 = vmatprep.subr.bf16.mxu0 0
  %1667 = vmatpush1.bf16.msra.mxu0 %v1613
  %1668 = vmatprep.subr.bf16.mxu0 0
  %1669 = vmatpush1.bf16.msra.mxu0 %v1612
  %1670 = vmatprep.subr.bf16.mxu0 0
  %1671 = vmatpush1.bf16.msra.mxu0 %v1611
  %1672 = vmatprep.subr.bf16.mxu0 0
  %1673 = vmatpush1.bf16.msra.mxu0 %v1610
  %1674 = vmatprep.subr.bf16.mxu0 0
  %1675 = vmatpush2.bf16.msra.mxu0 %v1625
  %1676 = vmatprep.subr.bf16.mxu0 0
  %1677 = vmatpush2.bf16.msra.mxu0 %v1624
  %1678 = vmatprep.subr.bf16.mxu0 0
  %1679 = vmatpush2.bf16.msra.mxu0 %v1623
  %1680 = vmatprep.subr.bf16.mxu0 0
  %1681 = vmatpush2.bf16.msra.mxu0 %v1622
  %1682 = vmatprep.subr.bf16.mxu0 0
  %1683 = vmatpush2.bf16.msra.mxu0 %v1621
  %1684 = vmatprep.subr.bf16.mxu0 0
  %1685 = vmatpush2.bf16.msra.mxu0 %v1620
  %1686 = vmatprep.subr.bf16.mxu0 0
  %1687 = vmatpush2.bf16.msra.mxu0 %v1619
  %1688 = vmatprep.subr.bf16.mxu0 0
  %1689 = vmatpush2.bf16.msra.mxu0 %v1618
  %1690 = vmatprep.mubr.bf16.mxu0 %v1452
  %1691 = vmatmul.mubr.bf16.gmra.mxu0 %v1451
  %v1692 = vpop.f32.mrf.mxu0
  %v1693 = vadd.f32 %v1512, %v1692
  %v1694 = vpop.f32.mrf.mxu0
  %v1695 = vpop.f32.mrf.mxu0
  %v1696 = vadd.f32 %v1512, %v1695
  %v1697 = vpop.f32.mrf.mxu0
  %1698 = vmatprep.mubr.bf16.mxu0 %v1455
  %1699 = vmatmul.mubr.bf16.gmra.mxu0 %v1454
  %v1700 = vpop.f32.mrf.mxu0
  %v1701 = vadd.f32 %v1512, %v1700
  %v1702 = vpop.f32.mrf.mxu0
  %v1703 = vpop.f32.mrf.mxu0
  %v1704 = vadd.f32 %v1512, %v1703
  %v1705 = vpop.f32.mrf.mxu0
  %1706 = vdwg.mxu0
  %1707 = vmatprep.subr.bf16.mxu0 0
  %1708 = vmatpush1.bf16.msra.mxu0 %v1633
  %1709 = vmatprep.subr.bf16.mxu0 0
  %1710 = vmatpush1.bf16.msra.mxu0 %v1632
  %1711 = vmatprep.subr.bf16.mxu0 0
  %1712 = vmatpush1.bf16.msra.mxu0 %v1631
  %1713 = vmatprep.subr.bf16.mxu0 0
  %1714 = vmatpush1.bf16.msra.mxu0 %v1630
  %1715 = vmatprep.subr.bf16.mxu0 0
  %1716 = vmatpush1.bf16.msra.mxu0 %v1629
  %1717 = vmatprep.subr.bf16.mxu0 0
  %1718 = vmatpush1.bf16.msra.mxu0 %v1628
  %1719 = vmatprep.subr.bf16.mxu0 0
  %1720 = vmatpush1.bf16.msra.mxu0 %v1627
  %1721 = vmatprep.subr.bf16.mxu0 0
  %1722 = vmatpush1.bf16.msra.mxu0 %v1626
  %1723 = vmatprep.subr.bf16.mxu0 0
  %1724 = vmatpush2.bf16.msra.mxu0 0
  %1725 = vmatprep.subr.bf16.mxu0 0
  %1726 = vmatpush2.bf16.msra.mxu0 0
  %1727 = vmatprep.subr.bf16.mxu0 0
  %1728 = vmatpush2.bf16.msra.mxu0 0
  %1729 = vmatprep.subr.bf16.mxu0 0
  %1730 = vmatpush2.bf16.msra.mxu0 0
  %1731 = vmatprep.subr.bf16.mxu0 0
  %1732 = vmatpush2.bf16.msra.mxu0 0
  %1733 = vmatprep.subr.bf16.mxu0 0
  %1734 = vmatpush2.bf16.msra.mxu0 0
  %1735 = vmatprep.subr.bf16.mxu0 0
  %1736 = vmatpush2.bf16.msra.mxu0 0
  %1737 = vmatprep.subr.bf16.mxu0 0
  %1738 = vmatpush2.bf16.msra.mxu0 0
  %1739 = vmatprep.mubr.bf16.mxu0 0
  %1740 = vmatmul.mubr.bf16.gmra.mxu0 %v1453
  %v1741 = vpop.f32.mrf.mxu0
  %v1742 = vadd.f32 %v1693, %v1741
  %v1743 = vpop.f32.mrf.mxu0
  %v1744 = vpop.f32.mrf.mxu0
  %v1745 = vadd.f32 %v1696, %v1744
  %v1746 = vpop.f32.mrf.mxu0
  %1747 = vmatprep.mubr.bf16.mxu0 0
  %1748 = vmatmul.mubr.bf16.gmra.mxu0 %v1456
  %v1749 = vpop.f32.mrf.mxu0
  %v1750 = vadd.f32 %v1701, %v1749
  %v1751 = vpop.f32.mrf.mxu0
  %v1752 = vpop.f32.mrf.mxu0
  %v1753 = vadd.f32 %v1704, %v1752
  %v1754 = vpop.f32.mrf.mxu0
  %1755 = vdwg.mxu0
  %v1756 = vadd.f32 %v1044, %v1742
  %v1757 = vadd.f32 %v1047, %v1745
  %v1758 = vadd.f32 %v1052, %v1750
  %v1759 = vadd.f32 %v1055, %v1753
  %s1760 = scalar_lea.vmem [#allocation2], 64
  %1761 = vst [vmem:[%s1760] sm:$0xff] %v1756
  %1762 = vst [vmem:[%s1760 + $0x8] sm:$0xff] %v1757
  %1763 = vst [vmem:[%s1760 + $0x10] sm:$0xff] %v1758
  %1764 = vst [vmem:[%s1760 + $0x18] sm:$0xff] %v1759
  %v1765 = vld [vmem:[#allocation2] sm:$0xff]
  %v1766 = vld [vmem:[#allocation2 + $0x8] sm:$0xff]
  %v1767 = vld [vmem:[#allocation2 + $0x10] sm:$0xff]
  %v1768 = vld [vmem:[#allocation2 + $0x18] sm:$0xff]
  %v1769 = vmax.f32 %v1765, 0.0
  %v1770 = vmax.f32 %v1766, 0.0
  %v1771 = vmax.f32 %v1767, 0.0
  %v1772 = vmax.f32 %v1768, 0.0
  %v1774 = vrot.slane %v1772, 7
  %v1779 = vrot.slane %v1769, 7
  %v1780 = vrot.slane %v1770, 7
  %v1781 = vsel %vm370, %v1779, %v1780
  %v1782 = vrot.slane %v1771, 7
  %v1783 = vsel %vm370, %v1780, %v1782
  %v1784 = vsel %vm370, %v1782, %v1774
  %v1789 = vsel %vm370, %v1774, %v1779
  %v1790 = vsel %vm360, %v1789, 0.0
  %v1791 = vsel %vm361, %v1781, 0.0
  %v1792 = vsel %vm362, %v1783, 0.0
  %v1793 = vsel %vm363, %v1784, 0.0
  %v1794 = vrot.slane %v1769, 1
  %v1795 = vrot.slane %v1770, 1
  %v1796 = vsel %vm390, %v1794, %v1795
  %v1797 = vrot.slane %v1771, 1
  %v1798 = vsel %vm390, %v1795, %v1797
  %v1799 = vrot.slane %v1772, 1
  %v1800 = vsel %vm390, %v1797, %v1799
  %v1806 = vsel %vm390, %v1799, %v1794
  %v1807 = vsel %vm386, %v1796, 0.0
  %v1808 = vsel %vm387, %v1798, 0.0
  %v1809 = vsel %vm388, %v1800, 0.0
  %v1810 = vsel %vm389, %v1806, 0.0
  %v1811 = vpack.c.bf16 %v1791, %v1790
  %v1812 = vpack.c.bf16 %v1770, %v1769
  %v1813 = vpack.c.bf16 %v1808, %v1807
  %v1814 = vpack.c.bf16 %v1793, %v1792
  %v1815 = vpack.c.bf16 %v1772, %v1771
  %v1816 = vpack.c.bf16 %v1810, %v1809
  %s1817 = scalar_lea.vmem %s6, 768
  %v1818 = vld [vmem:[%s1817] sm:$0xf]
  %v1819 = vld [vmem:[%s1817 + $0x4] sm:$0xf]
  %v1820 = vld [vmem:[%s1817 + $0x8] sm:$0xf]
  %v1821 = vld [vmem:[%s1817 + $0xc] sm:$0xf]
  %v1822 = vld [vmem:[%s1817 + $0x10] sm:$0xf]
  %v1823 = vld [vmem:[%s1817 + $0x14] sm:$0xf]
  %v1824 = vld [vmem:[%s1817 + $0x18] sm:$0xf]
  %v1825 = vld [vmem:[%s1817 + $0x1c] sm:$0xf]
  %v1826 = vld [vmem:[%s1817 + $0x20] sm:$0xf]
  %v1827 = vld [vmem:[%s1817 + $0x24] sm:$0xf]
  %v1828 = vld [vmem:[%s1817 + $0x28] sm:$0xf]
  %v1829 = vld [vmem:[%s1817 + $0x2c] sm:$0xf]
  %v1830 = vld [vmem:[%s1817 + $0x30] sm:$0xf]
  %v1831 = vld [vmem:[%s1817 + $0x34] sm:$0xf]
  %v1832 = vld [vmem:[%s1817 + $0x38] sm:$0xf]
  %v1833 = vld [vmem:[%s1817 + $0x3c] sm:$0xf]
  %v1834 = vld [vmem:[%s1817 + $0x40] sm:$0xf]
  %v1835 = vld [vmem:[%s1817 + $0x44] sm:$0xf]
  %v1836 = vld [vmem:[%s1817 + $0x48] sm:$0xf]
  %v1837 = vld [vmem:[%s1817 + $0x4c] sm:$0xf]
  %v1838 = vld [vmem:[%s1817 + $0x50] sm:$0xf]
  %v1839 = vld [vmem:[%s1817 + $0x54] sm:$0xf]
  %v1840 = vld [vmem:[%s1817 + $0x58] sm:$0xf]
  %v1841 = vld [vmem:[%s1817 + $0x5c] sm:$0xf]
  %v1842 = vld [vmem:[%s1817 + $0x60] sm:$0xf]
  %v1843 = vld [vmem:[%s1817 + $0x64] sm:$0xf]
  %v1844 = vld [vmem:[%s1817 + $0x68] sm:$0xf]
  %v1845 = vld [vmem:[%s1817 + $0x6c] sm:$0xf]
  %v1846 = vld [vmem:[%s1817 + $0x70] sm:$0xf]
  %v1847 = vld [vmem:[%s1817 + $0x74] sm:$0xf]
  %v1848 = vld [vmem:[%s1817 + $0x78] sm:$0xf]
  %v1849 = vld [vmem:[%s1817 + $0x7c] sm:$0xf]
  %v1850 = vld [vmem:[%s1817 + $0x80] sm:$0xf]
  %v1851 = vld [vmem:[%s1817 + $0x84] sm:$0xf]
  %v1852 = vld [vmem:[%s1817 + $0x88] sm:$0xf]
  %v1853 = vld [vmem:[%s1817 + $0x8c] sm:$0xf]
  %v1854 = vld [vmem:[%s1817 + $0x90] sm:$0xf]
  %v1855 = vld [vmem:[%s1817 + $0x94] sm:$0xf]
  %v1856 = vld [vmem:[%s1817 + $0x98] sm:$0xf]
  %v1857 = vld [vmem:[%s1817 + $0x9c] sm:$0xf]
  %v1858 = vld [vmem:[%s1817 + $0xa0] sm:$0xf]
  %v1859 = vld [vmem:[%s1817 + $0xa4] sm:$0xf]
  %v1860 = vld [vmem:[%s1817 + $0xa8] sm:$0xf]
  %v1861 = vld [vmem:[%s1817 + $0xac] sm:$0xf]
  %v1862 = vld [vmem:[%s1817 + $0xb0] sm:$0xf]
  %v1863 = vld [vmem:[%s1817 + $0xb4] sm:$0xf]
  %v1864 = vld [vmem:[%s1817 + $0xb8] sm:$0xf]
  %v1865 = vld [vmem:[%s1817 + $0xbc] sm:$0xf]
  %s1866 = scalar_lea.vmem %s7, 4
  %v1867 = vld [vmem:[%s1866] sm:$0x1]
  %v1869 = vlaneseq
  %v1870 = vshrl.u32 %v1869, 7
  %v1871 = vsub.s32 0, %v1870
  %v1872 = vrot.slane %v1867, %v1871
  %v1922 = vunpack.c.l.b16 %v1818
  %v1923 = vunpack.c.l.b16 %v1819
  %v1924 = vunpack.c.l.b16 %v1820
  %v1925 = vunpack.c.l.b16 %v1821
  %v1926 = vunpack.c.l.b16 %v1822
  %v1927 = vunpack.c.l.b16 %v1823
  %v1928 = vunpack.c.l.b16 %v1824
  %v1929 = vunpack.c.l.b16 %v1825
  %v1930 = vunpack.c.l.b16 %v1826
  %v1931 = vunpack.c.l.b16 %v1827
  %v1932 = vunpack.c.l.b16 %v1828
  %v1933 = vunpack.c.l.b16 %v1829
  %v1934 = vunpack.c.l.b16 %v1830
  %v1935 = vunpack.c.l.b16 %v1831
  %v1936 = vunpack.c.l.b16 %v1832
  %v1937 = vunpack.c.l.b16 %v1833
  %v1938 = vunpack.c.l.b16 %v1834
  %v1939 = vunpack.c.l.b16 %v1835
  %v1940 = vunpack.c.l.b16 %v1836
  %v1941 = vunpack.c.l.b16 %v1837
  %v1942 = vunpack.c.l.b16 %v1838
  %v1943 = vunpack.c.l.b16 %v1839
  %v1944 = vunpack.c.l.b16 %v1840
  %v1945 = vunpack.c.l.b16 %v1841
  %v1946 = vunpack.c.l.b16 %v1842
  %v1947 = vunpack.c.l.b16 %v1843
  %v1948 = vunpack.c.l.b16 %v1844
  %v1949 = vunpack.c.l.b16 %v1845
  %v1950 = vunpack.c.l.b16 %v1846
  %v1951 = vunpack.c.l.b16 %v1847
  %v1952 = vunpack.c.l.b16 %v1848
  %v1953 = vunpack.c.l.b16 %v1849
  %v1954 = vunpack.c.l.b16 %v1850
  %v1955 = vunpack.c.l.b16 %v1851
  %v1956 = vunpack.c.l.b16 %v1852
  %v1957 = vunpack.c.l.b16 %v1853
  %v1958 = vunpack.c.l.b16 %v1854
  %v1959 = vunpack.c.l.b16 %v1855
  %v1960 = vunpack.c.l.b16 %v1856
  %v1961 = vunpack.c.l.b16 %v1857
  %v1962 = vunpack.c.l.b16 %v1858
  %v1963 = vunpack.c.l.b16 %v1859
  %v1964 = vunpack.c.l.b16 %v1860
  %v1965 = vunpack.c.l.b16 %v1861
  %v1966 = vunpack.c.l.b16 %v1862
  %v1967 = vunpack.c.l.b16 %v1863
  %v1968 = vunpack.c.l.b16 %v1864
  %v1969 = vunpack.c.l.b16 %v1865
  %v1970 = vpack.c.b16 %v1923, %v1922
  %v1971 = vpack.c.b16 %v1925, %v1924
  %v1972 = vpack.c.b16 %v1927, %v1926
  %v1973 = vpack.c.b16 %v1929, %v1928
  %v1974 = vpack.c.b16 %v1931, %v1930
  %v1975 = vpack.c.b16 %v1933, %v1932
  %v1976 = vpack.c.b16 %v1935, %v1934
  %v1977 = vpack.c.b16 %v1937, %v1936
  %v1978 = vpack.c.b16 %v1939, %v1938
  %v1979 = vpack.c.b16 %v1941, %v1940
  %v1980 = vpack.c.b16 %v1943, %v1942
  %v1981 = vpack.c.b16 %v1945, %v1944
  %v1982 = vpack.c.b16 %v1947, %v1946
  %v1983 = vpack.c.b16 %v1949, %v1948
  %v1984 = vpack.c.b16 %v1951, %v1950
  %v1985 = vpack.c.b16 %v1953, %v1952
  %v1986 = vpack.c.b16 %v1955, %v1954
  %v1987 = vpack.c.b16 %v1957, %v1956
  %v1988 = vpack.c.b16 %v1959, %v1958
  %v1989 = vpack.c.b16 %v1961, %v1960
  %v1990 = vpack.c.b16 %v1963, %v1962
  %v1991 = vpack.c.b16 %v1965, %v1964
  %v1992 = vpack.c.b16 %v1967, %v1966
  %v1993 = vpack.c.b16 %v1969, %v1968
  %2018 = vmatprep.subr.bf16.mxu0 0
  %2019 = vmatpush1.bf16.msra.mxu0 %v1977
  %2020 = vmatprep.subr.bf16.mxu0 0
  %2021 = vmatpush1.bf16.msra.mxu0 %v1976
  %2022 = vmatprep.subr.bf16.mxu0 0
  %2023 = vmatpush1.bf16.msra.mxu0 %v1975
  %2024 = vmatprep.subr.bf16.mxu0 0
  %2025 = vmatpush1.bf16.msra.mxu0 %v1974
  %2026 = vmatprep.subr.bf16.mxu0 0
  %2027 = vmatpush1.bf16.msra.mxu0 %v1973
  %2028 = vmatprep.subr.bf16.mxu0 0
  %2029 = vmatpush1.bf16.msra.mxu0 %v1972
  %2030 = vmatprep.subr.bf16.mxu0 0
  %2031 = vmatpush1.bf16.msra.mxu0 %v1971
  %2032 = vmatprep.subr.bf16.mxu0 0
  %2033 = vmatpush1.bf16.msra.mxu0 %v1970
  %2034 = vmatprep.subr.bf16.mxu0 0
  %2035 = vmatpush2.bf16.msra.mxu0 %v1985
  %2036 = vmatprep.subr.bf16.mxu0 0
  %2037 = vmatpush2.bf16.msra.mxu0 %v1984
  %2038 = vmatprep.subr.bf16.mxu0 0
  %2039 = vmatpush2.bf16.msra.mxu0 %v1983
  %2040 = vmatprep.subr.bf16.mxu0 0
  %2041 = vmatpush2.bf16.msra.mxu0 %v1982
  %2042 = vmatprep.subr.bf16.mxu0 0
  %2043 = vmatpush2.bf16.msra.mxu0 %v1981
  %2044 = vmatprep.subr.bf16.mxu0 0
  %2045 = vmatpush2.bf16.msra.mxu0 %v1980
  %2046 = vmatprep.subr.bf16.mxu0 0
  %2047 = vmatpush2.bf16.msra.mxu0 %v1979
  %2048 = vmatprep.subr.bf16.mxu0 0
  %2049 = vmatpush2.bf16.msra.mxu0 %v1978
  %2050 = vmatprep.mubr.bf16.mxu0 %v1812
  %2051 = vmatmul.mubr.bf16.gmra.mxu0 %v1811
  %v2052 = vpop.f32.mrf.mxu0
  %v2053 = vadd.f32 %v1872, %v2052
  %v2054 = vpop.f32.mrf.mxu0
  %v2055 = vpop.f32.mrf.mxu0
  %v2056 = vadd.f32 %v1872, %v2055
  %v2057 = vpop.f32.mrf.mxu0
  %2058 = vmatprep.mubr.bf16.mxu0 %v1815
  %2059 = vmatmul.mubr.bf16.gmra.mxu0 %v1814
  %v2060 = vpop.f32.mrf.mxu0
  %v2061 = vadd.f32 %v1872, %v2060
  %v2062 = vpop.f32.mrf.mxu0
  %v2063 = vpop.f32.mrf.mxu0
  %v2064 = vadd.f32 %v1872, %v2063
  %v2065 = vpop.f32.mrf.mxu0
  %2066 = vdwg.mxu0
  %2067 = vmatprep.subr.bf16.mxu0 0
  %2068 = vmatpush1.bf16.msra.mxu0 %v1993
  %2069 = vmatprep.subr.bf16.mxu0 0
  %2070 = vmatpush1.bf16.msra.mxu0 %v1992
  %2071 = vmatprep.subr.bf16.mxu0 0
  %2072 = vmatpush1.bf16.msra.mxu0 %v1991
  %2073 = vmatprep.subr.bf16.mxu0 0
  %2074 = vmatpush1.bf16.msra.mxu0 %v1990
  %2075 = vmatprep.subr.bf16.mxu0 0
  %2076 = vmatpush1.bf16.msra.mxu0 %v1989
  %2077 = vmatprep.subr.bf16.mxu0 0
  %2078 = vmatpush1.bf16.msra.mxu0 %v1988
  %2079 = vmatprep.subr.bf16.mxu0 0
  %2080 = vmatpush1.bf16.msra.mxu0 %v1987
  %2081 = vmatprep.subr.bf16.mxu0 0
  %2082 = vmatpush1.bf16.msra.mxu0 %v1986
  %2083 = vmatprep.subr.bf16.mxu0 0
  %2084 = vmatpush2.bf16.msra.mxu0 0
  %2085 = vmatprep.subr.bf16.mxu0 0
  %2086 = vmatpush2.bf16.msra.mxu0 0
  %2087 = vmatprep.subr.bf16.mxu0 0
  %2088 = vmatpush2.bf16.msra.mxu0 0
  %2089 = vmatprep.subr.bf16.mxu0 0
  %2090 = vmatpush2.bf16.msra.mxu0 0
  %2091 = vmatprep.subr.bf16.mxu0 0
  %2092 = vmatpush2.bf16.msra.mxu0 0
  %2093 = vmatprep.subr.bf16.mxu0 0
  %2094 = vmatpush2.bf16.msra.mxu0 0
  %2095 = vmatprep.subr.bf16.mxu0 0
  %2096 = vmatpush2.bf16.msra.mxu0 0
  %2097 = vmatprep.subr.bf16.mxu0 0
  %2098 = vmatpush2.bf16.msra.mxu0 0
  %2099 = vmatprep.mubr.bf16.mxu0 0
  %2100 = vmatmul.mubr.bf16.gmra.mxu0 %v1813
  %v2101 = vpop.f32.mrf.mxu0
  %v2102 = vadd.f32 %v2053, %v2101
  %v2103 = vpop.f32.mrf.mxu0
  %v2104 = vpop.f32.mrf.mxu0
  %v2105 = vadd.f32 %v2056, %v2104
  %v2106 = vpop.f32.mrf.mxu0
  %2107 = vmatprep.mubr.bf16.mxu0 0
  %2108 = vmatmul.mubr.bf16.gmra.mxu0 %v1816
  %v2109 = vpop.f32.mrf.mxu0
  %v2110 = vadd.f32 %v2061, %v2109
  %v2111 = vpop.f32.mrf.mxu0
  %v2112 = vpop.f32.mrf.mxu0
  %v2113 = vadd.f32 %v2064, %v2112
  %v2114 = vpop.f32.mrf.mxu0
  %2115 = vdwg.mxu0
  %v2116 = vmax.f32 %v2102, 0.0
  %v2117 = vmax.f32 %v2105, 0.0
  %v2118 = vmax.f32 %v2110, 0.0
  %v2119 = vmax.f32 %v2113, 0.0
  %v2121 = vrot.slane %v2119, 7
  %v2126 = vrot.slane %v2116, 7
  %v2127 = vrot.slane %v2117, 7
  %v2128 = vsel %vm370, %v2126, %v2127
  %v2129 = vrot.slane %v2118, 7
  %v2130 = vsel %vm370, %v2127, %v2129
  %v2131 = vsel %vm370, %v2129, %v2121
  %v2136 = vsel %vm370, %v2121, %v2126
  %v2137 = vsel %vm360, %v2136, 0.0
  %v2138 = vsel %vm361, %v2128, 0.0
  %v2139 = vsel %vm362, %v2130, 0.0
  %v2140 = vsel %vm363, %v2131, 0.0
  %v2141 = vrot.slane %v2116, 1
  %v2142 = vrot.slane %v2117, 1
  %v2143 = vsel %vm390, %v2141, %v2142
  %v2144 = vrot.slane %v2118, 1
  %v2145 = vsel %vm390, %v2142, %v2144
  %v2146 = vrot.slane %v2119, 1
  %v2147 = vsel %vm390, %v2144, %v2146
  %v2153 = vsel %vm390, %v2146, %v2141
  %v2154 = vsel %vm386, %v2143, 0.0
  %v2155 = vsel %vm387, %v2145, 0.0
  %v2156 = vsel %vm388, %v2147, 0.0
  %v2157 = vsel %vm389, %v2153, 0.0
  %v2158 = vpack.c.bf16 %v2138, %v2137
  %v2159 = vpack.c.bf16 %v2117, %v2116
  %v2160 = vpack.c.bf16 %v2155, %v2154
  %v2161 = vpack.c.bf16 %v2140, %v2139
  %v2162 = vpack.c.bf16 %v2119, %v2118
  %v2163 = vpack.c.bf16 %v2157, %v2156
  %s2164 = scalar_lea.vmem %s6, 960
  %v2165 = vld [vmem:[%s2164] sm:$0xf]
  %v2166 = vld [vmem:[%s2164 + $0x4] sm:$0xf]
  %v2167 = vld [vmem:[%s2164 + $0x8] sm:$0xf]
  %v2168 = vld [vmem:[%s2164 + $0xc] sm:$0xf]
  %v2169 = vld [vmem:[%s2164 + $0x10] sm:$0xf]
  %v2170 = vld [vmem:[%s2164 + $0x14] sm:$0xf]
  %v2171 = vld [vmem:[%s2164 + $0x18] sm:$0xf]
  %v2172 = vld [vmem:[%s2164 + $0x1c] sm:$0xf]
  %v2173 = vld [vmem:[%s2164 + $0x20] sm:$0xf]
  %v2174 = vld [vmem:[%s2164 + $0x24] sm:$0xf]
  %v2175 = vld [vmem:[%s2164 + $0x28] sm:$0xf]
  %v2176 = vld [vmem:[%s2164 + $0x2c] sm:$0xf]
  %v2177 = vld [vmem:[%s2164 + $0x30] sm:$0xf]
  %v2178 = vld [vmem:[%s2164 + $0x34] sm:$0xf]
  %v2179 = vld [vmem:[%s2164 + $0x38] sm:$0xf]
  %v2180 = vld [vmem:[%s2164 + $0x3c] sm:$0xf]
  %v2181 = vld [vmem:[%s2164 + $0x40] sm:$0xf]
  %v2182 = vld [vmem:[%s2164 + $0x44] sm:$0xf]
  %v2183 = vld [vmem:[%s2164 + $0x48] sm:$0xf]
  %v2184 = vld [vmem:[%s2164 + $0x4c] sm:$0xf]
  %v2185 = vld [vmem:[%s2164 + $0x50] sm:$0xf]
  %v2186 = vld [vmem:[%s2164 + $0x54] sm:$0xf]
  %v2187 = vld [vmem:[%s2164 + $0x58] sm:$0xf]
  %v2188 = vld [vmem:[%s2164 + $0x5c] sm:$0xf]
  %v2189 = vld [vmem:[%s2164 + $0x60] sm:$0xf]
  %v2190 = vld [vmem:[%s2164 + $0x64] sm:$0xf]
  %v2191 = vld [vmem:[%s2164 + $0x68] sm:$0xf]
  %v2192 = vld [vmem:[%s2164 + $0x6c] sm:$0xf]
  %v2193 = vld [vmem:[%s2164 + $0x70] sm:$0xf]
  %v2194 = vld [vmem:[%s2164 + $0x74] sm:$0xf]
  %v2195 = vld [vmem:[%s2164 + $0x78] sm:$0xf]
  %v2196 = vld [vmem:[%s2164 + $0x7c] sm:$0xf]
  %v2197 = vld [vmem:[%s2164 + $0x80] sm:$0xf]
  %v2198 = vld [vmem:[%s2164 + $0x84] sm:$0xf]
  %v2199 = vld [vmem:[%s2164 + $0x88] sm:$0xf]
  %v2200 = vld [vmem:[%s2164 + $0x8c] sm:$0xf]
  %v2201 = vld [vmem:[%s2164 + $0x90] sm:$0xf]
  %v2202 = vld [vmem:[%s2164 + $0x94] sm:$0xf]
  %v2203 = vld [vmem:[%s2164 + $0x98] sm:$0xf]
  %v2204 = vld [vmem:[%s2164 + $0x9c] sm:$0xf]
  %v2205 = vld [vmem:[%s2164 + $0xa0] sm:$0xf]
  %v2206 = vld [vmem:[%s2164 + $0xa4] sm:$0xf]
  %v2207 = vld [vmem:[%s2164 + $0xa8] sm:$0xf]
  %v2208 = vld [vmem:[%s2164 + $0xac] sm:$0xf]
  %v2209 = vld [vmem:[%s2164 + $0xb0] sm:$0xf]
  %v2210 = vld [vmem:[%s2164 + $0xb4] sm:$0xf]
  %v2211 = vld [vmem:[%s2164 + $0xb8] sm:$0xf]
  %v2212 = vld [vmem:[%s2164 + $0xbc] sm:$0xf]
  %s2213 = scalar_lea.vmem %s7, 5
  %v2214 = vld [vmem:[%s2213] sm:$0x1]
  %v2216 = vlaneseq
  %v2217 = vshrl.u32 %v2216, 7
  %v2218 = vsub.s32 0, %v2217
  %v2219 = vrot.slane %v2214, %v2218
  %v2269 = vunpack.c.l.b16 %v2165
  %v2270 = vunpack.c.l.b16 %v2166
  %v2271 = vunpack.c.l.b16 %v2167
  %v2272 = vunpack.c.l.b16 %v2168
  %v2273 = vunpack.c.l.b16 %v2169
  %v2274 = vunpack.c.l.b16 %v2170
  %v2275 = vunpack.c.l.b16 %v2171
  %v2276 = vunpack.c.l.b16 %v2172
  %v2277 = vunpack.c.l.b16 %v2173
  %v2278 = vunpack.c.l.b16 %v2174
  %v2279 = vunpack.c.l.b16 %v2175
  %v2280 = vunpack.c.l.b16 %v2176
  %v2281 = vunpack.c.l.b16 %v2177
  %v2282 = vunpack.c.l.b16 %v2178
  %v2283 = vunpack.c.l.b16 %v2179
  %v2284 = vunpack.c.l.b16 %v2180
  %v2285 = vunpack.c.l.b16 %v2181
  %v2286 = vunpack.c.l.b16 %v2182
  %v2287 = vunpack.c.l.b16 %v2183
  %v2288 = vunpack.c.l.b16 %v2184
  %v2289 = vunpack.c.l.b16 %v2185
  %v2290 = vunpack.c.l.b16 %v2186
  %v2291 = vunpack.c.l.b16 %v2187
  %v2292 = vunpack.c.l.b16 %v2188
  %v2293 = vunpack.c.l.b16 %v2189
  %v2294 = vunpack.c.l.b16 %v2190
  %v2295 = vunpack.c.l.b16 %v2191
  %v2296 = vunpack.c.l.b16 %v2192
  %v2297 = vunpack.c.l.b16 %v2193
  %v2298 = vunpack.c.l.b16 %v2194
  %v2299 = vunpack.c.l.b16 %v2195
  %v2300 = vunpack.c.l.b16 %v2196
  %v2301 = vunpack.c.l.b16 %v2197
  %v2302 = vunpack.c.l.b16 %v2198
  %v2303 = vunpack.c.l.b16 %v2199
  %v2304 = vunpack.c.l.b16 %v2200
  %v2305 = vunpack.c.l.b16 %v2201
  %v2306 = vunpack.c.l.b16 %v2202
  %v2307 = vunpack.c.l.b16 %v2203
  %v2308 = vunpack.c.l.b16 %v2204
  %v2309 = vunpack.c.l.b16 %v2205
  %v2310 = vunpack.c.l.b16 %v2206
  %v2311 = vunpack.c.l.b16 %v2207
  %v2312 = vunpack.c.l.b16 %v2208
  %v2313 = vunpack.c.l.b16 %v2209
  %v2314 = vunpack.c.l.b16 %v2210
  %v2315 = vunpack.c.l.b16 %v2211
  %v2316 = vunpack.c.l.b16 %v2212
  %v2317 = vpack.c.b16 %v2270, %v2269
  %v2318 = vpack.c.b16 %v2272, %v2271
  %v2319 = vpack.c.b16 %v2274, %v2273
  %v2320 = vpack.c.b16 %v2276, %v2275
  %v2321 = vpack.c.b16 %v2278, %v2277
  %v2322 = vpack.c.b16 %v2280, %v2279
  %v2323 = vpack.c.b16 %v2282, %v2281
  %v2324 = vpack.c.b16 %v2284, %v2283
  %v2325 = vpack.c.b16 %v2286, %v2285
  %v2326 = vpack.c.b16 %v2288, %v2287
  %v2327 = vpack.c.b16 %v2290, %v2289
  %v2328 = vpack.c.b16 %v2292, %v2291
  %v2329 = vpack.c.b16 %v2294, %v2293
  %v2330 = vpack.c.b16 %v2296, %v2295
  %v2331 = vpack.c.b16 %v2298, %v2297
  %v2332 = vpack.c.b16 %v2300, %v2299
  %v2333 = vpack.c.b16 %v2302, %v2301
  %v2334 = vpack.c.b16 %v2304, %v2303
  %v2335 = vpack.c.b16 %v2306, %v2305
  %v2336 = vpack.c.b16 %v2308, %v2307
  %v2337 = vpack.c.b16 %v2310, %v2309
  %v2338 = vpack.c.b16 %v2312, %v2311
  %v2339 = vpack.c.b16 %v2314, %v2313
  %v2340 = vpack.c.b16 %v2316, %v2315
  %2365 = vmatprep.subr.bf16.mxu0 0
  %2366 = vmatpush1.bf16.msra.mxu0 %v2324
  %2367 = vmatprep.subr.bf16.mxu0 0
  %2368 = vmatpush1.bf16.msra.mxu0 %v2323
  %2369 = vmatprep.subr.bf16.mxu0 0
  %2370 = vmatpush1.bf16.msra.mxu0 %v2322
  %2371 = vmatprep.subr.bf16.mxu0 0
  %2372 = vmatpush1.bf16.msra.mxu0 %v2321
  %2373 = vmatprep.subr.bf16.mxu0 0
  %2374 = vmatpush1.bf16.msra.mxu0 %v2320
  %2375 = vmatprep.subr.bf16.mxu0 0
  %2376 = vmatpush1.bf16.msra.mxu0 %v2319
  %2377 = vmatprep.subr.bf16.mxu0 0
  %2378 = vmatpush1.bf16.msra.mxu0 %v2318
  %2379 = vmatprep.subr.bf16.mxu0 0
  %2380 = vmatpush1.bf16.msra.mxu0 %v2317
  %2381 = vmatprep.subr.bf16.mxu0 0
  %2382 = vmatpush2.bf16.msra.mxu0 %v2332
  %2383 = vmatprep.subr.bf16.mxu0 0
  %2384 = vmatpush2.bf16.msra.mxu0 %v2331
  %2385 = vmatprep.subr.bf16.mxu0 0
  %2386 = vmatpush2.bf16.msra.mxu0 %v2330
  %2387 = vmatprep.subr.bf16.mxu0 0
  %2388 = vmatpush2.bf16.msra.mxu0 %v2329
  %2389 = vmatprep.subr.bf16.mxu0 0
  %2390 = vmatpush2.bf16.msra.mxu0 %v2328
  %2391 = vmatprep.subr.bf16.mxu0 0
  %2392 = vmatpush2.bf16.msra.mxu0 %v2327
  %2393 = vmatprep.subr.bf16.mxu0 0
  %2394 = vmatpush2.bf16.msra.mxu0 %v2326
  %2395 = vmatprep.subr.bf16.mxu0 0
  %2396 = vmatpush2.bf16.msra.mxu0 %v2325
  %2397 = vmatprep.mubr.bf16.mxu0 %v2159
  %2398 = vmatmul.mubr.bf16.gmra.mxu0 %v2158
  %v2399 = vpop.f32.mrf.mxu0
  %v2400 = vadd.f32 %v2219, %v2399
  %v2401 = vpop.f32.mrf.mxu0
  %v2402 = vpop.f32.mrf.mxu0
  %v2403 = vadd.f32 %v2219, %v2402
  %v2404 = vpop.f32.mrf.mxu0
  %2405 = vmatprep.mubr.bf16.mxu0 %v2162
  %2406 = vmatmul.mubr.bf16.gmra.mxu0 %v2161
  %v2407 = vpop.f32.mrf.mxu0
  %v2408 = vadd.f32 %v2219, %v2407
  %v2409 = vpop.f32.mrf.mxu0
  %v2410 = vpop.f32.mrf.mxu0
  %v2411 = vadd.f32 %v2219, %v2410
  %v2412 = vpop.f32.mrf.mxu0
  %2413 = vdwg.mxu0
  %2414 = vmatprep.subr.bf16.mxu0 0
  %2415 = vmatpush1.bf16.msra.mxu0 %v2340
  %2416 = vmatprep.subr.bf16.mxu0 0
  %2417 = vmatpush1.bf16.msra.mxu0 %v2339
  %2418 = vmatprep.subr.bf16.mxu0 0
  %2419 = vmatpush1.bf16.msra.mxu0 %v2338
  %2420 = vmatprep.subr.bf16.mxu0 0
  %2421 = vmatpush1.bf16.msra.mxu0 %v2337
  %2422 = vmatprep.subr.bf16.mxu0 0
  %2423 = vmatpush1.bf16.msra.mxu0 %v2336
  %2424 = vmatprep.subr.bf16.mxu0 0
  %2425 = vmatpush1.bf16.msra.mxu0 %v2335
  %2426 = vmatprep.subr.bf16.mxu0 0
  %2427 = vmatpush1.bf16.msra.mxu0 %v2334
  %2428 = vmatprep.subr.bf16.mxu0 0
  %2429 = vmatpush1.bf16.msra.mxu0 %v2333
  %2430 = vmatprep.subr.bf16.mxu0 0
  %2431 = vmatpush2.bf16.msra.mxu0 0
  %2432 = vmatprep.subr.bf16.mxu0 0
  %2433 = vmatpush2.bf16.msra.mxu0 0
  %2434 = vmatprep.subr.bf16.mxu0 0
  %2435 = vmatpush2.bf16.msra.mxu0 0
  %2436 = vmatprep.subr.bf16.mxu0 0
  %2437 = vmatpush2.bf16.msra.mxu0 0
  %2438 = vmatprep.subr.bf16.mxu0 0
  %2439 = vmatpush2.bf16.msra.mxu0 0
  %2440 = vmatprep.subr.bf16.mxu0 0
  %2441 = vmatpush2.bf16.msra.mxu0 0
  %2442 = vmatprep.subr.bf16.mxu0 0
  %2443 = vmatpush2.bf16.msra.mxu0 0
  %2444 = vmatprep.subr.bf16.mxu0 0
  %2445 = vmatpush2.bf16.msra.mxu0 0
  %2446 = vmatprep.mubr.bf16.mxu0 0
  %2447 = vmatmul.mubr.bf16.gmra.mxu0 %v2160
  %v2448 = vpop.f32.mrf.mxu0
  %v2449 = vadd.f32 %v2400, %v2448
  %v2450 = vpop.f32.mrf.mxu0
  %v2451 = vpop.f32.mrf.mxu0
  %v2452 = vadd.f32 %v2403, %v2451
  %v2453 = vpop.f32.mrf.mxu0
  %2454 = vmatprep.mubr.bf16.mxu0 0
  %2455 = vmatmul.mubr.bf16.gmra.mxu0 %v2163
  %v2456 = vpop.f32.mrf.mxu0
  %v2457 = vadd.f32 %v2408, %v2456
  %v2458 = vpop.f32.mrf.mxu0
  %v2459 = vpop.f32.mrf.mxu0
  %v2460 = vadd.f32 %v2411, %v2459
  %v2461 = vpop.f32.mrf.mxu0
  %2462 = vdwg.mxu0
  %v2463 = vld [vmem:[%s347] sm:$0xff]
  %v2464 = vld [vmem:[%s347 + $0x8] sm:$0xff]
  %v2465 = vld [vmem:[%s347 + $0x10] sm:$0xff]
  %v2466 = vld [vmem:[%s347 + $0x18] sm:$0xff]
  %v2467 = vmax.f32 %v2463, 0.0
  %v2468 = vmax.f32 %v2464, 0.0
  %v2469 = vmax.f32 %v2465, 0.0
  %v2470 = vmax.f32 %v2466, 0.0
  %v2472 = vrot.slane %v2470, 7
  %v2477 = vrot.slane %v2467, 7
  %v2478 = vrot.slane %v2468, 7
  %v2479 = vsel %vm370, %v2477, %v2478
  %v2480 = vrot.slane %v2469, 7
  %v2481 = vsel %vm370, %v2478, %v2480
  %v2482 = vsel %vm370, %v2480, %v2472
  %v2487 = vsel %vm370, %v2472, %v2477
  %v2488 = vsel %vm360, %v2487, 0.0
  %v2489 = vsel %vm361, %v2479, 0.0
  %v2490 = vsel %vm362, %v2481, 0.0
  %v2491 = vsel %vm363, %v2482, 0.0
  %v2492 = vrot.slane %v2467, 1
  %v2493 = vrot.slane %v2468, 1
  %v2494 = vsel %vm390, %v2492, %v2493
  %v2495 = vrot.slane %v2469, 1
  %v2496 = vsel %vm390, %v2493, %v2495
  %v2497 = vrot.slane %v2470, 1
  %v2498 = vsel %vm390, %v2495, %v2497
  %v2504 = vsel %vm390, %v2497, %v2492
  %v2505 = vsel %vm386, %v2494, 0.0
  %v2506 = vsel %vm387, %v2496, 0.0
  %v2507 = vsel %vm388, %v2498, 0.0
  %v2508 = vsel %vm389, %v2504, 0.0
  %v2509 = vpack.c.bf16 %v2489, %v2488
  %v2510 = vpack.c.bf16 %v2468, %v2467
  %v2511 = vpack.c.bf16 %v2506, %v2505
  %v2512 = vpack.c.bf16 %v2491, %v2490
  %v2513 = vpack.c.bf16 %v2470, %v2469
  %v2514 = vpack.c.bf16 %v2508, %v2507
  %s2515 = scalar_lea.vmem %s6, 1152
  %v2516 = vld [vmem:[%s2515] sm:$0xf]
  %v2517 = vld [vmem:[%s2515 + $0x4] sm:$0xf]
  %v2518 = vld [vmem:[%s2515 + $0x8] sm:$0xf]
  %v2519 = vld [vmem:[%s2515 + $0xc] sm:$0xf]
  %v2520 = vld [vmem:[%s2515 + $0x10] sm:$0xf]
  %v2521 = vld [vmem:[%s2515 + $0x14] sm:$0xf]
  %v2522 = vld [vmem:[%s2515 + $0x18] sm:$0xf]
  %v2523 = vld [vmem:[%s2515 + $0x1c] sm:$0xf]
  %v2524 = vld [vmem:[%s2515 + $0x20] sm:$0xf]
  %v2525 = vld [vmem:[%s2515 + $0x24] sm:$0xf]
  %v2526 = vld [vmem:[%s2515 + $0x28] sm:$0xf]
  %v2527 = vld [vmem:[%s2515 + $0x2c] sm:$0xf]
  %v2528 = vld [vmem:[%s2515 + $0x30] sm:$0xf]
  %v2529 = vld [vmem:[%s2515 + $0x34] sm:$0xf]
  %v2530 = vld [vmem:[%s2515 + $0x38] sm:$0xf]
  %v2531 = vld [vmem:[%s2515 + $0x3c] sm:$0xf]
  %v2532 = vld [vmem:[%s2515 + $0x40] sm:$0xf]
  %v2533 = vld [vmem:[%s2515 + $0x44] sm:$0xf]
  %v2534 = vld [vmem:[%s2515 + $0x48] sm:$0xf]
  %v2535 = vld [vmem:[%s2515 + $0x4c] sm:$0xf]
  %v2536 = vld [vmem:[%s2515 + $0x50] sm:$0xf]
  %v2537 = vld [vmem:[%s2515 + $0x54] sm:$0xf]
  %v2538 = vld [vmem:[%s2515 + $0x58] sm:$0xf]
  %v2539 = vld [vmem:[%s2515 + $0x5c] sm:$0xf]
  %v2540 = vld [vmem:[%s2515 + $0x60] sm:$0xf]
  %v2541 = vld [vmem:[%s2515 + $0x64] sm:$0xf]
  %v2542 = vld [vmem:[%s2515 + $0x68] sm:$0xf]
  %v2543 = vld [vmem:[%s2515 + $0x6c] sm:$0xf]
  %v2544 = vld [vmem:[%s2515 + $0x70] sm:$0xf]
  %v2545 = vld [vmem:[%s2515 + $0x74] sm:$0xf]
  %v2546 = vld [vmem:[%s2515 + $0x78] sm:$0xf]
  %v2547 = vld [vmem:[%s2515 + $0x7c] sm:$0xf]
  %v2548 = vld [vmem:[%s2515 + $0x80] sm:$0xf]
  %v2549 = vld [vmem:[%s2515 + $0x84] sm:$0xf]
  %v2550 = vld [vmem:[%s2515 + $0x88] sm:$0xf]
  %v2551 = vld [vmem:[%s2515 + $0x8c] sm:$0xf]
  %v2552 = vld [vmem:[%s2515 + $0x90] sm:$0xf]
  %v2553 = vld [vmem:[%s2515 + $0x94] sm:$0xf]
  %v2554 = vld [vmem:[%s2515 + $0x98] sm:$0xf]
  %v2555 = vld [vmem:[%s2515 + $0x9c] sm:$0xf]
  %v2556 = vld [vmem:[%s2515 + $0xa0] sm:$0xf]
  %v2557 = vld [vmem:[%s2515 + $0xa4] sm:$0xf]
  %v2558 = vld [vmem:[%s2515 + $0xa8] sm:$0xf]
  %v2559 = vld [vmem:[%s2515 + $0xac] sm:$0xf]
  %v2560 = vld [vmem:[%s2515 + $0xb0] sm:$0xf]
  %v2561 = vld [vmem:[%s2515 + $0xb4] sm:$0xf]
  %v2562 = vld [vmem:[%s2515 + $0xb8] sm:$0xf]
  %v2563 = vld [vmem:[%s2515 + $0xbc] sm:$0xf]
  %s2564 = scalar_lea.vmem %s7, 6
  %v2565 = vld [vmem:[%s2564] sm:$0x1]
  %v2567 = vlaneseq
  %v2568 = vshrl.u32 %v2567, 7
  %v2569 = vsub.s32 0, %v2568
  %v2570 = vrot.slane %v2565, %v2569
  %v2620 = vunpack.c.l.b16 %v2516
  %v2621 = vunpack.c.l.b16 %v2517
  %v2622 = vunpack.c.l.b16 %v2518
  %v2623 = vunpack.c.l.b16 %v2519
  %v2624 = vunpack.c.l.b16 %v2520
  %v2625 = vunpack.c.l.b16 %v2521
  %v2626 = vunpack.c.l.b16 %v2522
  %v2627 = vunpack.c.l.b16 %v2523
  %v2628 = vunpack.c.l.b16 %v2524
  %v2629 = vunpack.c.l.b16 %v2525
  %v2630 = vunpack.c.l.b16 %v2526
  %v2631 = vunpack.c.l.b16 %v2527
  %v2632 = vunpack.c.l.b16 %v2528
  %v2633 = vunpack.c.l.b16 %v2529
  %v2634 = vunpack.c.l.b16 %v2530
  %v2635 = vunpack.c.l.b16 %v2531
  %v2636 = vunpack.c.l.b16 %v2532
  %v2637 = vunpack.c.l.b16 %v2533
  %v2638 = vunpack.c.l.b16 %v2534
  %v2639 = vunpack.c.l.b16 %v2535
  %v2640 = vunpack.c.l.b16 %v2536
  %v2641 = vunpack.c.l.b16 %v2537
  %v2642 = vunpack.c.l.b16 %v2538
  %v2643 = vunpack.c.l.b16 %v2539
  %v2644 = vunpack.c.l.b16 %v2540
  %v2645 = vunpack.c.l.b16 %v2541
  %v2646 = vunpack.c.l.b16 %v2542
  %v2647 = vunpack.c.l.b16 %v2543
  %v2648 = vunpack.c.l.b16 %v2544
  %v2649 = vunpack.c.l.b16 %v2545
  %v2650 = vunpack.c.l.b16 %v2546
  %v2651 = vunpack.c.l.b16 %v2547
  %v2652 = vunpack.c.l.b16 %v2548
  %v2653 = vunpack.c.l.b16 %v2549
  %v2654 = vunpack.c.l.b16 %v2550
  %v2655 = vunpack.c.l.b16 %v2551
  %v2656 = vunpack.c.l.b16 %v2552
  %v2657 = vunpack.c.l.b16 %v2553
  %v2658 = vunpack.c.l.b16 %v2554
  %v2659 = vunpack.c.l.b16 %v2555
  %v2660 = vunpack.c.l.b16 %v2556
  %v2661 = vunpack.c.l.b16 %v2557
  %v2662 = vunpack.c.l.b16 %v2558
  %v2663 = vunpack.c.l.b16 %v2559
  %v2664 = vunpack.c.l.b16 %v2560
  %v2665 = vunpack.c.l.b16 %v2561
  %v2666 = vunpack.c.l.b16 %v2562
  %v2667 = vunpack.c.l.b16 %v2563
  %v2668 = vpack.c.b16 %v2621, %v2620
  %v2669 = vpack.c.b16 %v2623, %v2622
  %v2670 = vpack.c.b16 %v2625, %v2624
  %v2671 = vpack.c.b16 %v2627, %v2626
  %v2672 = vpack.c.b16 %v2629, %v2628
  %v2673 = vpack.c.b16 %v2631, %v2630
  %v2674 = vpack.c.b16 %v2633, %v2632
  %v2675 = vpack.c.b16 %v2635, %v2634
  %v2676 = vpack.c.b16 %v2637, %v2636
  %v2677 = vpack.c.b16 %v2639, %v2638
  %v2678 = vpack.c.b16 %v2641, %v2640
  %v2679 = vpack.c.b16 %v2643, %v2642
  %v2680 = vpack.c.b16 %v2645, %v2644
  %v2681 = vpack.c.b16 %v2647, %v2646
  %v2682 = vpack.c.b16 %v2649, %v2648
  %v2683 = vpack.c.b16 %v2651, %v2650
  %v2684 = vpack.c.b16 %v2653, %v2652
  %v2685 = vpack.c.b16 %v2655, %v2654
  %v2686 = vpack.c.b16 %v2657, %v2656
  %v2687 = vpack.c.b16 %v2659, %v2658
  %v2688 = vpack.c.b16 %v2661, %v2660
  %v2689 = vpack.c.b16 %v2663, %v2662
  %v2690 = vpack.c.b16 %v2665, %v2664
  %v2691 = vpack.c.b16 %v2667, %v2666
  %2716 = vmatprep.subr.bf16.mxu0 0
  %2717 = vmatpush1.bf16.msra.mxu0 %v2675
  %2718 = vmatprep.subr.bf16.mxu0 0
  %2719 = vmatpush1.bf16.msra.mxu0 %v2674
  %2720 = vmatprep.subr.bf16.mxu0 0
  %2721 = vmatpush1.bf16.msra.mxu0 %v2673
  %2722 = vmatprep.subr.bf16.mxu0 0
  %2723 = vmatpush1.bf16.msra.mxu0 %v2672
  %2724 = vmatprep.subr.bf16.mxu0 0
  %2725 = vmatpush1.bf16.msra.mxu0 %v2671
  %2726 = vmatprep.subr.bf16.mxu0 0
  %2727 = vmatpush1.bf16.msra.mxu0 %v2670
  %2728 = vmatprep.subr.bf16.mxu0 0
  %2729 = vmatpush1.bf16.msra.mxu0 %v2669
  %2730 = vmatprep.subr.bf16.mxu0 0
  %2731 = vmatpush1.bf16.msra.mxu0 %v2668
  %2732 = vmatprep.subr.bf16.mxu0 0
  %2733 = vmatpush2.bf16.msra.mxu0 %v2683
  %2734 = vmatprep.subr.bf16.mxu0 0
  %2735 = vmatpush2.bf16.msra.mxu0 %v2682
  %2736 = vmatprep.subr.bf16.mxu0 0
  %2737 = vmatpush2.bf16.msra.mxu0 %v2681
  %2738 = vmatprep.subr.bf16.mxu0 0
  %2739 = vmatpush2.bf16.msra.mxu0 %v2680
  %2740 = vmatprep.subr.bf16.mxu0 0
  %2741 = vmatpush2.bf16.msra.mxu0 %v2679
  %2742 = vmatprep.subr.bf16.mxu0 0
  %2743 = vmatpush2.bf16.msra.mxu0 %v2678
  %2744 = vmatprep.subr.bf16.mxu0 0
  %2745 = vmatpush2.bf16.msra.mxu0 %v2677
  %2746 = vmatprep.subr.bf16.mxu0 0
  %2747 = vmatpush2.bf16.msra.mxu0 %v2676
  %2748 = vmatprep.mubr.bf16.mxu0 %v2510
  %2749 = vmatmul.mubr.bf16.gmra.mxu0 %v2509
  %v2750 = vpop.f32.mrf.mxu0
  %v2751 = vadd.f32 %v2570, %v2750
  %v2752 = vpop.f32.mrf.mxu0
  %v2753 = vpop.f32.mrf.mxu0
  %v2754 = vadd.f32 %v2570, %v2753
  %v2755 = vpop.f32.mrf.mxu0
  %2756 = vmatprep.mubr.bf16.mxu0 %v2513
  %2757 = vmatmul.mubr.bf16.gmra.mxu0 %v2512
  %v2758 = vpop.f32.mrf.mxu0
  %v2759 = vadd.f32 %v2570, %v2758
  %v2760 = vpop.f32.mrf.mxu0
  %v2761 = vpop.f32.mrf.mxu0
  %v2762 = vadd.f32 %v2570, %v2761
  %v2763 = vpop.f32.mrf.mxu0
  %2764 = vdwg.mxu0
  %2765 = vmatprep.subr.bf16.mxu0 0
  %2766 = vmatpush1.bf16.msra.mxu0 %v2691
  %2767 = vmatprep.subr.bf16.mxu0 0
  %2768 = vmatpush1.bf16.msra.mxu0 %v2690
  %2769 = vmatprep.subr.bf16.mxu0 0
  %2770 = vmatpush1.bf16.msra.mxu0 %v2689
  %2771 = vmatprep.subr.bf16.mxu0 0
  %2772 = vmatpush1.bf16.msra.mxu0 %v2688
  %2773 = vmatprep.subr.bf16.mxu0 0
  %2774 = vmatpush1.bf16.msra.mxu0 %v2687
  %2775 = vmatprep.subr.bf16.mxu0 0
  %2776 = vmatpush1.bf16.msra.mxu0 %v2686
  %2777 = vmatprep.subr.bf16.mxu0 0
  %2778 = vmatpush1.bf16.msra.mxu0 %v2685
  %2779 = vmatprep.subr.bf16.mxu0 0
  %2780 = vmatpush1.bf16.msra.mxu0 %v2684
  %2781 = vmatprep.subr.bf16.mxu0 0
  %2782 = vmatpush2.bf16.msra.mxu0 0
  %2783 = vmatprep.subr.bf16.mxu0 0
  %2784 = vmatpush2.bf16.msra.mxu0 0
  %2785 = vmatprep.subr.bf16.mxu0 0
  %2786 = vmatpush2.bf16.msra.mxu0 0
  %2787 = vmatprep.subr.bf16.mxu0 0
  %2788 = vmatpush2.bf16.msra.mxu0 0
  %2789 = vmatprep.subr.bf16.mxu0 0
  %2790 = vmatpush2.bf16.msra.mxu0 0
  %2791 = vmatprep.subr.bf16.mxu0 0
  %2792 = vmatpush2.bf16.msra.mxu0 0
  %2793 = vmatprep.subr.bf16.mxu0 0
  %2794 = vmatpush2.bf16.msra.mxu0 0
  %2795 = vmatprep.subr.bf16.mxu0 0
  %2796 = vmatpush2.bf16.msra.mxu0 0
  %2797 = vmatprep.mubr.bf16.mxu0 0
  %2798 = vmatmul.mubr.bf16.gmra.mxu0 %v2511
  %v2799 = vpop.f32.mrf.mxu0
  %v2800 = vadd.f32 %v2751, %v2799
  %v2801 = vpop.f32.mrf.mxu0
  %v2802 = vpop.f32.mrf.mxu0
  %v2803 = vadd.f32 %v2754, %v2802
  %v2804 = vpop.f32.mrf.mxu0
  %2805 = vmatprep.mubr.bf16.mxu0 0
  %2806 = vmatmul.mubr.bf16.gmra.mxu0 %v2514
  %v2807 = vpop.f32.mrf.mxu0
  %v2808 = vadd.f32 %v2759, %v2807
  %v2809 = vpop.f32.mrf.mxu0
  %v2810 = vpop.f32.mrf.mxu0
  %v2811 = vadd.f32 %v2762, %v2810
  %v2812 = vpop.f32.mrf.mxu0
  %2813 = vdwg.mxu0
  %v2814 = vmax.f32 %v2800, 0.0
  %v2815 = vmax.f32 %v2803, 0.0
  %v2816 = vmax.f32 %v2808, 0.0
  %v2817 = vmax.f32 %v2811, 0.0
  %v2819 = vrot.slane %v2817, 7
  %v2824 = vrot.slane %v2814, 7
  %v2825 = vrot.slane %v2815, 7
  %v2826 = vsel %vm370, %v2824, %v2825
  %v2827 = vrot.slane %v2816, 7
  %v2828 = vsel %vm370, %v2825, %v2827
  %v2829 = vsel %vm370, %v2827, %v2819
  %v2834 = vsel %vm370, %v2819, %v2824
  %v2835 = vsel %vm360, %v2834, 0.0
  %v2836 = vsel %vm361, %v2826, 0.0
  %v2837 = vsel %vm362, %v2828, 0.0
  %v2838 = vsel %vm363, %v2829, 0.0
  %v2839 = vrot.slane %v2814, 1
  %v2840 = vrot.slane %v2815, 1
  %v2841 = vsel %vm390, %v2839, %v2840
  %v2842 = vrot.slane %v2816, 1
  %v2843 = vsel %vm390, %v2840, %v2842
  %v2844 = vrot.slane %v2817, 1
  %v2845 = vsel %vm390, %v2842, %v2844
  %v2851 = vsel %vm390, %v2844, %v2839
  %v2852 = vsel %vm386, %v2841, 0.0
  %v2853 = vsel %vm387, %v2843, 0.0
  %v2854 = vsel %vm388, %v2845, 0.0
  %v2855 = vsel %vm389, %v2851, 0.0
  %v2856 = vpack.c.bf16 %v2836, %v2835
  %v2857 = vpack.c.bf16 %v2815, %v2814
  %v2858 = vpack.c.bf16 %v2853, %v2852
  %v2859 = vpack.c.bf16 %v2838, %v2837
  %v2860 = vpack.c.bf16 %v2817, %v2816
  %v2861 = vpack.c.bf16 %v2855, %v2854
  %s2862 = scalar_lea.vmem %s6, 1344
  %v2863 = vld [vmem:[%s2862] sm:$0xf]
  %v2864 = vld [vmem:[%s2862 + $0x4] sm:$0xf]
  %v2865 = vld [vmem:[%s2862 + $0x8] sm:$0xf]
  %v2866 = vld [vmem:[%s2862 + $0xc] sm:$0xf]
  %v2867 = vld [vmem:[%s2862 + $0x10] sm:$0xf]
  %v2868 = vld [vmem:[%s2862 + $0x14] sm:$0xf]
  %v2869 = vld [vmem:[%s2862 + $0x18] sm:$0xf]
  %v2870 = vld [vmem:[%s2862 + $0x1c] sm:$0xf]
  %v2871 = vld [vmem:[%s2862 + $0x20] sm:$0xf]
  %v2872 = vld [vmem:[%s2862 + $0x24] sm:$0xf]
  %v2873 = vld [vmem:[%s2862 + $0x28] sm:$0xf]
  %v2874 = vld [vmem:[%s2862 + $0x2c] sm:$0xf]
  %v2875 = vld [vmem:[%s2862 + $0x30] sm:$0xf]
  %v2876 = vld [vmem:[%s2862 + $0x34] sm:$0xf]
  %v2877 = vld [vmem:[%s2862 + $0x38] sm:$0xf]
  %v2878 = vld [vmem:[%s2862 + $0x3c] sm:$0xf]
  %v2879 = vld [vmem:[%s2862 + $0x40] sm:$0xf]
  %v2880 = vld [vmem:[%s2862 + $0x44] sm:$0xf]
  %v2881 = vld [vmem:[%s2862 + $0x48] sm:$0xf]
  %v2882 = vld [vmem:[%s2862 + $0x4c] sm:$0xf]
  %v2883 = vld [vmem:[%s2862 + $0x50] sm:$0xf]
  %v2884 = vld [vmem:[%s2862 + $0x54] sm:$0xf]
  %v2885 = vld [vmem:[%s2862 + $0x58] sm:$0xf]
  %v2886 = vld [vmem:[%s2862 + $0x5c] sm:$0xf]
  %v2887 = vld [vmem:[%s2862 + $0x60] sm:$0xf]
  %v2888 = vld [vmem:[%s2862 + $0x64] sm:$0xf]
  %v2889 = vld [vmem:[%s2862 + $0x68] sm:$0xf]
  %v2890 = vld [vmem:[%s2862 + $0x6c] sm:$0xf]
  %v2891 = vld [vmem:[%s2862 + $0x70] sm:$0xf]
  %v2892 = vld [vmem:[%s2862 + $0x74] sm:$0xf]
  %v2893 = vld [vmem:[%s2862 + $0x78] sm:$0xf]
  %v2894 = vld [vmem:[%s2862 + $0x7c] sm:$0xf]
  %v2895 = vld [vmem:[%s2862 + $0x80] sm:$0xf]
  %v2896 = vld [vmem:[%s2862 + $0x84] sm:$0xf]
  %v2897 = vld [vmem:[%s2862 + $0x88] sm:$0xf]
  %v2898 = vld [vmem:[%s2862 + $0x8c] sm:$0xf]
  %v2899 = vld [vmem:[%s2862 + $0x90] sm:$0xf]
  %v2900 = vld [vmem:[%s2862 + $0x94] sm:$0xf]
  %v2901 = vld [vmem:[%s2862 + $0x98] sm:$0xf]
  %v2902 = vld [vmem:[%s2862 + $0x9c] sm:$0xf]
  %v2903 = vld [vmem:[%s2862 + $0xa0] sm:$0xf]
  %v2904 = vld [vmem:[%s2862 + $0xa4] sm:$0xf]
  %v2905 = vld [vmem:[%s2862 + $0xa8] sm:$0xf]
  %v2906 = vld [vmem:[%s2862 + $0xac] sm:$0xf]
  %v2907 = vld [vmem:[%s2862 + $0xb0] sm:$0xf]
  %v2908 = vld [vmem:[%s2862 + $0xb4] sm:$0xf]
  %v2909 = vld [vmem:[%s2862 + $0xb8] sm:$0xf]
  %v2910 = vld [vmem:[%s2862 + $0xbc] sm:$0xf]
  %s2911 = scalar_lea.vmem %s7, 7
  %v2912 = vld [vmem:[%s2911] sm:$0x1]
  %v2914 = vlaneseq
  %v2915 = vshrl.u32 %v2914, 7
  %v2916 = vsub.s32 0, %v2915
  %v2917 = vrot.slane %v2912, %v2916
  %v2967 = vunpack.c.l.b16 %v2863
  %v2968 = vunpack.c.l.b16 %v2864
  %v2969 = vunpack.c.l.b16 %v2865
  %v2970 = vunpack.c.l.b16 %v2866
  %v2971 = vunpack.c.l.b16 %v2867
  %v2972 = vunpack.c.l.b16 %v2868
  %v2973 = vunpack.c.l.b16 %v2869
  %v2974 = vunpack.c.l.b16 %v2870
  %v2975 = vunpack.c.l.b16 %v2871
  %v2976 = vunpack.c.l.b16 %v2872
  %v2977 = vunpack.c.l.b16 %v2873
  %v2978 = vunpack.c.l.b16 %v2874
  %v2979 = vunpack.c.l.b16 %v2875
  %v2980 = vunpack.c.l.b16 %v2876
  %v2981 = vunpack.c.l.b16 %v2877
  %v2982 = vunpack.c.l.b16 %v2878
  %v2983 = vunpack.c.l.b16 %v2879
  %v2984 = vunpack.c.l.b16 %v2880
  %v2985 = vunpack.c.l.b16 %v2881
  %v2986 = vunpack.c.l.b16 %v2882
  %v2987 = vunpack.c.l.b16 %v2883
  %v2988 = vunpack.c.l.b16 %v2884
  %v2989 = vunpack.c.l.b16 %v2885
  %v2990 = vunpack.c.l.b16 %v2886
  %v2991 = vunpack.c.l.b16 %v2887
  %v2992 = vunpack.c.l.b16 %v2888
  %v2993 = vunpack.c.l.b16 %v2889
  %v2994 = vunpack.c.l.b16 %v2890
  %v2995 = vunpack.c.l.b16 %v2891
  %v2996 = vunpack.c.l.b16 %v2892
  %v2997 = vunpack.c.l.b16 %v2893
  %v2998 = vunpack.c.l.b16 %v2894
  %v2999 = vunpack.c.l.b16 %v2895
  %v3000 = vunpack.c.l.b16 %v2896
  %v3001 = vunpack.c.l.b16 %v2897
  %v3002 = vunpack.c.l.b16 %v2898
  %v3003 = vunpack.c.l.b16 %v2899
  %v3004 = vunpack.c.l.b16 %v2900
  %v3005 = vunpack.c.l.b16 %v2901
  %v3006 = vunpack.c.l.b16 %v2902
  %v3007 = vunpack.c.l.b16 %v2903
  %v3008 = vunpack.c.l.b16 %v2904
  %v3009 = vunpack.c.l.b16 %v2905
  %v3010 = vunpack.c.l.b16 %v2906
  %v3011 = vunpack.c.l.b16 %v2907
  %v3012 = vunpack.c.l.b16 %v2908
  %v3013 = vunpack.c.l.b16 %v2909
  %v3014 = vunpack.c.l.b16 %v2910
  %v3015 = vpack.c.b16 %v2968, %v2967
  %v3016 = vpack.c.b16 %v2970, %v2969
  %v3017 = vpack.c.b16 %v2972, %v2971
  %v3018 = vpack.c.b16 %v2974, %v2973
  %v3019 = vpack.c.b16 %v2976, %v2975
  %v3020 = vpack.c.b16 %v2978, %v2977
  %v3021 = vpack.c.b16 %v2980, %v2979
  %v3022 = vpack.c.b16 %v2982, %v2981
  %v3023 = vpack.c.b16 %v2984, %v2983
  %v3024 = vpack.c.b16 %v2986, %v2985
  %v3025 = vpack.c.b16 %v2988, %v2987
  %v3026 = vpack.c.b16 %v2990, %v2989
  %v3027 = vpack.c.b16 %v2992, %v2991
  %v3028 = vpack.c.b16 %v2994, %v2993
  %v3029 = vpack.c.b16 %v2996, %v2995
  %v3030 = vpack.c.b16 %v2998, %v2997
  %v3031 = vpack.c.b16 %v3000, %v2999
  %v3032 = vpack.c.b16 %v3002, %v3001
  %v3033 = vpack.c.b16 %v3004, %v3003
  %v3034 = vpack.c.b16 %v3006, %v3005
  %v3035 = vpack.c.b16 %v3008, %v3007
  %v3036 = vpack.c.b16 %v3010, %v3009
  %v3037 = vpack.c.b16 %v3012, %v3011
  %v3038 = vpack.c.b16 %v3014, %v3013
  %3063 = vmatprep.subr.bf16.mxu0 0
  %3064 = vmatpush1.bf16.msra.mxu0 %v3022
  %3065 = vmatprep.subr.bf16.mxu0 0
  %3066 = vmatpush1.bf16.msra.mxu0 %v3021
  %3067 = vmatprep.subr.bf16.mxu0 0
  %3068 = vmatpush1.bf16.msra.mxu0 %v3020
  %3069 = vmatprep.subr.bf16.mxu0 0
  %3070 = vmatpush1.bf16.msra.mxu0 %v3019
  %3071 = vmatprep.subr.bf16.mxu0 0
  %3072 = vmatpush1.bf16.msra.mxu0 %v3018
  %3073 = vmatprep.subr.bf16.mxu0 0
  %3074 = vmatpush1.bf16.msra.mxu0 %v3017
  %3075 = vmatprep.subr.bf16.mxu0 0
  %3076 = vmatpush1.bf16.msra.mxu0 %v3016
  %3077 = vmatprep.subr.bf16.mxu0 0
  %3078 = vmatpush1.bf16.msra.mxu0 %v3015
  %3079 = vmatprep.subr.bf16.mxu0 0
  %3080 = vmatpush2.bf16.msra.mxu0 %v3030
  %3081 = vmatprep.subr.bf16.mxu0 0
  %3082 = vmatpush2.bf16.msra.mxu0 %v3029
  %3083 = vmatprep.subr.bf16.mxu0 0
  %3084 = vmatpush2.bf16.msra.mxu0 %v3028
  %3085 = vmatprep.subr.bf16.mxu0 0
  %3086 = vmatpush2.bf16.msra.mxu0 %v3027
  %3087 = vmatprep.subr.bf16.mxu0 0
  %3088 = vmatpush2.bf16.msra.mxu0 %v3026
  %3089 = vmatprep.subr.bf16.mxu0 0
  %3090 = vmatpush2.bf16.msra.mxu0 %v3025
  %3091 = vmatprep.subr.bf16.mxu0 0
  %3092 = vmatpush2.bf16.msra.mxu0 %v3024
  %3093 = vmatprep.subr.bf16.mxu0 0
  %3094 = vmatpush2.bf16.msra.mxu0 %v3023
  %3095 = vmatprep.mubr.bf16.mxu0 %v2857
  %3096 = vmatmul.mubr.bf16.gmra.mxu0 %v2856
  %v3097 = vpop.f32.mrf.mxu0
  %v3098 = vadd.f32 %v2917, %v3097
  %v3099 = vpop.f32.mrf.mxu0
  %v3100 = vpop.f32.mrf.mxu0
  %v3101 = vadd.f32 %v2917, %v3100
  %v3102 = vpop.f32.mrf.mxu0
  %3103 = vmatprep.mubr.bf16.mxu0 %v2860
  %3104 = vmatmul.mubr.bf16.gmra.mxu0 %v2859
  %v3105 = vpop.f32.mrf.mxu0
  %v3106 = vadd.f32 %v2917, %v3105
  %v3107 = vpop.f32.mrf.mxu0
  %v3108 = vpop.f32.mrf.mxu0
  %v3109 = vadd.f32 %v2917, %v3108
  %v3110 = vpop.f32.mrf.mxu0
  %3111 = vdwg.mxu0
  %3112 = vmatprep.subr.bf16.mxu0 0
  %3113 = vmatpush1.bf16.msra.mxu0 %v3038
  %3114 = vmatprep.subr.bf16.mxu0 0
  %3115 = vmatpush1.bf16.msra.mxu0 %v3037
  %3116 = vmatprep.subr.bf16.mxu0 0
  %3117 = vmatpush1.bf16.msra.mxu0 %v3036
  %3118 = vmatprep.subr.bf16.mxu0 0
  %3119 = vmatpush1.bf16.msra.mxu0 %v3035
  %3120 = vmatprep.subr.bf16.mxu0 0
  %3121 = vmatpush1.bf16.msra.mxu0 %v3034
  %3122 = vmatprep.subr.bf16.mxu0 0
  %3123 = vmatpush1.bf16.msra.mxu0 %v3033
  %3124 = vmatprep.subr.bf16.mxu0 0
  %3125 = vmatpush1.bf16.msra.mxu0 %v3032
  %3126 = vmatprep.subr.bf16.mxu0 0
  %3127 = vmatpush1.bf16.msra.mxu0 %v3031
  %3128 = vmatprep.subr.bf16.mxu0 0
  %3129 = vmatpush2.bf16.msra.mxu0 0
  %3130 = vmatprep.subr.bf16.mxu0 0
  %3131 = vmatpush2.bf16.msra.mxu0 0
  %3132 = vmatprep.subr.bf16.mxu0 0
  %3133 = vmatpush2.bf16.msra.mxu0 0
  %3134 = vmatprep.subr.bf16.mxu0 0
  %3135 = vmatpush2.bf16.msra.mxu0 0
  %3136 = vmatprep.subr.bf16.mxu0 0
  %3137 = vmatpush2.bf16.msra.mxu0 0
  %3138 = vmatprep.subr.bf16.mxu0 0
  %3139 = vmatpush2.bf16.msra.mxu0 0
  %3140 = vmatprep.subr.bf16.mxu0 0
  %3141 = vmatpush2.bf16.msra.mxu0 0
  %3142 = vmatprep.subr.bf16.mxu0 0
  %3143 = vmatpush2.bf16.msra.mxu0 0
  %3144 = vmatprep.mubr.bf16.mxu0 0
  %3145 = vmatmul.mubr.bf16.gmra.mxu0 %v2858
  %v3146 = vpop.f32.mrf.mxu0
  %v3147 = vadd.f32 %v3098, %v3146
  %v3148 = vpop.f32.mrf.mxu0
  %v3149 = vpop.f32.mrf.mxu0
  %v3150 = vadd.f32 %v3101, %v3149
  %v3151 = vpop.f32.mrf.mxu0
  %3152 = vmatprep.mubr.bf16.mxu0 0
  %3153 = vmatmul.mubr.bf16.gmra.mxu0 %v2861
  %v3154 = vpop.f32.mrf.mxu0
  %v3155 = vadd.f32 %v3106, %v3154
  %v3156 = vpop.f32.mrf.mxu0
  %v3157 = vpop.f32.mrf.mxu0
  %v3158 = vadd.f32 %v3109, %v3157
  %v3159 = vpop.f32.mrf.mxu0
  %3160 = vdwg.mxu0
  %v3161 = vadd.f32 %v2449, %v3147
  %v3162 = vadd.f32 %v2452, %v3150
  %v3163 = vadd.f32 %v2457, %v3155
  %v3164 = vadd.f32 %v2460, %v3158
  %s3165 = scalar_lea.vmem [#allocation2], 96
  %3166 = vst [vmem:[%s3165] sm:$0xff] %v3161
  %3167 = vst [vmem:[%s3165 + $0x8] sm:$0xff] %v3162
  %3168 = vst [vmem:[%s3165 + $0x10] sm:$0xff] %v3163
  %3169 = vst [vmem:[%s3165 + $0x18] sm:$0xff] %v3164
  %v3170 = vld [vmem:[%s347] sm:$0xff]
  %v3171 = vld [vmem:[%s347 + $0x8] sm:$0xff]
  %v3172 = vld [vmem:[%s347 + $0x10] sm:$0xff]
  %v3173 = vld [vmem:[%s347 + $0x18] sm:$0xff]
  %v3174 = vmax.f32 %v3170, 0.0
  %v3175 = vmax.f32 %v3171, 0.0
  %v3176 = vmax.f32 %v3172, 0.0
  %v3177 = vmax.f32 %v3173, 0.0
  %v3179 = vrot.slane %v3177, 7
  %v3184 = vrot.slane %v3174, 7
  %v3185 = vrot.slane %v3175, 7
  %v3186 = vsel %vm370, %v3184, %v3185
  %v3187 = vrot.slane %v3176, 7
  %v3188 = vsel %vm370, %v3185, %v3187
  %v3189 = vsel %vm370, %v3187, %v3179
  %v3194 = vsel %vm370, %v3179, %v3184
  %v3195 = vsel %vm360, %v3194, 0.0
  %v3196 = vsel %vm361, %v3186, 0.0
  %v3197 = vsel %vm362, %v3188, 0.0
  %v3198 = vsel %vm363, %v3189, 0.0
  %v3199 = vrot.slane %v3174, 1
  %v3200 = vrot.slane %v3175, 1
  %v3201 = vsel %vm390, %v3199, %v3200
  %v3202 = vrot.slane %v3176, 1
  %v3203 = vsel %vm390, %v3200, %v3202
  %v3204 = vrot.slane %v3177, 1
  %v3205 = vsel %vm390, %v3202, %v3204
  %v3211 = vsel %vm390, %v3204, %v3199
  %v3212 = vsel %vm386, %v3201, 0.0
  %v3213 = vsel %vm387, %v3203, 0.0
  %v3214 = vsel %vm388, %v3205, 0.0
  %v3215 = vsel %vm389, %v3211, 0.0
  %v3216 = vpack.c.bf16 %v3196, %v3195
  %v3217 = vpack.c.bf16 %v3175, %v3174
  %v3218 = vpack.c.bf16 %v3213, %v3212
  %v3219 = vpack.c.bf16 %v3198, %v3197
  %v3220 = vpack.c.bf16 %v3177, %v3176
  %v3221 = vpack.c.bf16 %v3215, %v3214
  %s3222 = scalar_lea.vmem %s6, 1536
  %v3223 = vld [vmem:[%s3222] sm:$0xf]
  %v3224 = vld [vmem:[%s3222 + $0x4] sm:$0xf]
  %v3225 = vld [vmem:[%s3222 + $0x8] sm:$0xf]
  %v3226 = vld [vmem:[%s3222 + $0xc] sm:$0xf]
  %v3227 = vld [vmem:[%s3222 + $0x10] sm:$0xf]
  %v3228 = vld [vmem:[%s3222 + $0x14] sm:$0xf]
  %v3229 = vld [vmem:[%s3222 + $0x18] sm:$0xf]
  %v3230 = vld [vmem:[%s3222 + $0x1c] sm:$0xf]
  %v3231 = vld [vmem:[%s3222 + $0x20] sm:$0xf]
  %v3232 = vld [vmem:[%s3222 + $0x24] sm:$0xf]
  %v3233 = vld [vmem:[%s3222 + $0x28] sm:$0xf]
  %v3234 = vld [vmem:[%s3222 + $0x2c] sm:$0xf]
  %v3235 = vld [vmem:[%s3222 + $0x30] sm:$0xf]
  %v3236 = vld [vmem:[%s3222 + $0x34] sm:$0xf]
  %v3237 = vld [vmem:[%s3222 + $0x38] sm:$0xf]
  %v3238 = vld [vmem:[%s3222 + $0x3c] sm:$0xf]
  %v3239 = vld [vmem:[%s3222 + $0x40] sm:$0xf]
  %v3240 = vld [vmem:[%s3222 + $0x44] sm:$0xf]
  %v3241 = vld [vmem:[%s3222 + $0x48] sm:$0xf]
  %v3242 = vld [vmem:[%s3222 + $0x4c] sm:$0xf]
  %v3243 = vld [vmem:[%s3222 + $0x50] sm:$0xf]
  %v3244 = vld [vmem:[%s3222 + $0x54] sm:$0xf]
  %v3245 = vld [vmem:[%s3222 + $0x58] sm:$0xf]
  %v3246 = vld [vmem:[%s3222 + $0x5c] sm:$0xf]
  %v3247 = vld [vmem:[%s3222 + $0x60] sm:$0xf]
  %v3248 = vld [vmem:[%s3222 + $0x64] sm:$0xf]
  %v3249 = vld [vmem:[%s3222 + $0x68] sm:$0xf]
  %v3250 = vld [vmem:[%s3222 + $0x6c] sm:$0xf]
  %v3251 = vld [vmem:[%s3222 + $0x70] sm:$0xf]
  %v3252 = vld [vmem:[%s3222 + $0x74] sm:$0xf]
  %v3253 = vld [vmem:[%s3222 + $0x78] sm:$0xf]
  %v3254 = vld [vmem:[%s3222 + $0x7c] sm:$0xf]
  %v3255 = vld [vmem:[%s3222 + $0x80] sm:$0xf]
  %v3256 = vld [vmem:[%s3222 + $0x84] sm:$0xf]
  %v3257 = vld [vmem:[%s3222 + $0x88] sm:$0xf]
  %v3258 = vld [vmem:[%s3222 + $0x8c] sm:$0xf]
  %v3259 = vld [vmem:[%s3222 + $0x90] sm:$0xf]
  %v3260 = vld [vmem:[%s3222 + $0x94] sm:$0xf]
  %v3261 = vld [vmem:[%s3222 + $0x98] sm:$0xf]
  %v3262 = vld [vmem:[%s3222 + $0x9c] sm:$0xf]
  %v3263 = vld [vmem:[%s3222 + $0xa0] sm:$0xf]
  %v3264 = vld [vmem:[%s3222 + $0xa4] sm:$0xf]
  %v3265 = vld [vmem:[%s3222 + $0xa8] sm:$0xf]
  %v3266 = vld [vmem:[%s3222 + $0xac] sm:$0xf]
  %v3267 = vld [vmem:[%s3222 + $0xb0] sm:$0xf]
  %v3268 = vld [vmem:[%s3222 + $0xb4] sm:$0xf]
  %v3269 = vld [vmem:[%s3222 + $0xb8] sm:$0xf]
  %v3270 = vld [vmem:[%s3222 + $0xbc] sm:$0xf]
  %s3271 = scalar_lea.vmem %s7, 8
  %v3272 = vld [vmem:[%s3271] sm:$0x1]
  %v3274 = vlaneseq
  %v3275 = vshrl.u32 %v3274, 7
  %v3276 = vsub.s32 0, %v3275
  %v3277 = vrot.slane %v3272, %v3276
  %v3327 = vunpack.c.l.b16 %v3223
  %v3328 = vunpack.c.l.b16 %v3224
  %v3329 = vunpack.c.l.b16 %v3225
  %v3330 = vunpack.c.l.b16 %v3226
  %v3331 = vunpack.c.l.b16 %v3227
  %v3332 = vunpack.c.l.b16 %v3228
  %v3333 = vunpack.c.l.b16 %v3229
  %v3334 = vunpack.c.l.b16 %v3230
  %v3335 = vunpack.c.l.b16 %v3231
  %v3336 = vunpack.c.l.b16 %v3232
  %v3337 = vunpack.c.l.b16 %v3233
  %v3338 = vunpack.c.l.b16 %v3234
  %v3339 = vunpack.c.l.b16 %v3235
  %v3340 = vunpack.c.l.b16 %v3236
  %v3341 = vunpack.c.l.b16 %v3237
  %v3342 = vunpack.c.l.b16 %v3238
  %v3343 = vunpack.c.l.b16 %v3239
  %v3344 = vunpack.c.l.b16 %v3240
  %v3345 = vunpack.c.l.b16 %v3241
  %v3346 = vunpack.c.l.b16 %v3242
  %v3347 = vunpack.c.l.b16 %v3243
  %v3348 = vunpack.c.l.b16 %v3244
  %v3349 = vunpack.c.l.b16 %v3245
  %v3350 = vunpack.c.l.b16 %v3246
  %v3351 = vunpack.c.l.b16 %v3247
  %v3352 = vunpack.c.l.b16 %v3248
  %v3353 = vunpack.c.l.b16 %v3249
  %v3354 = vunpack.c.l.b16 %v3250
  %v3355 = vunpack.c.l.b16 %v3251
  %v3356 = vunpack.c.l.b16 %v3252
  %v3357 = vunpack.c.l.b16 %v3253
  %v3358 = vunpack.c.l.b16 %v3254
  %v3359 = vunpack.c.l.b16 %v3255
  %v3360 = vunpack.c.l.b16 %v3256
  %v3361 = vunpack.c.l.b16 %v3257
  %v3362 = vunpack.c.l.b16 %v3258
  %v3363 = vunpack.c.l.b16 %v3259
  %v3364 = vunpack.c.l.b16 %v3260
  %v3365 = vunpack.c.l.b16 %v3261
  %v3366 = vunpack.c.l.b16 %v3262
  %v3367 = vunpack.c.l.b16 %v3263
  %v3368 = vunpack.c.l.b16 %v3264
  %v3369 = vunpack.c.l.b16 %v3265
  %v3370 = vunpack.c.l.b16 %v3266
  %v3371 = vunpack.c.l.b16 %v3267
  %v3372 = vunpack.c.l.b16 %v3268
  %v3373 = vunpack.c.l.b16 %v3269
  %v3374 = vunpack.c.l.b16 %v3270
  %v3375 = vpack.c.b16 %v3328, %v3327
  %v3376 = vpack.c.b16 %v3330, %v3329
  %v3377 = vpack.c.b16 %v3332, %v3331
  %v3378 = vpack.c.b16 %v3334, %v3333
  %v3379 = vpack.c.b16 %v3336, %v3335
  %v3380 = vpack.c.b16 %v3338, %v3337
  %v3381 = vpack.c.b16 %v3340, %v3339
  %v3382 = vpack.c.b16 %v3342, %v3341
  %v3383 = vpack.c.b16 %v3344, %v3343
  %v3384 = vpack.c.b16 %v3346, %v3345
  %v3385 = vpack.c.b16 %v3348, %v3347
  %v3386 = vpack.c.b16 %v3350, %v3349
  %v3387 = vpack.c.b16 %v3352, %v3351
  %v3388 = vpack.c.b16 %v3354, %v3353
  %v3389 = vpack.c.b16 %v3356, %v3355
  %v3390 = vpack.c.b16 %v3358, %v3357
  %v3391 = vpack.c.b16 %v3360, %v3359
  %v3392 = vpack.c.b16 %v3362, %v3361
  %v3393 = vpack.c.b16 %v3364, %v3363
  %v3394 = vpack.c.b16 %v3366, %v3365
  %v3395 = vpack.c.b16 %v3368, %v3367
  %v3396 = vpack.c.b16 %v3370, %v3369
  %v3397 = vpack.c.b16 %v3372, %v3371
  %v3398 = vpack.c.b16 %v3374, %v3373
  %3423 = vmatprep.subr.bf16.mxu0 0
  %3424 = vmatpush1.bf16.msra.mxu0 %v3382
  %3425 = vmatprep.subr.bf16.mxu0 0
  %3426 = vmatpush1.bf16.msra.mxu0 %v3381
  %3427 = vmatprep.subr.bf16.mxu0 0
  %3428 = vmatpush1.bf16.msra.mxu0 %v3380
  %3429 = vmatprep.subr.bf16.mxu0 0
  %3430 = vmatpush1.bf16.msra.mxu0 %v3379
  %3431 = vmatprep.subr.bf16.mxu0 0
  %3432 = vmatpush1.bf16.msra.mxu0 %v3378
  %3433 = vmatprep.subr.bf16.mxu0 0
  %3434 = vmatpush1.bf16.msra.mxu0 %v3377
  %3435 = vmatprep.subr.bf16.mxu0 0
  %3436 = vmatpush1.bf16.msra.mxu0 %v3376
  %3437 = vmatprep.subr.bf16.mxu0 0
  %3438 = vmatpush1.bf16.msra.mxu0 %v3375
  %3439 = vmatprep.subr.bf16.mxu0 0
  %3440 = vmatpush2.bf16.msra.mxu0 %v3390
  %3441 = vmatprep.subr.bf16.mxu0 0
  %3442 = vmatpush2.bf16.msra.mxu0 %v3389
  %3443 = vmatprep.subr.bf16.mxu0 0
  %3444 = vmatpush2.bf16.msra.mxu0 %v3388
  %3445 = vmatprep.subr.bf16.mxu0 0
  %3446 = vmatpush2.bf16.msra.mxu0 %v3387
  %3447 = vmatprep.subr.bf16.mxu0 0
  %3448 = vmatpush2.bf16.msra.mxu0 %v3386
  %3449 = vmatprep.subr.bf16.mxu0 0
  %3450 = vmatpush2.bf16.msra.mxu0 %v3385
  %3451 = vmatprep.subr.bf16.mxu0 0
  %3452 = vmatpush2.bf16.msra.mxu0 %v3384
  %3453 = vmatprep.subr.bf16.mxu0 0
  %3454 = vmatpush2.bf16.msra.mxu0 %v3383
  %3455 = vmatprep.mubr.bf16.mxu0 %v3217
  %3456 = vmatmul.mubr.bf16.gmra.mxu0 %v3216
  %v3457 = vpop.f32.mrf.mxu0
  %v3458 = vadd.f32 %v3277, %v3457
  %v3459 = vpop.f32.mrf.mxu0
  %v3460 = vpop.f32.mrf.mxu0
  %v3461 = vadd.f32 %v3277, %v3460
  %v3462 = vpop.f32.mrf.mxu0
  %3463 = vmatprep.mubr.bf16.mxu0 %v3220
  %3464 = vmatmul.mubr.bf16.gmra.mxu0 %v3219
  %v3465 = vpop.f32.mrf.mxu0
  %v3466 = vadd.f32 %v3277, %v3465
  %v3467 = vpop.f32.mrf.mxu0
  %v3468 = vpop.f32.mrf.mxu0
  %v3469 = vadd.f32 %v3277, %v3468
  %v3470 = vpop.f32.mrf.mxu0
  %3471 = vdwg.mxu0
  %3472 = vmatprep.subr.bf16.mxu0 0
  %3473 = vmatpush1.bf16.msra.mxu0 %v3398
  %3474 = vmatprep.subr.bf16.mxu0 0
  %3475 = vmatpush1.bf16.msra.mxu0 %v3397
  %3476 = vmatprep.subr.bf16.mxu0 0
  %3477 = vmatpush1.bf16.msra.mxu0 %v3396
  %3478 = vmatprep.subr.bf16.mxu0 0
  %3479 = vmatpush1.bf16.msra.mxu0 %v3395
  %3480 = vmatprep.subr.bf16.mxu0 0
  %3481 = vmatpush1.bf16.msra.mxu0 %v3394
  %3482 = vmatprep.subr.bf16.mxu0 0
  %3483 = vmatpush1.bf16.msra.mxu0 %v3393
  %3484 = vmatprep.subr.bf16.mxu0 0
  %3485 = vmatpush1.bf16.msra.mxu0 %v3392
  %3486 = vmatprep.subr.bf16.mxu0 0
  %3487 = vmatpush1.bf16.msra.mxu0 %v3391
  %3488 = vmatprep.subr.bf16.mxu0 0
  %3489 = vmatpush2.bf16.msra.mxu0 0
  %3490 = vmatprep.subr.bf16.mxu0 0
  %3491 = vmatpush2.bf16.msra.mxu0 0
  %3492 = vmatprep.subr.bf16.mxu0 0
  %3493 = vmatpush2.bf16.msra.mxu0 0
  %3494 = vmatprep.subr.bf16.mxu0 0
  %3495 = vmatpush2.bf16.msra.mxu0 0
  %3496 = vmatprep.subr.bf16.mxu0 0
  %3497 = vmatpush2.bf16.msra.mxu0 0
  %3498 = vmatprep.subr.bf16.mxu0 0
  %3499 = vmatpush2.bf16.msra.mxu0 0
  %3500 = vmatprep.subr.bf16.mxu0 0
  %3501 = vmatpush2.bf16.msra.mxu0 0
  %3502 = vmatprep.subr.bf16.mxu0 0
  %3503 = vmatpush2.bf16.msra.mxu0 0
  %3504 = vmatprep.mubr.bf16.mxu0 0
  %3505 = vmatmul.mubr.bf16.gmra.mxu0 %v3218
  %v3506 = vpop.f32.mrf.mxu0
  %v3507 = vadd.f32 %v3458, %v3506
  %v3508 = vpop.f32.mrf.mxu0
  %v3509 = vpop.f32.mrf.mxu0
  %v3510 = vadd.f32 %v3461, %v3509
  %v3511 = vpop.f32.mrf.mxu0
  %3512 = vmatprep.mubr.bf16.mxu0 0
  %3513 = vmatmul.mubr.bf16.gmra.mxu0 %v3221
  %v3514 = vpop.f32.mrf.mxu0
  %v3515 = vadd.f32 %v3466, %v3514
  %v3516 = vpop.f32.mrf.mxu0
  %v3517 = vpop.f32.mrf.mxu0
  %v3518 = vadd.f32 %v3469, %v3517
  %v3519 = vpop.f32.mrf.mxu0
  %3520 = vdwg.mxu0
  %v3521 = vmax.f32 %v3507, 0.0
  %v3522 = vmax.f32 %v3510, 0.0
  %v3523 = vmax.f32 %v3515, 0.0
  %v3524 = vmax.f32 %v3518, 0.0
  %v3526 = vrot.slane %v3524, 7
  %v3531 = vrot.slane %v3521, 7
  %v3532 = vrot.slane %v3522, 7
  %v3533 = vsel %vm370, %v3531, %v3532
  %v3534 = vrot.slane %v3523, 7
  %v3535 = vsel %vm370, %v3532, %v3534
  %v3536 = vsel %vm370, %v3534, %v3526
  %v3541 = vsel %vm370, %v3526, %v3531
  %v3542 = vsel %vm360, %v3541, 0.0
  %v3543 = vsel %vm361, %v3533, 0.0
  %v3544 = vsel %vm362, %v3535, 0.0
  %v3545 = vsel %vm363, %v3536, 0.0
  %v3546 = vrot.slane %v3521, 1
  %v3547 = vrot.slane %v3522, 1
  %v3548 = vsel %vm390, %v3546, %v3547
  %v3549 = vrot.slane %v3523, 1
  %v3550 = vsel %vm390, %v3547, %v3549
  %v3551 = vrot.slane %v3524, 1
  %v3552 = vsel %vm390, %v3549, %v3551
  %v3558 = vsel %vm390, %v3551, %v3546
  %v3559 = vsel %vm386, %v3548, 0.0
  %v3560 = vsel %vm387, %v3550, 0.0
  %v3561 = vsel %vm388, %v3552, 0.0
  %v3562 = vsel %vm389, %v3558, 0.0
  %v3563 = vpack.c.bf16 %v3543, %v3542
  %v3564 = vpack.c.bf16 %v3522, %v3521
  %v3565 = vpack.c.bf16 %v3560, %v3559
  %v3566 = vpack.c.bf16 %v3545, %v3544
  %v3567 = vpack.c.bf16 %v3524, %v3523
  %v3568 = vpack.c.bf16 %v3562, %v3561
  %s3569 = scalar_lea.vmem %s6, 1728
  %v3570 = vld [vmem:[%s3569] sm:$0xf]
  %v3571 = vld [vmem:[%s3569 + $0x4] sm:$0xf]
  %v3572 = vld [vmem:[%s3569 + $0x8] sm:$0xf]
  %v3573 = vld [vmem:[%s3569 + $0xc] sm:$0xf]
  %v3574 = vld [vmem:[%s3569 + $0x10] sm:$0xf]
  %v3575 = vld [vmem:[%s3569 + $0x14] sm:$0xf]
  %v3576 = vld [vmem:[%s3569 + $0x18] sm:$0xf]
  %v3577 = vld [vmem:[%s3569 + $0x1c] sm:$0xf]
  %v3578 = vld [vmem:[%s3569 + $0x20] sm:$0xf]
  %v3579 = vld [vmem:[%s3569 + $0x24] sm:$0xf]
  %v3580 = vld [vmem:[%s3569 + $0x28] sm:$0xf]
  %v3581 = vld [vmem:[%s3569 + $0x2c] sm:$0xf]
  %v3582 = vld [vmem:[%s3569 + $0x30] sm:$0xf]
  %v3583 = vld [vmem:[%s3569 + $0x34] sm:$0xf]
  %v3584 = vld [vmem:[%s3569 + $0x38] sm:$0xf]
  %v3585 = vld [vmem:[%s3569 + $0x3c] sm:$0xf]
  %v3586 = vld [vmem:[%s3569 + $0x40] sm:$0xf]
  %v3587 = vld [vmem:[%s3569 + $0x44] sm:$0xf]
  %v3588 = vld [vmem:[%s3569 + $0x48] sm:$0xf]
  %v3589 = vld [vmem:[%s3569 + $0x4c] sm:$0xf]
  %v3590 = vld [vmem:[%s3569 + $0x50] sm:$0xf]
  %v3591 = vld [vmem:[%s3569 + $0x54] sm:$0xf]
  %v3592 = vld [vmem:[%s3569 + $0x58] sm:$0xf]
  %v3593 = vld [vmem:[%s3569 + $0x5c] sm:$0xf]
  %v3594 = vld [vmem:[%s3569 + $0x60] sm:$0xf]
  %v3595 = vld [vmem:[%s3569 + $0x64] sm:$0xf]
  %v3596 = vld [vmem:[%s3569 + $0x68] sm:$0xf]
  %v3597 = vld [vmem:[%s3569 + $0x6c] sm:$0xf]
  %v3598 = vld [vmem:[%s3569 + $0x70] sm:$0xf]
  %v3599 = vld [vmem:[%s3569 + $0x74] sm:$0xf]
  %v3600 = vld [vmem:[%s3569 + $0x78] sm:$0xf]
  %v3601 = vld [vmem:[%s3569 + $0x7c] sm:$0xf]
  %v3602 = vld [vmem:[%s3569 + $0x80] sm:$0xf]
  %v3603 = vld [vmem:[%s3569 + $0x84] sm:$0xf]
  %v3604 = vld [vmem:[%s3569 + $0x88] sm:$0xf]
  %v3605 = vld [vmem:[%s3569 + $0x8c] sm:$0xf]
  %v3606 = vld [vmem:[%s3569 + $0x90] sm:$0xf]
  %v3607 = vld [vmem:[%s3569 + $0x94] sm:$0xf]
  %v3608 = vld [vmem:[%s3569 + $0x98] sm:$0xf]
  %v3609 = vld [vmem:[%s3569 + $0x9c] sm:$0xf]
  %v3610 = vld [vmem:[%s3569 + $0xa0] sm:$0xf]
  %v3611 = vld [vmem:[%s3569 + $0xa4] sm:$0xf]
  %v3612 = vld [vmem:[%s3569 + $0xa8] sm:$0xf]
  %v3613 = vld [vmem:[%s3569 + $0xac] sm:$0xf]
  %v3614 = vld [vmem:[%s3569 + $0xb0] sm:$0xf]
  %v3615 = vld [vmem:[%s3569 + $0xb4] sm:$0xf]
  %v3616 = vld [vmem:[%s3569 + $0xb8] sm:$0xf]
  %v3617 = vld [vmem:[%s3569 + $0xbc] sm:$0xf]
  %s3618 = scalar_lea.vmem %s7, 9
  %v3619 = vld [vmem:[%s3618] sm:$0x1]
  %v3621 = vlaneseq
  %v3622 = vshrl.u32 %v3621, 7
  %v3623 = vsub.s32 0, %v3622
  %v3624 = vrot.slane %v3619, %v3623
  %v3674 = vunpack.c.l.b16 %v3570
  %v3675 = vunpack.c.l.b16 %v3571
  %v3676 = vunpack.c.l.b16 %v3572
  %v3677 = vunpack.c.l.b16 %v3573
  %v3678 = vunpack.c.l.b16 %v3574
  %v3679 = vunpack.c.l.b16 %v3575
  %v3680 = vunpack.c.l.b16 %v3576
  %v3681 = vunpack.c.l.b16 %v3577
  %v3682 = vunpack.c.l.b16 %v3578
  %v3683 = vunpack.c.l.b16 %v3579
  %v3684 = vunpack.c.l.b16 %v3580
  %v3685 = vunpack.c.l.b16 %v3581
  %v3686 = vunpack.c.l.b16 %v3582
  %v3687 = vunpack.c.l.b16 %v3583
  %v3688 = vunpack.c.l.b16 %v3584
  %v3689 = vunpack.c.l.b16 %v3585
  %v3690 = vunpack.c.l.b16 %v3586
  %v3691 = vunpack.c.l.b16 %v3587
  %v3692 = vunpack.c.l.b16 %v3588
  %v3693 = vunpack.c.l.b16 %v3589
  %v3694 = vunpack.c.l.b16 %v3590
  %v3695 = vunpack.c.l.b16 %v3591
  %v3696 = vunpack.c.l.b16 %v3592
  %v3697 = vunpack.c.l.b16 %v3593
  %v3698 = vunpack.c.l.b16 %v3594
  %v3699 = vunpack.c.l.b16 %v3595
  %v3700 = vunpack.c.l.b16 %v3596
  %v3701 = vunpack.c.l.b16 %v3597
  %v3702 = vunpack.c.l.b16 %v3598
  %v3703 = vunpack.c.l.b16 %v3599
  %v3704 = vunpack.c.l.b16 %v3600
  %v3705 = vunpack.c.l.b16 %v3601
  %v3706 = vunpack.c.l.b16 %v3602
  %v3707 = vunpack.c.l.b16 %v3603
  %v3708 = vunpack.c.l.b16 %v3604
  %v3709 = vunpack.c.l.b16 %v3605
  %v3710 = vunpack.c.l.b16 %v3606
  %v3711 = vunpack.c.l.b16 %v3607
  %v3712 = vunpack.c.l.b16 %v3608
  %v3713 = vunpack.c.l.b16 %v3609
  %v3714 = vunpack.c.l.b16 %v3610
  %v3715 = vunpack.c.l.b16 %v3611
  %v3716 = vunpack.c.l.b16 %v3612
  %v3717 = vunpack.c.l.b16 %v3613
  %v3718 = vunpack.c.l.b16 %v3614
  %v3719 = vunpack.c.l.b16 %v3615
  %v3720 = vunpack.c.l.b16 %v3616
  %v3721 = vunpack.c.l.b16 %v3617
  %v3722 = vpack.c.b16 %v3675, %v3674
  %v3723 = vpack.c.b16 %v3677, %v3676
  %v3724 = vpack.c.b16 %v3679, %v3678
  %v3725 = vpack.c.b16 %v3681, %v3680
  %v3726 = vpack.c.b16 %v3683, %v3682
  %v3727 = vpack.c.b16 %v3685, %v3684
  %v3728 = vpack.c.b16 %v3687, %v3686
  %v3729 = vpack.c.b16 %v3689, %v3688
  %v3730 = vpack.c.b16 %v3691, %v3690
  %v3731 = vpack.c.b16 %v3693, %v3692
  %v3732 = vpack.c.b16 %v3695, %v3694
  %v3733 = vpack.c.b16 %v3697, %v3696
  %v3734 = vpack.c.b16 %v3699, %v3698
  %v3735 = vpack.c.b16 %v3701, %v3700
  %v3736 = vpack.c.b16 %v3703, %v3702
  %v3737 = vpack.c.b16 %v3705, %v3704
  %v3738 = vpack.c.b16 %v3707, %v3706
  %v3739 = vpack.c.b16 %v3709, %v3708
  %v3740 = vpack.c.b16 %v3711, %v3710
  %v3741 = vpack.c.b16 %v3713, %v3712
  %v3742 = vpack.c.b16 %v3715, %v3714
  %v3743 = vpack.c.b16 %v3717, %v3716
  %v3744 = vpack.c.b16 %v3719, %v3718
  %v3745 = vpack.c.b16 %v3721, %v3720
  %3770 = vmatprep.subr.bf16.mxu0 0
  %3771 = vmatpush1.bf16.msra.mxu0 %v3729
  %3772 = vmatprep.subr.bf16.mxu0 0
  %3773 = vmatpush1.bf16.msra.mxu0 %v3728
  %3774 = vmatprep.subr.bf16.mxu0 0
  %3775 = vmatpush1.bf16.msra.mxu0 %v3727
  %3776 = vmatprep.subr.bf16.mxu0 0
  %3777 = vmatpush1.bf16.msra.mxu0 %v3726
  %3778 = vmatprep.subr.bf16.mxu0 0
  %3779 = vmatpush1.bf16.msra.mxu0 %v3725
  %3780 = vmatprep.subr.bf16.mxu0 0
  %3781 = vmatpush1.bf16.msra.mxu0 %v3724
  %3782 = vmatprep.subr.bf16.mxu0 0
  %3783 = vmatpush1.bf16.msra.mxu0 %v3723
  %3784 = vmatprep.subr.bf16.mxu0 0
  %3785 = vmatpush1.bf16.msra.mxu0 %v3722
  %3786 = vmatprep.subr.bf16.mxu0 0
  %3787 = vmatpush2.bf16.msra.mxu0 %v3737
  %3788 = vmatprep.subr.bf16.mxu0 0
  %3789 = vmatpush2.bf16.msra.mxu0 %v3736
  %3790 = vmatprep.subr.bf16.mxu0 0
  %3791 = vmatpush2.bf16.msra.mxu0 %v3735
  %3792 = vmatprep.subr.bf16.mxu0 0
  %3793 = vmatpush2.bf16.msra.mxu0 %v3734
  %3794 = vmatprep.subr.bf16.mxu0 0
  %3795 = vmatpush2.bf16.msra.mxu0 %v3733
  %3796 = vmatprep.subr.bf16.mxu0 0
  %3797 = vmatpush2.bf16.msra.mxu0 %v3732
  %3798 = vmatprep.subr.bf16.mxu0 0
  %3799 = vmatpush2.bf16.msra.mxu0 %v3731
  %3800 = vmatprep.subr.bf16.mxu0 0
  %3801 = vmatpush2.bf16.msra.mxu0 %v3730
  %3802 = vmatprep.mubr.bf16.mxu0 %v3564
  %3803 = vmatmul.mubr.bf16.gmra.mxu0 %v3563
  %v3804 = vpop.f32.mrf.mxu0
  %v3805 = vadd.f32 %v3624, %v3804
  %v3806 = vpop.f32.mrf.mxu0
  %v3807 = vpop.f32.mrf.mxu0
  %v3808 = vadd.f32 %v3624, %v3807
  %v3809 = vpop.f32.mrf.mxu0
  %3810 = vmatprep.mubr.bf16.mxu0 %v3567
  %3811 = vmatmul.mubr.bf16.gmra.mxu0 %v3566
  %v3812 = vpop.f32.mrf.mxu0
  %v3813 = vadd.f32 %v3624, %v3812
  %v3814 = vpop.f32.mrf.mxu0
  %v3815 = vpop.f32.mrf.mxu0
  %v3816 = vadd.f32 %v3624, %v3815
  %v3817 = vpop.f32.mrf.mxu0
  %3818 = vdwg.mxu0
  %3819 = vmatprep.subr.bf16.mxu0 0
  %3820 = vmatpush1.bf16.msra.mxu0 %v3745
  %3821 = vmatprep.subr.bf16.mxu0 0
  %3822 = vmatpush1.bf16.msra.mxu0 %v3744
  %3823 = vmatprep.subr.bf16.mxu0 0
  %3824 = vmatpush1.bf16.msra.mxu0 %v3743
  %3825 = vmatprep.subr.bf16.mxu0 0
  %3826 = vmatpush1.bf16.msra.mxu0 %v3742
  %3827 = vmatprep.subr.bf16.mxu0 0
  %3828 = vmatpush1.bf16.msra.mxu0 %v3741
  %3829 = vmatprep.subr.bf16.mxu0 0
  %3830 = vmatpush1.bf16.msra.mxu0 %v3740
  %3831 = vmatprep.subr.bf16.mxu0 0
  %3832 = vmatpush1.bf16.msra.mxu0 %v3739
  %3833 = vmatprep.subr.bf16.mxu0 0
  %3834 = vmatpush1.bf16.msra.mxu0 %v3738
  %3835 = vmatprep.subr.bf16.mxu0 0
  %3836 = vmatpush2.bf16.msra.mxu0 0
  %3837 = vmatprep.subr.bf16.mxu0 0
  %3838 = vmatpush2.bf16.msra.mxu0 0
  %3839 = vmatprep.subr.bf16.mxu0 0
  %3840 = vmatpush2.bf16.msra.mxu0 0
  %3841 = vmatprep.subr.bf16.mxu0 0
  %3842 = vmatpush2.bf16.msra.mxu0 0
  %3843 = vmatprep.subr.bf16.mxu0 0
  %3844 = vmatpush2.bf16.msra.mxu0 0
  %3845 = vmatprep.subr.bf16.mxu0 0
  %3846 = vmatpush2.bf16.msra.mxu0 0
  %3847 = vmatprep.subr.bf16.mxu0 0
  %3848 = vmatpush2.bf16.msra.mxu0 0
  %3849 = vmatprep.subr.bf16.mxu0 0
  %3850 = vmatpush2.bf16.msra.mxu0 0
  %3851 = vmatprep.mubr.bf16.mxu0 0
  %3852 = vmatmul.mubr.bf16.gmra.mxu0 %v3565
  %v3853 = vpop.f32.mrf.mxu0
  %v3854 = vadd.f32 %v3805, %v3853
  %v3855 = vpop.f32.mrf.mxu0
  %v3856 = vpop.f32.mrf.mxu0
  %v3857 = vadd.f32 %v3808, %v3856
  %v3858 = vpop.f32.mrf.mxu0
  %3859 = vmatprep.mubr.bf16.mxu0 0
  %3860 = vmatmul.mubr.bf16.gmra.mxu0 %v3568
  %v3861 = vpop.f32.mrf.mxu0
  %v3862 = vadd.f32 %v3813, %v3861
  %v3863 = vpop.f32.mrf.mxu0
  %v3864 = vpop.f32.mrf.mxu0
  %v3865 = vadd.f32 %v3816, %v3864
  %v3866 = vpop.f32.mrf.mxu0
  %3867 = vdwg.mxu0
  %v3868 = vld [vmem:[#allocation2] sm:$0xff]
  %v3869 = vld [vmem:[#allocation2 + $0x8] sm:$0xff]
  %v3870 = vld [vmem:[#allocation2 + $0x10] sm:$0xff]
  %v3871 = vld [vmem:[#allocation2 + $0x18] sm:$0xff]
  %v3872 = vadd.f32 %v3854, %v3868
  %v3873 = vadd.f32 %v3857, %v3869
  %v3874 = vadd.f32 %v3862, %v3870
  %v3875 = vadd.f32 %v3865, %v3871
  %s3876 = scalar_lea.vmem [#allocation2], 128
  %3877 = vst [vmem:[%s3876] sm:$0xff] %v3872
  %3878 = vst [vmem:[%s3876 + $0x8] sm:$0xff] %v3873
  %3879 = vst [vmem:[%s3876 + $0x10] sm:$0xff] %v3874
  %3880 = vst [vmem:[%s3876 + $0x18] sm:$0xff] %v3875
  %v3881 = vld [vmem:[#allocation2] sm:$0xff]
  %v3882 = vld [vmem:[#allocation2 + $0x8] sm:$0xff]
  %v3883 = vld [vmem:[#allocation2 + $0x10] sm:$0xff]
  %v3884 = vld [vmem:[#allocation2 + $0x18] sm:$0xff]
  %v3885 = vld [vmem:[%s1760] sm:$0xff]
  %v3886 = vld [vmem:[%s1760 + $0x8] sm:$0xff]
  %v3887 = vld [vmem:[%s1760 + $0x10] sm:$0xff]
  %v3888 = vld [vmem:[%s1760 + $0x18] sm:$0xff]
  %v3889 = vmax.f32 %v3885, 0.0
  %v3890 = vmax.f32 %v3886, 0.0
  %v3891 = vmax.f32 %v3887, 0.0
  %v3892 = vmax.f32 %v3888, 0.0
  %vm3893 = vcmp.ge.s32.totalorder %v79, 2
  %vm3894 = vcmp.ge.s32.totalorder %v80, 2
  %vm3895 = vcmp.ge.s32.totalorder %v81, 2
  %vm3896 = vcmp.ge.s32.totalorder %v82, 2
  %v3898 = vrot.slane %v3892, 6
  %vm3903 = vcmask 1041408
  %v3904 = vrot.slane %v3889, 6
  %v3905 = vrot.slane %v3890, 6
  %v3906 = vsel %vm3903, %v3904, %v3905
  %v3907 = vrot.slane %v3891, 6
  %v3908 = vsel %vm3903, %v3905, %v3907
  %v3909 = vsel %vm3903, %v3907, %v3898
  %v3914 = vsel %vm3903, %v3898, %v3904
  %v3915 = vsel %vm3893, %v3914, 0.0
  %v3916 = vsel %vm3894, %v3906, 0.0
  %v3917 = vsel %vm3895, %v3908, 0.0
  %v3918 = vsel %vm3896, %v3909, 0.0
  %vm3919 = vcmp.lt.s32.totalorder %v79, 14
  %vm3920 = vcmp.lt.s32.totalorder %v80, 14
  %vm3921 = vcmp.lt.s32.totalorder %v81, 14
  %vm3922 = vcmp.lt.s32.totalorder %v82, 14
  %vm3923 = vcmask 1045504
  %v3924 = vrot.slane %v3889, 2
  %v3925 = vrot.slane %v3890, 2
  %v3926 = vsel %vm3923, %v3924, %v3925
  %v3927 = vrot.slane %v3891, 2
  %v3928 = vsel %vm3923, %v3925, %v3927
  %v3929 = vrot.slane %v3892, 2
  %v3930 = vsel %vm3923, %v3927, %v3929
  %v3936 = vsel %vm3923, %v3929, %v3924
  %v3937 = vsel %vm3919, %v3926, 0.0
  %v3938 = vsel %vm3920, %v3928, 0.0
  %v3939 = vsel %vm3921, %v3930, 0.0
  %v3940 = vsel %vm3922, %v3936, 0.0
  %v3941 = vpack.c.bf16 %v3916, %v3915
  %v3942 = vpack.c.bf16 %v3890, %v3889
  %v3943 = vpack.c.bf16 %v3938, %v3937
  %v3944 = vpack.c.bf16 %v3918, %v3917
  %v3945 = vpack.c.bf16 %v3892, %v3891
  %v3946 = vpack.c.bf16 %v3940, %v3939
  %s3947 = scalar_lea.vmem %s6, 1920
  %v3948 = vld [vmem:[%s3947] sm:$0xf]
  %v3949 = vld [vmem:[%s3947 + $0x4] sm:$0xf]
  %v3950 = vld [vmem:[%s3947 + $0x8] sm:$0xf]
  %v3951 = vld [vmem:[%s3947 + $0xc] sm:$0xf]
  %v3952 = vld [vmem:[%s3947 + $0x10] sm:$0xf]
  %v3953 = vld [vmem:[%s3947 + $0x14] sm:$0xf]
  %v3954 = vld [vmem:[%s3947 + $0x18] sm:$0xf]
  %v3955 = vld [vmem:[%s3947 + $0x1c] sm:$0xf]
  %v3956 = vld [vmem:[%s3947 + $0x20] sm:$0xf]
  %v3957 = vld [vmem:[%s3947 + $0x24] sm:$0xf]
  %v3958 = vld [vmem:[%s3947 + $0x28] sm:$0xf]
  %v3959 = vld [vmem:[%s3947 + $0x2c] sm:$0xf]
  %v3960 = vld [vmem:[%s3947 + $0x30] sm:$0xf]
  %v3961 = vld [vmem:[%s3947 + $0x34] sm:$0xf]
  %v3962 = vld [vmem:[%s3947 + $0x38] sm:$0xf]
  %v3963 = vld [vmem:[%s3947 + $0x3c] sm:$0xf]
  %v3964 = vld [vmem:[%s3947 + $0x40] sm:$0xf]
  %v3965 = vld [vmem:[%s3947 + $0x44] sm:$0xf]
  %v3966 = vld [vmem:[%s3947 + $0x48] sm:$0xf]
  %v3967 = vld [vmem:[%s3947 + $0x4c] sm:$0xf]
  %v3968 = vld [vmem:[%s3947 + $0x50] sm:$0xf]
  %v3969 = vld [vmem:[%s3947 + $0x54] sm:$0xf]
  %v3970 = vld [vmem:[%s3947 + $0x58] sm:$0xf]
  %v3971 = vld [vmem:[%s3947 + $0x5c] sm:$0xf]
  %v3972 = vld [vmem:[%s3947 + $0x60] sm:$0xf]
  %v3973 = vld [vmem:[%s3947 + $0x64] sm:$0xf]
  %v3974 = vld [vmem:[%s3947 + $0x68] sm:$0xf]
  %v3975 = vld [vmem:[%s3947 + $0x6c] sm:$0xf]
  %v3976 = vld [vmem:[%s3947 + $0x70] sm:$0xf]
  %v3977 = vld [vmem:[%s3947 + $0x74] sm:$0xf]
  %v3978 = vld [vmem:[%s3947 + $0x78] sm:$0xf]
  %v3979 = vld [vmem:[%s3947 + $0x7c] sm:$0xf]
  %v3980 = vld [vmem:[%s3947 + $0x80] sm:$0xf]
  %v3981 = vld [vmem:[%s3947 + $0x84] sm:$0xf]
  %v3982 = vld [vmem:[%s3947 + $0x88] sm:$0xf]
  %v3983 = vld [vmem:[%s3947 + $0x8c] sm:$0xf]
  %v3984 = vld [vmem:[%s3947 + $0x90] sm:$0xf]
  %v3985 = vld [vmem:[%s3947 + $0x94] sm:$0xf]
  %v3986 = vld [vmem:[%s3947 + $0x98] sm:$0xf]
  %v3987 = vld [vmem:[%s3947 + $0x9c] sm:$0xf]
  %v3988 = vld [vmem:[%s3947 + $0xa0] sm:$0xf]
  %v3989 = vld [vmem:[%s3947 + $0xa4] sm:$0xf]
  %v3990 = vld [vmem:[%s3947 + $0xa8] sm:$0xf]
  %v3991 = vld [vmem:[%s3947 + $0xac] sm:$0xf]
  %v3992 = vld [vmem:[%s3947 + $0xb0] sm:$0xf]
  %v3993 = vld [vmem:[%s3947 + $0xb4] sm:$0xf]
  %v3994 = vld [vmem:[%s3947 + $0xb8] sm:$0xf]
  %v3995 = vld [vmem:[%s3947 + $0xbc] sm:$0xf]
  %s3996 = scalar_lea.vmem %s7, 10
  %v3997 = vld [vmem:[%s3996] sm:$0x1]
  %v3999 = vlaneseq
  %v4000 = vshrl.u32 %v3999, 7
  %v4001 = vsub.s32 0, %v4000
  %v4002 = vrot.slane %v3997, %v4001
  %v4052 = vunpack.c.l.b16 %v3948
  %v4053 = vunpack.c.l.b16 %v3949
  %v4054 = vunpack.c.l.b16 %v3950
  %v4055 = vunpack.c.l.b16 %v3951
  %v4056 = vunpack.c.l.b16 %v3952
  %v4057 = vunpack.c.l.b16 %v3953
  %v4058 = vunpack.c.l.b16 %v3954
  %v4059 = vunpack.c.l.b16 %v3955
  %v4060 = vunpack.c.l.b16 %v3956
  %v4061 = vunpack.c.l.b16 %v3957
  %v4062 = vunpack.c.l.b16 %v3958
  %v4063 = vunpack.c.l.b16 %v3959
  %v4064 = vunpack.c.l.b16 %v3960
  %v4065 = vunpack.c.l.b16 %v3961
  %v4066 = vunpack.c.l.b16 %v3962
  %v4067 = vunpack.c.l.b16 %v3963
  %v4068 = vunpack.c.l.b16 %v3964
  %v4069 = vunpack.c.l.b16 %v3965
  %v4070 = vunpack.c.l.b16 %v3966
  %v4071 = vunpack.c.l.b16 %v3967
  %v4072 = vunpack.c.l.b16 %v3968
  %v4073 = vunpack.c.l.b16 %v3969
  %v4074 = vunpack.c.l.b16 %v3970
  %v4075 = vunpack.c.l.b16 %v3971
  %v4076 = vunpack.c.l.b16 %v3972
  %v4077 = vunpack.c.l.b16 %v3973
  %v4078 = vunpack.c.l.b16 %v3974
  %v4079 = vunpack.c.l.b16 %v3975
  %v4080 = vunpack.c.l.b16 %v3976
  %v4081 = vunpack.c.l.b16 %v3977
  %v4082 = vunpack.c.l.b16 %v3978
  %v4083 = vunpack.c.l.b16 %v3979
  %v4084 = vunpack.c.l.b16 %v3980
  %v4085 = vunpack.c.l.b16 %v3981
  %v4086 = vunpack.c.l.b16 %v3982
  %v4087 = vunpack.c.l.b16 %v3983
  %v4088 = vunpack.c.l.b16 %v3984
  %v4089 = vunpack.c.l.b16 %v3985
  %v4090 = vunpack.c.l.b16 %v3986
  %v4091 = vunpack.c.l.b16 %v3987
  %v4092 = vunpack.c.l.b16 %v3988
  %v4093 = vunpack.c.l.b16 %v3989
  %v4094 = vunpack.c.l.b16 %v3990
  %v4095 = vunpack.c.l.b16 %v3991
  %v4096 = vunpack.c.l.b16 %v3992
  %v4097 = vunpack.c.l.b16 %v3993
  %v4098 = vunpack.c.l.b16 %v3994
  %v4099 = vunpack.c.l.b16 %v3995
  %v4100 = vpack.c.b16 %v4053, %v4052
  %v4101 = vpack.c.b16 %v4055, %v4054
  %v4102 = vpack.c.b16 %v4057, %v4056
  %v4103 = vpack.c.b16 %v4059, %v4058
  %v4104 = vpack.c.b16 %v4061, %v4060
  %v4105 = vpack.c.b16 %v4063, %v4062
  %v4106 = vpack.c.b16 %v4065, %v4064
  %v4107 = vpack.c.b16 %v4067, %v4066
  %v4108 = vpack.c.b16 %v4069, %v4068
  %v4109 = vpack.c.b16 %v4071, %v4070
  %v4110 = vpack.c.b16 %v4073, %v4072
  %v4111 = vpack.c.b16 %v4075, %v4074
  %v4112 = vpack.c.b16 %v4077, %v4076
  %v4113 = vpack.c.b16 %v4079, %v4078
  %v4114 = vpack.c.b16 %v4081, %v4080
  %v4115 = vpack.c.b16 %v4083, %v4082
  %v4116 = vpack.c.b16 %v4085, %v4084
  %v4117 = vpack.c.b16 %v4087, %v4086
  %v4118 = vpack.c.b16 %v4089, %v4088
  %v4119 = vpack.c.b16 %v4091, %v4090
  %v4120 = vpack.c.b16 %v4093, %v4092
  %v4121 = vpack.c.b16 %v4095, %v4094
  %v4122 = vpack.c.b16 %v4097, %v4096
  %v4123 = vpack.c.b16 %v4099, %v4098
  %4148 = vmatprep.subr.bf16.mxu0 0
  %4149 = vmatpush1.bf16.msra.mxu0 %v4107
  %4150 = vmatprep.subr.bf16.mxu0 0
  %4151 = vmatpush1.bf16.msra.mxu0 %v4106
  %4152 = vmatprep.subr.bf16.mxu0 0
  %4153 = vmatpush1.bf16.msra.mxu0 %v4105
  %4154 = vmatprep.subr.bf16.mxu0 0
  %4155 = vmatpush1.bf16.msra.mxu0 %v4104
  %4156 = vmatprep.subr.bf16.mxu0 0
  %4157 = vmatpush1.bf16.msra.mxu0 %v4103
  %4158 = vmatprep.subr.bf16.mxu0 0
  %4159 = vmatpush1.bf16.msra.mxu0 %v4102
  %4160 = vmatprep.subr.bf16.mxu0 0
  %4161 = vmatpush1.bf16.msra.mxu0 %v4101
  %4162 = vmatprep.subr.bf16.mxu0 0
  %4163 = vmatpush1.bf16.msra.mxu0 %v4100
  %4164 = vmatprep.subr.bf16.mxu0 0
  %4165 = vmatpush2.bf16.msra.mxu0 %v4115
  %4166 = vmatprep.subr.bf16.mxu0 0
  %4167 = vmatpush2.bf16.msra.mxu0 %v4114
  %4168 = vmatprep.subr.bf16.mxu0 0
  %4169 = vmatpush2.bf16.msra.mxu0 %v4113
  %4170 = vmatprep.subr.bf16.mxu0 0
  %4171 = vmatpush2.bf16.msra.mxu0 %v4112
  %4172 = vmatprep.subr.bf16.mxu0 0
  %4173 = vmatpush2.bf16.msra.mxu0 %v4111
  %4174 = vmatprep.subr.bf16.mxu0 0
  %4175 = vmatpush2.bf16.msra.mxu0 %v4110
  %4176 = vmatprep.subr.bf16.mxu0 0
  %4177 = vmatpush2.bf16.msra.mxu0 %v4109
  %4178 = vmatprep.subr.bf16.mxu0 0
  %4179 = vmatpush2.bf16.msra.mxu0 %v4108
  %4180 = vmatprep.mubr.bf16.mxu0 %v3942
  %4181 = vmatmul.mubr.bf16.gmra.mxu0 %v3941
  %v4182 = vpop.f32.mrf.mxu0
  %v4183 = vadd.f32 %v4002, %v4182
  %v4184 = vpop.f32.mrf.mxu0
  %v4185 = vpop.f32.mrf.mxu0
  %v4186 = vadd.f32 %v4002, %v4185
  %v4187 = vpop.f32.mrf.mxu0
  %4188 = vmatprep.mubr.bf16.mxu0 %v3945
  %4189 = vmatmul.mubr.bf16.gmra.mxu0 %v3944
  %v4190 = vpop.f32.mrf.mxu0
  %v4191 = vadd.f32 %v4002, %v4190
  %v4192 = vpop.f32.mrf.mxu0
  %v4193 = vpop.f32.mrf.mxu0
  %v4194 = vadd.f32 %v4002, %v4193
  %v4195 = vpop.f32.mrf.mxu0
  %4196 = vdwg.mxu0
  %4197 = vmatprep.subr.bf16.mxu0 0
  %4198 = vmatpush1.bf16.msra.mxu0 %v4123
  %4199 = vmatprep.subr.bf16.mxu0 0
  %4200 = vmatpush1.bf16.msra.mxu0 %v4122
  %4201 = vmatprep.subr.bf16.mxu0 0
  %4202 = vmatpush1.bf16.msra.mxu0 %v4121
  %4203 = vmatprep.subr.bf16.mxu0 0
  %4204 = vmatpush1.bf16.msra.mxu0 %v4120
  %4205 = vmatprep.subr.bf16.mxu0 0
  %4206 = vmatpush1.bf16.msra.mxu0 %v4119
  %4207 = vmatprep.subr.bf16.mxu0 0
  %4208 = vmatpush1.bf16.msra.mxu0 %v4118
  %4209 = vmatprep.subr.bf16.mxu0 0
  %4210 = vmatpush1.bf16.msra.mxu0 %v4117
  %4211 = vmatprep.subr.bf16.mxu0 0
  %4212 = vmatpush1.bf16.msra.mxu0 %v4116
  %4213 = vmatprep.subr.bf16.mxu0 0
  %4214 = vmatpush2.bf16.msra.mxu0 0
  %4215 = vmatprep.subr.bf16.mxu0 0
  %4216 = vmatpush2.bf16.msra.mxu0 0
  %4217 = vmatprep.subr.bf16.mxu0 0
  %4218 = vmatpush2.bf16.msra.mxu0 0
  %4219 = vmatprep.subr.bf16.mxu0 0
  %4220 = vmatpush2.bf16.msra.mxu0 0
  %4221 = vmatprep.subr.bf16.mxu0 0
  %4222 = vmatpush2.bf16.msra.mxu0 0
  %4223 = vmatprep.subr.bf16.mxu0 0
  %4224 = vmatpush2.bf16.msra.mxu0 0
  %4225 = vmatprep.subr.bf16.mxu0 0
  %4226 = vmatpush2.bf16.msra.mxu0 0
  %4227 = vmatprep.subr.bf16.mxu0 0
  %4228 = vmatpush2.bf16.msra.mxu0 0
  %4229 = vmatprep.mubr.bf16.mxu0 0
  %4230 = vmatmul.mubr.bf16.gmra.mxu0 %v3943
  %v4231 = vpop.f32.mrf.mxu0
  %v4232 = vadd.f32 %v4183, %v4231
  %v4233 = vpop.f32.mrf.mxu0
  %v4234 = vpop.f32.mrf.mxu0
  %v4235 = vadd.f32 %v4186, %v4234
  %v4236 = vpop.f32.mrf.mxu0
  %4237 = vmatprep.mubr.bf16.mxu0 0
  %4238 = vmatmul.mubr.bf16.gmra.mxu0 %v3946
  %v4239 = vpop.f32.mrf.mxu0
  %v4240 = vadd.f32 %v4191, %v4239
  %v4241 = vpop.f32.mrf.mxu0
  %v4242 = vpop.f32.mrf.mxu0
  %v4243 = vadd.f32 %v4194, %v4242
  %v4244 = vpop.f32.mrf.mxu0
  %4245 = vdwg.mxu0
  %v4246 = vadd.f32 %v3881, %v4232
  %v4247 = vadd.f32 %v3882, %v4235
  %v4248 = vadd.f32 %v3883, %v4240
  %v4249 = vadd.f32 %v3884, %v4243
  %s4250 = scalar_lea.vmem [#allocation2], 160
  %4251 = vst [vmem:[%s4250] sm:$0xff] %v4246
  %4252 = vst [vmem:[%s4250 + $0x8] sm:$0xff] %v4247
  %4253 = vst [vmem:[%s4250 + $0x10] sm:$0xff] %v4248
  %4254 = vst [vmem:[%s4250 + $0x18] sm:$0xff] %v4249
  %v4255 = vld [vmem:[%s1760] sm:$0xff]
  %v4256 = vld [vmem:[%s1760 + $0x8] sm:$0xff]
  %v4257 = vld [vmem:[%s1760 + $0x10] sm:$0xff]
  %v4258 = vld [vmem:[%s1760 + $0x18] sm:$0xff]
  %v4259 = vld [vmem:[%s3165] sm:$0xff]
  %v4260 = vld [vmem:[%s3165 + $0x8] sm:$0xff]
  %v4261 = vld [vmem:[%s3165 + $0x10] sm:$0xff]
  %v4262 = vld [vmem:[%s3165 + $0x18] sm:$0xff]
  %v4263 = vld [vmem:[%s3876] sm:$0xff]
  %v4264 = vld [vmem:[%s3876 + $0x8] sm:$0xff]
  %v4265 = vld [vmem:[%s3876 + $0x10] sm:$0xff]
  %v4266 = vld [vmem:[%s3876 + $0x18] sm:$0xff]
  %v4267 = vld [vmem:[%s4250] sm:$0xff]
  %v4268 = vld [vmem:[%s4250 + $0x8] sm:$0xff]
  %v4269 = vld [vmem:[%s4250 + $0x10] sm:$0xff]
  %v4270 = vld [vmem:[%s4250 + $0x18] sm:$0xff]
  %4271 = vst [vmem:[%s8] sm:$0xff] %v4255
  %4272 = vst [vmem:[%s8 + $0x8] sm:$0xff] %v4259
  %4273 = vst [vmem:[%s8 + $0x10] sm:$0xff] %v4263
  %4274 = vst [vmem:[%s8 + $0x18] sm:$0xff] %v4267
  %4275 = vst [vmem:[%s8 + $0x20] sm:$0xff] %v4256
  %4276 = vst [vmem:[%s8 + $0x28] sm:$0xff] %v4260
  %4277 = vst [vmem:[%s8 + $0x30] sm:$0xff] %v4264
  %4278 = vst [vmem:[%s8 + $0x38] sm:$0xff] %v4268
  %4279 = vst [vmem:[%s8 + $0x40] sm:$0xff] %v4257
  %4280 = vst [vmem:[%s8 + $0x48] sm:$0xff] %v4261
  %4281 = vst [vmem:[%s8 + $0x50] sm:$0xff] %v4265
  %4282 = vst [vmem:[%s8 + $0x58] sm:$0xff] %v4269
  %4283 = vst [vmem:[%s8 + $0x60] sm:$0xff] %v4258
  %4284 = vst [vmem:[%s8 + $0x68] sm:$0xff] %v4262
  %4285 = vst [vmem:[%s8 + $0x70] sm:$0xff] %v4266
  %4286 = vst [vmem:[%s8 + $0x78] sm:$0xff] %v4270
  // Predicated region
  $region34: #{cell_forward.1} parent=0 // pred_check
    _
  $region35: #{cell_forward.1} parent=0 // pred_check_branch
    %4288 = sbr.rel (0) target = $region37
  $region36: #{cell_forward.1} parent=0 // pred_region
    _
  $region37: #{cell_forward.1} parent=0 // pred_fallthru
    _
  // Predicated region
  $region38: #{cell_forward.1} parent=0 // pred_check
    _
  $region39: #{cell_forward.1} parent=0 // pred_check_branch
    %4290 = sbr.rel (0) target = $region41
  $region40: #{cell_forward.1} parent=0 // pred_region
    _
  $region41: #{cell_forward.1} parent=0 // pred_fallthru
    _

</llo_original>
